<compile_context>
chip_gen: v7x
topology: tpu7x:2x2x1
jax: 0.10.0
libtpu: 0.0.40
codegen_flags: <defaults>
</compile_context>

<pallas_src>
import functools

import numpy as np
import jax
import jax.numpy as jnp
from jax.experimental import pallas as pl
from jax.experimental.pallas import tpu as pltpu


def _round_up(x, m):
    return (x + m - 1) // m * m


# ----------------------------- fused kernel ---------------------------------
def _pconv_att_kernel(x_ref, wakv_ref, bakv_ref, wm_ref, bm_ref,
                      wcw_ref, scw_ref, hcw_ref,
                      wch_ref, sch_ref, hch_ref,
                      wcat_ref, scat_ref, hcat_ref,
                      o_ref, xpad_ref, yb_ref,
                      *, k, s, H, W, Wp, Ho, Wo, Ci, O4p, Lcat, Lb):
    HW = H * W

    # --------------- ContextAggregation (fused, per sample) -----------------
    xf = x_ref[0].astype(jnp.float32)                           # (C, H*W)
    # stacked 1x1 projections; row blocks [0]=a, [8]=k, [16:16+Ci]=v (8-aligned)
    akv = jnp.dot(wakv_ref[...], xf,
                  preferred_element_type=jnp.float32) + bakv_ref[...]
    a = jax.nn.sigmoid(akv[0:1])                                # (1, HW)
    kl = akv[8:9]                                               # (1, HW)
    v = akv[16:16 + Ci]                                         # (Ci, HW)
    kl = kl - jnp.max(kl, axis=-1, keepdims=True)
    ke = jnp.exp(kl)
    ksm = ke * pl.reciprocal(jnp.sum(ke, axis=-1, keepdims=True), approx=True)
    y = jnp.sum(v * ksm, axis=-1, keepdims=True)                # (Ci, 1)
    m = jnp.dot(wm_ref[...], y, preferred_element_type=jnp.float32) + bm_ref[...]
    xa = xf + m * a                                             # (C, HW)

    # ------ global zero-pad: scatter xa rows into the wide VMEM scratch -----
    xpad_ref[...] = jnp.zeros_like(xpad_ref)
    for i in range(H):
        xpad_ref[:, pl.ds((i + k) * Wp + k, W)] = xa[:, i * W:(i + 1) * W]

    # ------------------ pinwheel branches (4 -> 2 GEMMs) --------------------
    def tap_gemm(w_ref, tap_offs, base, length):
        acc = None
        for t, off in enumerate(tap_offs):                      # static unroll
            xs = (xpad_ref[:, pl.ds(base + off, length)] if s == 1 else
                  xpad_ref[:, pl.ds(base + off, length, s)])
            d = jnp.dot(w_ref[t], xs, preferred_element_type=jnp.float32)
            acc = d if acc is None else acc + d
        return acc

    def bn_silu(t, sc_ref, sh_ref):                             # folded BN + SiLU
        t = t * sc_ref[...] + sh_ref[...]
        return t * jax.nn.sigmoid(t)

    taps_w = tuple(kw for kw in range(k))                 # (1, k) kernel taps
    taps_h = tuple(kh * Wp for kh in range(k))            # (k, 1) kernel taps
    base_w0, base_w1 = (k - 1) * Wp, k * Wp + k           # cw branch origins
    base_h0, base_h1 = k, k * Wp + (k - 1)                # ch branch origins

    if s == 1:
        # branch pairs share a weight; origins differ by a constant lane shift,
        # so one GEMM over an extended lane window produces both branches.
        dW, dH = base_w1 - base_w0, base_h1 - base_h0      # Wp+k, k*Wp-1
        yw = bn_silu(tap_gemm(wcw_ref, taps_w, base_w0, Lb + dW), scw_ref, hcw_ref)
        yb_ref[0:O4p, :] = yw[:, 0:Lb]
        yb_ref[O4p:2 * O4p, :] = yw[:, dW:dW + Lb]
        yh = bn_silu(tap_gemm(wch_ref, taps_h, base_h0, Lb + dH), sch_ref, hch_ref)
        yb_ref[2 * O4p:3 * O4p, :] = yh[:, 0:Lb]
        yb_ref[3 * O4p:4 * O4p, :] = yh[:, dH:dH + Lb]
    else:
        # TODO(synk): pre-deinterleave column phases so stride-s taps read
        # contiguous lanes instead of lane-strided slices.
        plan = ((wcw_ref, scw_ref, hcw_ref, taps_w, base_w0),
                (wcw_ref, scw_ref, hcw_ref, taps_w, base_w1),
                (wch_ref, sch_ref, hch_ref, taps_h, base_h0),
                (wch_ref, sch_ref, hch_ref, taps_h, base_h1))
        for b, (wr, sr, hr, taps, base) in enumerate(plan):
            yb_ref[b * O4p:(b + 1) * O4p, :] = bn_silu(
                tap_gemm(wr, taps, base, Lb), sr, hr)

    # -------- 2x2 cat conv: 4 tap dots over lane-shifted yb slices ----------
    acc = None
    for t, off in enumerate((0, 1, Wp, Wp + 1)):                # static unroll
        d = jnp.dot(wcat_ref[t], yb_ref[:, pl.ds(off, Lcat)],
                    preferred_element_type=jnp.float32)
        acc = d if acc is None else acc + d
    z = acc * scat_ref[...] + hcat_ref[...]
    z = (z * jax.nn.sigmoid(z)).astype(o_ref.dtype)             # (c2, Lcat)

    # -------------- compact (row pitch Wo) output store ----------------------
    for i in range(Ho):
        o_ref[0, :, pl.ds(i * Wo, Wo)] = z[:, i * Wp:i * Wp + Wo]


# ------------------------------ forward wrapper ------------------------------
def pconv_att_forward(x, params, k, s):
    N, C, H, W = x.shape
    HW = H * W
    Wp = W + 2 * k
    Hb, Wb = H // s + 1, W // s + 1            # per-branch conv output size
    Ho, Wo = Hb - 1, Wb - 1                    # final output size (2x2 cat conv)
    Lcat = (Ho - 1) * Wp + Wo                  # wide positions the cat conv emits
    Lb = Lcat + Wp + 1                         # wide positions the cat conv reads

    att, cw, ch, cat = params['att'], params['cw'], params['ch'], params['cat']
    Ci = att['wv'].shape[0]
    O4 = cw['w_taps'].shape[1]
    c2 = cat['w_taps'].shape[1]
    O4p = _round_up(O4, 8)                     # sublane-aligned branch channels

    # stacked a/k/v projection with 8-row-aligned blocks (padding rows are zero)
    Ra = 16 + _round_up(Ci, 8)
    wakv = (jnp.zeros((Ra, C), jnp.float32)
            .at[0:1].set(att['wa']).at[8:9].set(att['wk'])
            .at[16:16 + Ci].set(att['wv']))
    bakv = (jnp.zeros((Ra, 1), jnp.float32)
            .at[0:1].set(att['ba']).at[8:9].set(att['bk'])
            .at[16:16 + Ci].set(att['bv']))

    def pad_branch(cp):                        # (T,O,Cin) -> (T,O4p,Cin) + padded BN
        T, O, Cin = cp['w_taps'].shape
        w = jnp.zeros((T, O4p, Cin), jnp.float32).at[:, :O, :].set(cp['w_taps'])
        sc = jnp.zeros((O4p, 1), jnp.float32).at[:O].set(cp['scale'])
        sh = jnp.zeros((O4p, 1), jnp.float32).at[:O].set(cp['shift'])
        return w, sc, sh

    wcw, scw, hcw = pad_branch(cw)
    wch, sch, hch = pad_branch(ch)
    # cat weight: re-space input-channel blocks to the padded (4*O4p) layout
    wcat = jnp.zeros((4, c2, 4 * O4p), jnp.float32)
    for b in range(4):
        wcat = wcat.at[:, :, b * O4p:b * O4p + O4].set(
            cat['w_taps'][:, :, b * O4:(b + 1) * O4])

    # flat ("wide") scratch length: everything any tap may read, zero-filled
    base_w0, base_w1 = (k - 1) * Wp, k * Wp + k
    base_h0, base_h1 = k, k * Wp + (k - 1)
    if s == 1:
        dW, dH = base_w1 - base_w0, base_h1 - base_h0
        max_read = max(base_w0 + (k - 1) + (Lb + dW) - 1,
                       base_h0 + (k - 1) * Wp + (Lb + dH) - 1)
    else:
        max_read = max(base_w1 + (k - 1) + s * (Lb - 1),
                       base_h1 + (k - 1) * Wp + s * (Lb - 1))
    write_end = (H + k - 1) * Wp + k + W
    LEN = _round_up(max(max_read + 1, write_end), 128)

    xf = x.reshape(N, C, HW)                   # minor-dim merge: no copy
    args = (xf, wakv, bakv, att['wm'], att['bm'],
            wcw, scw, hcw, wch, sch, hch, wcat, cat['scale'], cat['shift'])

    def cspec(a):
        return pl.BlockSpec(a.shape, lambda n: (0,) * a.ndim)

    # VMEM footprint -> per-generation vmem limit (headroom below physical VMEM)
    need = 4 * (2 * C * HW + 2 * c2 * Ho * Wo              # double-buffered blocks
                + C * LEN + 4 * O4p * Lb                   # scratch buffers
                + 2 * (C * HW + O4p * (Lb + k * Wp) + c2 * Lcat))  # live values
    need += 2 * sum(int(a.size) * 4 for a in args[1:]) + (4 << 20)
    cap = 128 << 20
    try:
        cap = int(pltpu.get_tpu_info().vmem_capacity_bytes)
    except Exception:
        pass
    vmem_limit = int(min(max(need, 32 << 20), int(0.75 * cap)))

    out = pl.pallas_call(
        functools.partial(_pconv_att_kernel, k=k, s=s, H=H, W=W, Wp=Wp,
                          Ho=Ho, Wo=Wo, Ci=Ci, O4p=O4p, Lcat=Lcat, Lb=Lb),
        out_shape=jax.ShapeDtypeStruct((N, c2, Ho * Wo), x.dtype),
        grid=(N,),
        in_specs=[pl.BlockSpec((1, C, HW), lambda n: (n, 0, 0))]
                 + [cspec(a) for a in args[1:]],
        out_specs=pl.BlockSpec((1, c2, Ho * Wo), lambda n: (n, 0, 0)),
        scratch_shapes=[pltpu.VMEM((C, LEN), jnp.float32),       # padded wide image
                        pltpu.VMEM((4 * O4p, Lb), jnp.float32)], # branch outputs
        compiler_params=pltpu.CompilerParams(
            dimension_semantics=("parallel",),
            vmem_limit_bytes=vmem_limit),
    )(*args)
    return out.reshape(N, c2, Ho, Wo)


# --------------------------- deterministic parameters ------------------------
def init_params(c1, c2, k, key):
    ks = iter(jax.random.split(key, 24))

    def nrm(shape, sc=0.2):
        return sc * jax.random.normal(next(ks), shape, jnp.float32)

    ci = max(c1 // 1, 1)                                          # reduction=1
    att = dict(wa=nrm((1, c1)), ba=nrm((1, 1)),
               wk=nrm((1, c1)), bk=nrm((1, 1)),
               wv=nrm((ci, c1)), bv=nrm((ci, 1)),
               wm=nrm((c1, ci)), bm=nrm((c1, 1)))

    def conv_params(o, cin, KH, KW):
        w = nrm((o, cin, KH, KW))                                 # OIHW weight
        gamma = 1.0 + nrm((o,), 0.1)
        beta = nrm((o,), 0.1)
        mean = nrm((o,), 0.1)
        var = jnp.abs(nrm((o,), 1.0)) + 0.5
        eps = 1e-3
        scale = gamma / jnp.sqrt(var + eps)
        shift = beta - mean * scale
        w_taps = jnp.transpose(w, (2, 3, 0, 1)).reshape(KH * KW, o, cin)
        return dict(w_taps=w_taps, scale=scale.reshape(o, 1),
                    shift=shift.reshape(o, 1), KH=KH, KW=KW)

    return dict(att=att,
                cw=conv_params(c2 // 4, c1, 1, k),
                ch=conv_params(c2 // 4, c1, k, 1),
                cat=conv_params(c2, c2, 2, 2))


# ----------------------------- pure-JAX reference ----------------------------
def _zpad(t, left, right, top, bottom):                          # nn.ZeroPad2d
    return jnp.pad(t, ((0, 0), (0, 0), (top, bottom), (left, right)))


def ref_forward(x, params, k, s):
    att = params['att']
    N, C, H, W = x.shape
    hp = jax.lax.Precision.HIGHEST
    xf = x.reshape(N, C, H * W)
    a = jax.nn.sigmoid(jnp.einsum('oc,nch->noh', att['wa'], xf, precision=hp) + att['ba'])
    kl = jnp.einsum('oc,nch->noh', att['wk'], xf, precision=hp) + att['bk']
    ksm = jax.nn.softmax(kl, axis=-1)
    v = jnp.einsum('oc,nch->noh', att['wv'], xf, precision=hp) + att['bv']
    y = jnp.sum(v * ksm, axis=-1, keepdims=True)
    m = jnp.einsum('oc,nch->noh', att['wm'], y, precision=hp) + att['bm']
    xa = (xf + m * a).reshape(N, C, H, W)

    def ref_conv(xp, cp, st):
        KH, KW = cp['KH'], cp['KW']
        T, O, Cin = cp['w_taps'].shape
        w = jnp.transpose(cp['w_taps'].reshape(KH, KW, O, Cin), (2, 3, 0, 1))
        yy = jax.lax.conv_general_dilated(
            xp, w, (st, st), 'VALID',
            dimension_numbers=('NCHW', 'OIHW', 'NCHW'), precision=hp)
        yy = yy * cp['scale'].reshape(1, O, 1, 1) + cp['shift'].reshape(1, O, 1, 1)
        return yy * jax.nn.sigmoid(yy)

    p = [(k, 0, 1, 0), (0, k, 0, 1), (0, 1, k, 0), (1, 0, 0, k)]
    yw0 = ref_conv(_zpad(xa, *p[0]), params['cw'], s)
    yw1 = ref_conv(_zpad(xa, *p[1]), params['cw'], s)
    yh0 = ref_conv(_zpad(xa, *p[2]), params['ch'], s)
    yh1 = ref_conv(_zpad(xa, *p[3]), params['ch'], s)
    return ref_conv(jnp.concatenate([yw0, yw1, yh0, yh1], axis=1), params['cat'], 1)


if __name__ == "__main__":
    c1, c2, k, s = 4, 8, 3, 1
    N, H, W = 2, 16, 16
    key = jax.random.PRNGKey(0)
    kx, kp = jax.random.split(key)
    x = jax.random.normal(kx, (N, c1, H, W), jnp.float32)
    params = init_params(c1, c2, k, kp)

    fwd = jax.jit(functools.partial(pconv_att_forward, k=k, s=s))
    y = fwd(x, params)
    jax.block_until_ready(y)

    assert y.shape == (N, c2, H, W), y.shape
    y_ref = ref_forward(x, params, k, s)
    np.testing.assert_allclose(np.asarray(y), np.asarray(y_ref), rtol=5e-3, atol=5e-3)
    print("KERNEL_OK")
</pallas_src>

<mosaic_0001>
module attributes {stable_mosaic.version = 11 : i64} {
  func.func @_pconv_att_kernel(%arg0: i32, %arg1: memref<1x4x256xf32, #tpu.memory_space<vmem>>, %arg2: memref<24x4xf32, #tpu.memory_space<vmem>>, %arg3: memref<24x1xf32, #tpu.memory_space<vmem>>, %arg4: memref<4x4xf32, #tpu.memory_space<vmem>>, %arg5: memref<4x1xf32, #tpu.memory_space<vmem>>, %arg6: memref<3x8x4xf32, #tpu.memory_space<vmem>>, %arg7: memref<8x1xf32, #tpu.memory_space<vmem>>, %arg8: memref<8x1xf32, #tpu.memory_space<vmem>>, %arg9: memref<3x8x4xf32, #tpu.memory_space<vmem>>, %arg10: memref<8x1xf32, #tpu.memory_space<vmem>>, %arg11: memref<8x1xf32, #tpu.memory_space<vmem>>, %arg12: memref<4x8x32xf32, #tpu.memory_space<vmem>>, %arg13: memref<8x1xf32, #tpu.memory_space<vmem>>, %arg14: memref<8x1xf32, #tpu.memory_space<vmem>>, %arg15: memref<1x8x256xf32, #tpu.memory_space<vmem>>, %arg16: memref<4x512xf32, #tpu.memory_space<vmem>>, %arg17: memref<32x369xf32, #tpu.memory_space<vmem>>) attributes {dimension_semantics = [#tpu.dimension_semantics<parallel>], iteration_bounds = array<i64: 2>, scalar_prefetch = 0 : i64, scratch_operands = 2 : i64, tpu.core_type = #tpu.core_type<tc>, window_params = [{transform_indices = @transform_0, window_bounds = array<i64: 1, 4, 256>}, {pipeline_mode = #tpu.pipeline_mode<synchronous>, transform_indices = @transform_1, window_bounds = array<i64: 24, 4>}, {pipeline_mode = #tpu.pipeline_mode<synchronous>, transform_indices = @transform_2, window_bounds = array<i64: 24, 1>}, {pipeline_mode = #tpu.pipeline_mode<synchronous>, transform_indices = @transform_3, window_bounds = array<i64: 4, 4>}, {pipeline_mode = #tpu.pipeline_mode<synchronous>, transform_indices = @transform_4, window_bounds = array<i64: 4, 1>}, {pipeline_mode = #tpu.pipeline_mode<synchronous>, transform_indices = @transform_5, window_bounds = array<i64: 3, 8, 4>}, {pipeline_mode = #tpu.pipeline_mode<synchronous>, transform_indices = @transform_6, window_bounds = array<i64: 8, 1>}, {pipeline_mode = #tpu.pipeline_mode<synchronous>, transform_indices = @transform_7, window_bounds = array<i64: 8, 1>}, {pipeline_mode = #tpu.pipeline_mode<synchronous>, transform_indices = @transform_8, window_bounds = array<i64: 3, 8, 4>}, {pipeline_mode = #tpu.pipeline_mode<synchronous>, transform_indices = @transform_9, window_bounds = array<i64: 8, 1>}, {pipeline_mode = #tpu.pipeline_mode<synchronous>, transform_indices = @transform_10, window_bounds = array<i64: 8, 1>}, {pipeline_mode = #tpu.pipeline_mode<synchronous>, transform_indices = @transform_11, window_bounds = array<i64: 4, 8, 32>}, {pipeline_mode = #tpu.pipeline_mode<synchronous>, transform_indices = @transform_12, window_bounds = array<i64: 8, 1>}, {pipeline_mode = #tpu.pipeline_mode<synchronous>, transform_indices = @transform_13, window_bounds = array<i64: 8, 1>}, {transform_indices = @transform_14, window_bounds = array<i64: 1, 8, 256>}]} {
    %c0 = arith.constant 0 : index
    %c0_0 = arith.constant 0 : index
    %c0_1 = arith.constant 0 : index
    %0 = vector.load %arg1[%c0, %c0_0, %c0_1] : memref<1x4x256xf32, #tpu.memory_space<vmem>>, vector<1x4x256xf32>
    %1 = vector.shape_cast %0 : vector<1x4x256xf32> to vector<4x256xf32>
    %c0_2 = arith.constant 0 : index
    %c0_3 = arith.constant 0 : index
    %2 = vector.load %arg2[%c0_2, %c0_3] : memref<24x4xf32, #tpu.memory_space<vmem>>, vector<24x4xf32>
    %cst = arith.constant dense<0.000000e+00> : vector<24x256xf32>
    %3 = tpu.matmul %2, %1, %cst {dimension_numbers = #tpu.dot_dimension_numbers<[1], [0], [0], [1], [0, 0, 1, 1], [], []>} : vector<24x4xf32>, vector<4x256xf32>, vector<24x256xf32> -> vector<24x256xf32>
    %c0_4 = arith.constant 0 : index
    %c0_5 = arith.constant 0 : index
    %4 = vector.load %arg3[%c0_4, %c0_5] : memref<24x1xf32, #tpu.memory_space<vmem>>, vector<24x1xf32>
    %5 = vector.broadcast %4 : vector<24x1xf32> to vector<24x256xf32>
    %6 = arith.addf %3, %5 : vector<24x256xf32>
    %7 = vector.extract_strided_slice %6 {offsets = [0, 0], sizes = [1, 256], strides = [1, 1]} : vector<24x256xf32> to vector<1x256xf32>
    %8 = arith.negf %7 : vector<1x256xf32>
    %9 = math.exp %8 : vector<1x256xf32>
    %cst_6 = arith.constant 1.000000e+00 : f32
    %10 = vector.broadcast %cst_6 : f32 to vector<1x256xf32>
    %11 = arith.addf %10, %9 : vector<1x256xf32>
    %12 = arith.divf %10, %11 : vector<1x256xf32>
    %13 = vector.extract_strided_slice %6 {offsets = [8, 0], sizes = [1, 256], strides = [1, 1]} : vector<24x256xf32> to vector<1x256xf32>
    %14 = vector.extract_strided_slice %6 {offsets = [16, 0], sizes = [4, 256], strides = [1, 1]} : vector<24x256xf32> to vector<4x256xf32>
    %cst_7 = arith.constant dense<0xFF800000> : vector<1xf32>
    %15 = vector.multi_reduction <maximumf>, %13, %cst_7 [1] : vector<1x256xf32> to vector<1xf32>
    %16 = vector.shape_cast %15 : vector<1xf32> to vector<1x1xf32>
    %17 = vector.broadcast %16 : vector<1x1xf32> to vector<1x256xf32>
    %18 = arith.subf %13, %17 : vector<1x256xf32>
    %19 = math.exp %18 : vector<1x256xf32>
    %cst_8 = arith.constant dense<0.000000e+00> : vector<1xf32>
    %20 = vector.multi_reduction <add>, %19, %cst_8 [1] : vector<1x256xf32> to vector<1xf32>
    %21 = vector.shape_cast %20 : vector<1xf32> to vector<1x1xf32>
    %22 = tpu.reciprocal %21 {approx = true} : vector<1x1xf32> -> vector<1x1xf32>
    %23 = vector.broadcast %22 : vector<1x1xf32> to vector<1x256xf32>
    %24 = arith.mulf %19, %23 : vector<1x256xf32>
    %25 = vector.broadcast %24 : vector<1x256xf32> to vector<4x256xf32>
    %26 = arith.mulf %14, %25 : vector<4x256xf32>
    %cst_9 = arith.constant dense<0.000000e+00> : vector<4xf32>
    %27 = vector.multi_reduction <add>, %26, %cst_9 [1] : vector<4x256xf32> to vector<4xf32>
    %28 = vector.shape_cast %27 : vector<4xf32> to vector<4x1xf32>
    %c0_10 = arith.constant 0 : index
    %c0_11 = arith.constant 0 : index
    %29 = vector.load %arg4[%c0_10, %c0_11] : memref<4x4xf32, #tpu.memory_space<vmem>>, vector<4x4xf32>
    %cst_12 = arith.constant dense<0.000000e+00> : vector<4x1xf32>
    %30 = tpu.matmul %29, %28, %cst_12 {dimension_numbers = #tpu.dot_dimension_numbers<[1], [0], [0], [1], [0, 0, 1, 1], [], []>} : vector<4x4xf32>, vector<4x1xf32>, vector<4x1xf32> -> vector<4x1xf32>
    %c0_13 = arith.constant 0 : index
    %c0_14 = arith.constant 0 : index
    %31 = vector.load %arg5[%c0_13, %c0_14] : memref<4x1xf32, #tpu.memory_space<vmem>>, vector<4x1xf32>
    %32 = arith.addf %30, %31 : vector<4x1xf32>
    %33 = vector.broadcast %32 : vector<4x1xf32> to vector<4x256xf32>
    %34 = vector.broadcast %12 : vector<1x256xf32> to vector<4x256xf32>
    %35 = arith.mulf %33, %34 : vector<4x256xf32>
    %36 = arith.addf %1, %35 : vector<4x256xf32>
    %cst_15 = arith.constant 0.000000e+00 : f32
    %37 = vector.broadcast %cst_15 : f32 to vector<4x512xf32>
    %c0_16 = arith.constant 0 : index
    %c0_17 = arith.constant 0 : index
    %38 = vector.load %arg16[%c0_16, %c0_17] : memref<4x512xf32, #tpu.memory_space<vmem>>, vector<4x512xf32>
    tpu.vector_store %arg16[%c0_16, %c0_17], %37 {strides = array<i32>} : memref<4x512xf32, #tpu.memory_space<vmem>>, vector<4x512xf32>,
    %39 = vector.extract_strided_slice %36 {offsets = [0, 0], sizes = [4, 16], strides = [1, 1]} : vector<4x256xf32> to vector<4x16xf32>
    %c0_18 = arith.constant 0 : index
    %c69 = arith.constant 69 : index
    %40 = vector.load %arg16[%c0_18, %c69] : memref<4x512xf32, #tpu.memory_space<vmem>>, vector<4x16xf32>
    tpu.vector_store %arg16[%c0_18, %c69], %39 {strides = array<i32>} : memref<4x512xf32, #tpu.memory_space<vmem>>, vector<4x16xf32>,
    %41 = vector.extract_strided_slice %36 {offsets = [0, 16], sizes = [4, 16], strides = [1, 1]} : vector<4x256xf32> to vector<4x16xf32>
    %c0_19 = arith.constant 0 : index
    %c91 = arith.constant 91 : index
    %42 = vector.load %arg16[%c0_19, %c91] : memref<4x512xf32, #tpu.memory_space<vmem>>, vector<4x16xf32>
    tpu.vector_store %arg16[%c0_19, %c91], %41 {strides = array<i32>} : memref<4x512xf32, #tpu.memory_space<vmem>>, vector<4x16xf32>,
    %43 = vector.extract_strided_slice %36 {offsets = [0, 32], sizes = [4, 16], strides = [1, 1]} : vector<4x256xf32> to vector<4x16xf32>
    %c0_20 = arith.constant 0 : index
    %c113 = arith.constant 113 : index
    %44 = vector.load %arg16[%c0_20, %c113] : memref<4x512xf32, #tpu.memory_space<vmem>>, vector<4x16xf32>
    tpu.vector_store %arg16[%c0_20, %c113], %43 {strides = array<i32>} : memref<4x512xf32, #tpu.memory_space<vmem>>, vector<4x16xf32>,
    %45 = vector.extract_strided_slice %36 {offsets = [0, 48], sizes = [4, 16], strides = [1, 1]} : vector<4x256xf32> to vector<4x16xf32>
    %c0_21 = arith.constant 0 : index
    %c135 = arith.constant 135 : index
    %46 = vector.load %arg16[%c0_21, %c135] : memref<4x512xf32, #tpu.memory_space<vmem>>, vector<4x16xf32>
    tpu.vector_store %arg16[%c0_21, %c135], %45 {strides = array<i32>} : memref<4x512xf32, #tpu.memory_space<vmem>>, vector<4x16xf32>,
    %47 = vector.extract_strided_slice %36 {offsets = [0, 64], sizes = [4, 16], strides = [1, 1]} : vector<4x256xf32> to vector<4x16xf32>
    %c0_22 = arith.constant 0 : index
    %c157 = arith.constant 157 : index
    %48 = vector.load %arg16[%c0_22, %c157] : memref<4x512xf32, #tpu.memory_space<vmem>>, vector<4x16xf32>
    tpu.vector_store %arg16[%c0_22, %c157], %47 {strides = array<i32>} : memref<4x512xf32, #tpu.memory_space<vmem>>, vector<4x16xf32>,
    %49 = vector.extract_strided_slice %36 {offsets = [0, 80], sizes = [4, 16], strides = [1, 1]} : vector<4x256xf32> to vector<4x16xf32>
    %c0_23 = arith.constant 0 : index
    %c179 = arith.constant 179 : index
    %50 = vector.load %arg16[%c0_23, %c179] : memref<4x512xf32, #tpu.memory_space<vmem>>, vector<4x16xf32>
    tpu.vector_store %arg16[%c0_23, %c179], %49 {strides = array<i32>} : memref<4x512xf32, #tpu.memory_space<vmem>>, vector<4x16xf32>,
    %51 = vector.extract_strided_slice %36 {offsets = [0, 96], sizes = [4, 16], strides = [1, 1]} : vector<4x256xf32> to vector<4x16xf32>
    %c0_24 = arith.constant 0 : index
    %c201 = arith.constant 201 : index
    %52 = vector.load %arg16[%c0_24, %c201] : memref<4x512xf32, #tpu.memory_space<vmem>>, vector<4x16xf32>
    tpu.vector_store %arg16[%c0_24, %c201], %51 {strides = array<i32>} : memref<4x512xf32, #tpu.memory_space<vmem>>, vector<4x16xf32>,
    %53 = vector.extract_strided_slice %36 {offsets = [0, 112], sizes = [4, 16], strides = [1, 1]} : vector<4x256xf32> to vector<4x16xf32>
    %c0_25 = arith.constant 0 : index
    %c223 = arith.constant 223 : index
    %54 = vector.load %arg16[%c0_25, %c223] : memref<4x512xf32, #tpu.memory_space<vmem>>, vector<4x16xf32>
    tpu.vector_store %arg16[%c0_25, %c223], %53 {strides = array<i32>} : memref<4x512xf32, #tpu.memory_space<vmem>>, vector<4x16xf32>,
    %55 = vector.extract_strided_slice %36 {offsets = [0, 128], sizes = [4, 16], strides = [1, 1]} : vector<4x256xf32> to vector<4x16xf32>
    %c0_26 = arith.constant 0 : index
    %c245 = arith.constant 245 : index
    %56 = vector.load %arg16[%c0_26, %c245] : memref<4x512xf32, #tpu.memory_space<vmem>>, vector<4x16xf32>
    tpu.vector_store %arg16[%c0_26, %c245], %55 {strides = array<i32>} : memref<4x512xf32, #tpu.memory_space<vmem>>, vector<4x16xf32>,
    %57 = vector.extract_strided_slice %36 {offsets = [0, 144], sizes = [4, 16], strides = [1, 1]} : vector<4x256xf32> to vector<4x16xf32>
    %c0_27 = arith.constant 0 : index
    %c267 = arith.constant 267 : index
    %58 = vector.load %arg16[%c0_27, %c267] : memref<4x512xf32, #tpu.memory_space<vmem>>, vector<4x16xf32>
    tpu.vector_store %arg16[%c0_27, %c267], %57 {strides = array<i32>} : memref<4x512xf32, #tpu.memory_space<vmem>>, vector<4x16xf32>,
    %59 = vector.extract_strided_slice %36 {offsets = [0, 160], sizes = [4, 16], strides = [1, 1]} : vector<4x256xf32> to vector<4x16xf32>
    %c0_28 = arith.constant 0 : index
    %c289 = arith.constant 289 : index
    %60 = vector.load %arg16[%c0_28, %c289] : memref<4x512xf32, #tpu.memory_space<vmem>>, vector<4x16xf32>
    tpu.vector_store %arg16[%c0_28, %c289], %59 {strides = array<i32>} : memref<4x512xf32, #tpu.memory_space<vmem>>, vector<4x16xf32>,
    %61 = vector.extract_strided_slice %36 {offsets = [0, 176], sizes = [4, 16], strides = [1, 1]} : vector<4x256xf32> to vector<4x16xf32>
    %c0_29 = arith.constant 0 : index
    %c311 = arith.constant 311 : index
    %62 = vector.load %arg16[%c0_29, %c311] : memref<4x512xf32, #tpu.memory_space<vmem>>, vector<4x16xf32>
    tpu.vector_store %arg16[%c0_29, %c311], %61 {strides = array<i32>} : memref<4x512xf32, #tpu.memory_space<vmem>>, vector<4x16xf32>,
    %63 = vector.extract_strided_slice %36 {offsets = [0, 192], sizes = [4, 16], strides = [1, 1]} : vector<4x256xf32> to vector<4x16xf32>
    %c0_30 = arith.constant 0 : index
    %c333 = arith.constant 333 : index
    %64 = vector.load %arg16[%c0_30, %c333] : memref<4x512xf32, #tpu.memory_space<vmem>>, vector<4x16xf32>
    tpu.vector_store %arg16[%c0_30, %c333], %63 {strides = array<i32>} : memref<4x512xf32, #tpu.memory_space<vmem>>, vector<4x16xf32>,
    %65 = vector.extract_strided_slice %36 {offsets = [0, 208], sizes = [4, 16], strides = [1, 1]} : vector<4x256xf32> to vector<4x16xf32>
    %c0_31 = arith.constant 0 : index
    %c355 = arith.constant 355 : index
    %66 = vector.load %arg16[%c0_31, %c355] : memref<4x512xf32, #tpu.memory_space<vmem>>, vector<4x16xf32>
    tpu.vector_store %arg16[%c0_31, %c355], %65 {strides = array<i32>} : memref<4x512xf32, #tpu.memory_space<vmem>>, vector<4x16xf32>,
    %67 = vector.extract_strided_slice %36 {offsets = [0, 224], sizes = [4, 16], strides = [1, 1]} : vector<4x256xf32> to vector<4x16xf32>
    %c0_32 = arith.constant 0 : index
    %c377 = arith.constant 377 : index
    %68 = vector.load %arg16[%c0_32, %c377] : memref<4x512xf32, #tpu.memory_space<vmem>>, vector<4x16xf32>
    tpu.vector_store %arg16[%c0_32, %c377], %67 {strides = array<i32>} : memref<4x512xf32, #tpu.memory_space<vmem>>, vector<4x16xf32>,
    %69 = vector.extract_strided_slice %36 {offsets = [0, 240], sizes = [4, 16], strides = [1, 1]} : vector<4x256xf32> to vector<4x16xf32>
    %c0_33 = arith.constant 0 : index
    %c399 = arith.constant 399 : index
    %70 = vector.load %arg16[%c0_33, %c399] : memref<4x512xf32, #tpu.memory_space<vmem>>, vector<4x16xf32>
    tpu.vector_store %arg16[%c0_33, %c399], %69 {strides = array<i32>} : memref<4x512xf32, #tpu.memory_space<vmem>>, vector<4x16xf32>,
    %c0_34 = arith.constant 0 : index
    %c44 = arith.constant 44 : index
    %71 = vector.load %arg16[%c0_34, %c44] : memref<4x512xf32, #tpu.memory_space<vmem>>, vector<4x394xf32>
    %c0_35 = arith.constant 0 : index
    %c0_36 = arith.constant 0 : index
    %c0_37 = arith.constant 0 : index
    %72 = vector.load %arg6[%c0_35, %c0_36, %c0_37] : memref<3x8x4xf32, #tpu.memory_space<vmem>>, vector<1x8x4xf32>
    %73 = vector.shape_cast %72 : vector<1x8x4xf32> to vector<8x4xf32>
    %cst_38 = arith.constant dense<0.000000e+00> : vector<8x394xf32>
    %74 = tpu.matmul %73, %71, %cst_38 {dimension_numbers = #tpu.dot_dimension_numbers<[1], [0], [0], [1], [0, 0, 1, 1], [], []>} : vector<8x4xf32>, vector<4x394xf32>, vector<8x394xf32> -> vector<8x394xf32>
    %c0_39 = arith.constant 0 : index
    %c45 = arith.constant 45 : index
    %75 = vector.load %arg16[%c0_39, %c45] : memref<4x512xf32, #tpu.memory_space<vmem>>, vector<4x394xf32>
    %c1 = arith.constant 1 : index
    %c0_40 = arith.constant 0 : index
    %c0_41 = arith.constant 0 : index
    %76 = vector.load %arg6[%c1, %c0_40, %c0_41] : memref<3x8x4xf32, #tpu.memory_space<vmem>>, vector<1x8x4xf32>
    %77 = vector.shape_cast %76 : vector<1x8x4xf32> to vector<8x4xf32>
    %cst_42 = arith.constant dense<0.000000e+00> : vector<8x394xf32>
    %78 = tpu.matmul %77, %75, %cst_42 {dimension_numbers = #tpu.dot_dimension_numbers<[1], [0], [0], [1], [0, 0, 1, 1], [], []>} : vector<8x4xf32>, vector<4x394xf32>, vector<8x394xf32> -> vector<8x394xf32>
    %79 = arith.addf %74, %78 : vector<8x394xf32>
    %c0_43 = arith.constant 0 : index
    %c46 = arith.constant 46 : index
    %80 = vector.load %arg16[%c0_43, %c46] : memref<4x512xf32, #tpu.memory_space<vmem>>, vector<4x394xf32>
    %c2 = arith.constant 2 : index
    %c0_44 = arith.constant 0 : index
    %c0_45 = arith.constant 0 : index
    %81 = vector.load %arg6[%c2, %c0_44, %c0_45] : memref<3x8x4xf32, #tpu.memory_space<vmem>>, vector<1x8x4xf32>
    %82 = vector.shape_cast %81 : vector<1x8x4xf32> to vector<8x4xf32>
    %cst_46 = arith.constant dense<0.000000e+00> : vector<8x394xf32>
    %83 = tpu.matmul %82, %80, %cst_46 {dimension_numbers = #tpu.dot_dimension_numbers<[1], [0], [0], [1], [0, 0, 1, 1], [], []>} : vector<8x4xf32>, vector<4x394xf32>, vector<8x394xf32> -> vector<8x394xf32>
    %84 = arith.addf %79, %83 : vector<8x394xf32>
    %c0_47 = arith.constant 0 : index
    %c0_48 = arith.constant 0 : index
    %85 = vector.load %arg7[%c0_47, %c0_48] : memref<8x1xf32, #tpu.memory_space<vmem>>, vector<8x1xf32>
    %86 = vector.broadcast %85 : vector<8x1xf32> to vector<8x394xf32>
    %87 = arith.mulf %84, %86 : vector<8x394xf32>
    %c0_49 = arith.constant 0 : index
    %c0_50 = arith.constant 0 : index
    %88 = vector.load %arg8[%c0_49, %c0_50] : memref<8x1xf32, #tpu.memory_space<vmem>>, vector<8x1xf32>
    %89 = vector.broadcast %88 : vector<8x1xf32> to vector<8x394xf32>
    %90 = arith.addf %87, %89 : vector<8x394xf32>
    %91 = arith.negf %90 : vector<8x394xf32>
    %92 = math.exp %91 : vector<8x394xf32>
    %cst_51 = arith.constant 1.000000e+00 : f32
    %93 = vector.broadcast %cst_51 : f32 to vector<8x394xf32>
    %94 = arith.addf %93, %92 : vector<8x394xf32>
    %95 = arith.divf %93, %94 : vector<8x394xf32>
    %96 = arith.mulf %90, %95 : vector<8x394xf32>
    %97 = vector.extract_strided_slice %96 {offsets = [0, 0], sizes = [8, 369], strides = [1, 1]} : vector<8x394xf32> to vector<8x369xf32>
    %c0_52 = arith.constant 0 : index
    %c0_53 = arith.constant 0 : index
    %98 = vector.load %arg17[%c0_52, %c0_53] : memref<32x369xf32, #tpu.memory_space<vmem>>, vector<8x369xf32>
    tpu.vector_store %arg17[%c0_52, %c0_53], %97 {strides = array<i32>} : memref<32x369xf32, #tpu.memory_space<vmem>>, vector<8x369xf32>,
    %99 = vector.extract_strided_slice %96 {offsets = [0, 25], sizes = [8, 369], strides = [1, 1]} : vector<8x394xf32> to vector<8x369xf32>
    %c8 = arith.constant 8 : index
    %c0_54 = arith.constant 0 : index
    %100 = vector.load %arg17[%c8, %c0_54] : memref<32x369xf32, #tpu.memory_space<vmem>>, vector<8x369xf32>
    tpu.vector_store %arg17[%c8, %c0_54], %99 {strides = array<i32>} : memref<32x369xf32, #tpu.memory_space<vmem>>, vector<8x369xf32>,
    %c0_55 = arith.constant 0 : index
    %c3 = arith.constant 3 : index
    %101 = vector.load %arg16[%c0_55, %c3] : memref<4x512xf32, #tpu.memory_space<vmem>>, vector<4x434xf32>
    %c0_56 = arith.constant 0 : index
    %c0_57 = arith.constant 0 : index
    %c0_58 = arith.constant 0 : index
    %102 = vector.load %arg9[%c0_56, %c0_57, %c0_58] : memref<3x8x4xf32, #tpu.memory_space<vmem>>, vector<1x8x4xf32>
    %103 = vector.shape_cast %102 : vector<1x8x4xf32> to vector<8x4xf32>
    %cst_59 = arith.constant dense<0.000000e+00> : vector<8x434xf32>
    %104 = tpu.matmul %103, %101, %cst_59 {dimension_numbers = #tpu.dot_dimension_numbers<[1], [0], [0], [1], [0, 0, 1, 1], [], []>} : vector<8x4xf32>, vector<4x434xf32>, vector<8x434xf32> -> vector<8x434xf32>
    %c0_60 = arith.constant 0 : index
    %c25 = arith.constant 25 : index
    %105 = vector.load %arg16[%c0_60, %c25] : memref<4x512xf32, #tpu.memory_space<vmem>>, vector<4x434xf32>
    %c1_61 = arith.constant 1 : index
    %c0_62 = arith.constant 0 : index
    %c0_63 = arith.constant 0 : index
    %106 = vector.load %arg9[%c1_61, %c0_62, %c0_63] : memref<3x8x4xf32, #tpu.memory_space<vmem>>, vector<1x8x4xf32>
    %107 = vector.shape_cast %106 : vector<1x8x4xf32> to vector<8x4xf32>
    %cst_64 = arith.constant dense<0.000000e+00> : vector<8x434xf32>
    %108 = tpu.matmul %107, %105, %cst_64 {dimension_numbers = #tpu.dot_dimension_numbers<[1], [0], [0], [1], [0, 0, 1, 1], [], []>} : vector<8x4xf32>, vector<4x434xf32>, vector<8x434xf32> -> vector<8x434xf32>
    %109 = arith.addf %104, %108 : vector<8x434xf32>
    %c0_65 = arith.constant 0 : index
    %c47 = arith.constant 47 : index
    %110 = vector.load %arg16[%c0_65, %c47] : memref<4x512xf32, #tpu.memory_space<vmem>>, vector<4x434xf32>
    %c2_66 = arith.constant 2 : index
    %c0_67 = arith.constant 0 : index
    %c0_68 = arith.constant 0 : index
    %111 = vector.load %arg9[%c2_66, %c0_67, %c0_68] : memref<3x8x4xf32, #tpu.memory_space<vmem>>, vector<1x8x4xf32>
    %112 = vector.shape_cast %111 : vector<1x8x4xf32> to vector<8x4xf32>
    %cst_69 = arith.constant dense<0.000000e+00> : vector<8x434xf32>
    %113 = tpu.matmul %112, %110, %cst_69 {dimension_numbers = #tpu.dot_dimension_numbers<[1], [0], [0], [1], [0, 0, 1, 1], [], []>} : vector<8x4xf32>, vector<4x434xf32>, vector<8x434xf32> -> vector<8x434xf32>
    %114 = arith.addf %109, %113 : vector<8x434xf32>
    %c0_70 = arith.constant 0 : index
    %c0_71 = arith.constant 0 : index
    %115 = vector.load %arg10[%c0_70, %c0_71] : memref<8x1xf32, #tpu.memory_space<vmem>>, vector<8x1xf32>
    %116 = vector.broadcast %115 : vector<8x1xf32> to vector<8x434xf32>
    %117 = arith.mulf %114, %116 : vector<8x434xf32>
    %c0_72 = arith.constant 0 : index
    %c0_73 = arith.constant 0 : index
    %118 = vector.load %arg11[%c0_72, %c0_73] : memref<8x1xf32, #tpu.memory_space<vmem>>, vector<8x1xf32>
    %119 = vector.broadcast %118 : vector<8x1xf32> to vector<8x434xf32>
    %120 = arith.addf %117, %119 : vector<8x434xf32>
    %121 = arith.negf %120 : vector<8x434xf32>
    %122 = math.exp %121 : vector<8x434xf32>
    %cst_74 = arith.constant 1.000000e+00 : f32
    %123 = vector.broadcast %cst_74 : f32 to vector<8x434xf32>
    %124 = arith.addf %123, %122 : vector<8x434xf32>
    %125 = arith.divf %123, %124 : vector<8x434xf32>
    %126 = arith.mulf %120, %125 : vector<8x434xf32>
    %127 = vector.extract_strided_slice %126 {offsets = [0, 0], sizes = [8, 369], strides = [1, 1]} : vector<8x434xf32> to vector<8x369xf32>
    %c16 = arith.constant 16 : index
    %c0_75 = arith.constant 0 : index
    %128 = vector.load %arg17[%c16, %c0_75] : memref<32x369xf32, #tpu.memory_space<vmem>>, vector<8x369xf32>
    tpu.vector_store %arg17[%c16, %c0_75], %127 {strides = array<i32>} : memref<32x369xf32, #tpu.memory_space<vmem>>, vector<8x369xf32>,
    %129 = vector.extract_strided_slice %126 {offsets = [0, 65], sizes = [8, 369], strides = [1, 1]} : vector<8x434xf32> to vector<8x369xf32>
    %c24 = arith.constant 24 : index
    %c0_76 = arith.constant 0 : index
    %130 = vector.load %arg17[%c24, %c0_76] : memref<32x369xf32, #tpu.memory_space<vmem>>, vector<8x369xf32>
    tpu.vector_store %arg17[%c24, %c0_76], %129 {strides = array<i32>} : memref<32x369xf32, #tpu.memory_space<vmem>>, vector<8x369xf32>,
    %c0_77 = arith.constant 0 : index
    %c0_78 = arith.constant 0 : index
    %c0_79 = arith.constant 0 : index
    %131 = vector.load %arg12[%c0_77, %c0_78, %c0_79] : memref<4x8x32xf32, #tpu.memory_space<vmem>>, vector<1x8x32xf32>
    %132 = vector.shape_cast %131 : vector<1x8x32xf32> to vector<8x32xf32>
    %c0_80 = arith.constant 0 : index
    %c0_81 = arith.constant 0 : index
    %133 = vector.load %arg17[%c0_80, %c0_81] : memref<32x369xf32, #tpu.memory_space<vmem>>, vector<32x346xf32>
    %cst_82 = arith.constant dense<0.000000e+00> : vector<8x346xf32>
    %134 = tpu.matmul %132, %133, %cst_82 {dimension_numbers = #tpu.dot_dimension_numbers<[1], [0], [0], [1], [0, 0, 1, 1], [], []>} : vector<8x32xf32>, vector<32x346xf32>, vector<8x346xf32> -> vector<8x346xf32>
    %c1_83 = arith.constant 1 : index
    %c0_84 = arith.constant 0 : index
    %c0_85 = arith.constant 0 : index
    %135 = vector.load %arg12[%c1_83, %c0_84, %c0_85] : memref<4x8x32xf32, #tpu.memory_space<vmem>>, vector<1x8x32xf32>
    %136 = vector.shape_cast %135 : vector<1x8x32xf32> to vector<8x32xf32>
    %c0_86 = arith.constant 0 : index
    %c1_87 = arith.constant 1 : index
    %137 = vector.load %arg17[%c0_86, %c1_87] : memref<32x369xf32, #tpu.memory_space<vmem>>, vector<32x346xf32>
    %cst_88 = arith.constant dense<0.000000e+00> : vector<8x346xf32>
    %138 = tpu.matmul %136, %137, %cst_88 {dimension_numbers = #tpu.dot_dimension_numbers<[1], [0], [0], [1], [0, 0, 1, 1], [], []>} : vector<8x32xf32>, vector<32x346xf32>, vector<8x346xf32> -> vector<8x346xf32>
    %139 = arith.addf %134, %138 : vector<8x346xf32>
    %c2_89 = arith.constant 2 : index
    %c0_90 = arith.constant 0 : index
    %c0_91 = arith.constant 0 : index
    %140 = vector.load %arg12[%c2_89, %c0_90, %c0_91] : memref<4x8x32xf32, #tpu.memory_space<vmem>>, vector<1x8x32xf32>
    %141 = vector.shape_cast %140 : vector<1x8x32xf32> to vector<8x32xf32>
    %c0_92 = arith.constant 0 : index
    %c22 = arith.constant 22 : index
    %142 = vector.load %arg17[%c0_92, %c22] : memref<32x369xf32, #tpu.memory_space<vmem>>, vector<32x346xf32>
    %cst_93 = arith.constant dense<0.000000e+00> : vector<8x346xf32>
    %143 = tpu.matmul %141, %142, %cst_93 {dimension_numbers = #tpu.dot_dimension_numbers<[1], [0], [0], [1], [0, 0, 1, 1], [], []>} : vector<8x32xf32>, vector<32x346xf32>, vector<8x346xf32> -> vector<8x346xf32>
    %144 = arith.addf %139, %143 : vector<8x346xf32>
    %c3_94 = arith.constant 3 : index
    %c0_95 = arith.constant 0 : index
    %c0_96 = arith.constant 0 : index
    %145 = vector.load %arg12[%c3_94, %c0_95, %c0_96] : memref<4x8x32xf32, #tpu.memory_space<vmem>>, vector<1x8x32xf32>
    %146 = vector.shape_cast %145 : vector<1x8x32xf32> to vector<8x32xf32>
    %c0_97 = arith.constant 0 : index
    %c23 = arith.constant 23 : index
    %147 = vector.load %arg17[%c0_97, %c23] : memref<32x369xf32, #tpu.memory_space<vmem>>, vector<32x346xf32>
    %cst_98 = arith.constant dense<0.000000e+00> : vector<8x346xf32>
    %148 = tpu.matmul %146, %147, %cst_98 {dimension_numbers = #tpu.dot_dimension_numbers<[1], [0], [0], [1], [0, 0, 1, 1], [], []>} : vector<8x32xf32>, vector<32x346xf32>, vector<8x346xf32> -> vector<8x346xf32>
    %149 = arith.addf %144, %148 : vector<8x346xf32>
    %c0_99 = arith.constant 0 : index
    %c0_100 = arith.constant 0 : index
    %150 = vector.load %arg13[%c0_99, %c0_100] : memref<8x1xf32, #tpu.memory_space<vmem>>, vector<8x1xf32>
    %151 = vector.broadcast %150 : vector<8x1xf32> to vector<8x346xf32>
    %152 = arith.mulf %149, %151 : vector<8x346xf32>
    %c0_101 = arith.constant 0 : index
    %c0_102 = arith.constant 0 : index
    %153 = vector.load %arg14[%c0_101, %c0_102] : memref<8x1xf32, #tpu.memory_space<vmem>>, vector<8x1xf32>
    %154 = vector.broadcast %153 : vector<8x1xf32> to vector<8x346xf32>
    %155 = arith.addf %152, %154 : vector<8x346xf32>
    %156 = arith.negf %155 : vector<8x346xf32>
    %157 = math.exp %156 : vector<8x346xf32>
    %cst_103 = arith.constant 1.000000e+00 : f32
    %158 = vector.broadcast %cst_103 : f32 to vector<8x346xf32>
    %159 = arith.addf %158, %157 : vector<8x346xf32>
    %160 = arith.divf %158, %159 : vector<8x346xf32>
    %161 = arith.mulf %155, %160 : vector<8x346xf32>
    %162 = vector.extract_strided_slice %161 {offsets = [0, 0], sizes = [8, 16], strides = [1, 1]} : vector<8x346xf32> to vector<8x16xf32>
    %c0_104 = arith.constant 0 : index
    %c0_105 = arith.constant 0 : index
    %c0_106 = arith.constant 0 : index
    %163 = vector.load %arg15[%c0_104, %c0_105, %c0_106] : memref<1x8x256xf32, #tpu.memory_space<vmem>>, vector<1x8x16xf32>
    %164 = vector.shape_cast %163 : vector<1x8x16xf32> to vector<8x16xf32>
    %165 = vector.shape_cast %162 : vector<8x16xf32> to vector<1x8x16xf32>
    tpu.vector_store %arg15[%c0_104, %c0_105, %c0_106], %165 {strides = array<i32>} : memref<1x8x256xf32, #tpu.memory_space<vmem>>, vector<1x8x16xf32>,
    %166 = vector.extract_strided_slice %161 {offsets = [0, 22], sizes = [8, 16], strides = [1, 1]} : vector<8x346xf32> to vector<8x16xf32>
    %c0_107 = arith.constant 0 : index
    %c0_108 = arith.constant 0 : index
    %c16_109 = arith.constant 16 : index
    %167 = vector.load %arg15[%c0_107, %c0_108, %c16_109] : memref<1x8x256xf32, #tpu.memory_space<vmem>>, vector<1x8x16xf32>
    %168 = vector.shape_cast %167 : vector<1x8x16xf32> to vector<8x16xf32>
    %169 = vector.shape_cast %166 : vector<8x16xf32> to vector<1x8x16xf32>
    tpu.vector_store %arg15[%c0_107, %c0_108, %c16_109], %169 {strides = array<i32>} : memref<1x8x256xf32, #tpu.memory_space<vmem>>, vector<1x8x16xf32>,
    %170 = vector.extract_strided_slice %161 {offsets = [0, 44], sizes = [8, 16], strides = [1, 1]} : vector<8x346xf32> to vector<8x16xf32>
    %c0_110 = arith.constant 0 : index
    %c0_111 = arith.constant 0 : index
    %c32 = arith.constant 32 : index
    %171 = vector.load %arg15[%c0_110, %c0_111, %c32] : memref<1x8x256xf32, #tpu.memory_space<vmem>>, vector<1x8x16xf32>
    %172 = vector.shape_cast %171 : vector<1x8x16xf32> to vector<8x16xf32>
    %173 = vector.shape_cast %170 : vector<8x16xf32> to vector<1x8x16xf32>
    tpu.vector_store %arg15[%c0_110, %c0_111, %c32], %173 {strides = array<i32>} : memref<1x8x256xf32, #tpu.memory_space<vmem>>, vector<1x8x16xf32>,
    %174 = vector.extract_strided_slice %161 {offsets = [0, 66], sizes = [8, 16], strides = [1, 1]} : vector<8x346xf32> to vector<8x16xf32>
    %c0_112 = arith.constant 0 : index
    %c0_113 = arith.constant 0 : index
    %c48 = arith.constant 48 : index
    %175 = vector.load %arg15[%c0_112, %c0_113, %c48] : memref<1x8x256xf32, #tpu.memory_space<vmem>>, vector<1x8x16xf32>
    %176 = vector.shape_cast %175 : vector<1x8x16xf32> to vector<8x16xf32>
    %177 = vector.shape_cast %174 : vector<8x16xf32> to vector<1x8x16xf32>
    tpu.vector_store %arg15[%c0_112, %c0_113, %c48], %177 {strides = array<i32>} : memref<1x8x256xf32, #tpu.memory_space<vmem>>, vector<1x8x16xf32>,
    %178 = vector.extract_strided_slice %161 {offsets = [0, 88], sizes = [8, 16], strides = [1, 1]} : vector<8x346xf32> to vector<8x16xf32>
    %c0_114 = arith.constant 0 : index
    %c0_115 = arith.constant 0 : index
    %c64 = arith.constant 64 : index
    %179 = vector.load %arg15[%c0_114, %c0_115, %c64] : memref<1x8x256xf32, #tpu.memory_space<vmem>>, vector<1x8x16xf32>
    %180 = vector.shape_cast %179 : vector<1x8x16xf32> to vector<8x16xf32>
    %181 = vector.shape_cast %178 : vector<8x16xf32> to vector<1x8x16xf32>
    tpu.vector_store %arg15[%c0_114, %c0_115, %c64], %181 {strides = array<i32>} : memref<1x8x256xf32, #tpu.memory_space<vmem>>, vector<1x8x16xf32>,
    %182 = vector.extract_strided_slice %161 {offsets = [0, 110], sizes = [8, 16], strides = [1, 1]} : vector<8x346xf32> to vector<8x16xf32>
    %c0_116 = arith.constant 0 : index
    %c0_117 = arith.constant 0 : index
    %c80 = arith.constant 80 : index
    %183 = vector.load %arg15[%c0_116, %c0_117, %c80] : memref<1x8x256xf32, #tpu.memory_space<vmem>>, vector<1x8x16xf32>
    %184 = vector.shape_cast %183 : vector<1x8x16xf32> to vector<8x16xf32>
    %185 = vector.shape_cast %182 : vector<8x16xf32> to vector<1x8x16xf32>
    tpu.vector_store %arg15[%c0_116, %c0_117, %c80], %185 {strides = array<i32>} : memref<1x8x256xf32, #tpu.memory_space<vmem>>, vector<1x8x16xf32>,
    %186 = vector.extract_strided_slice %161 {offsets = [0, 132], sizes = [8, 16], strides = [1, 1]} : vector<8x346xf32> to vector<8x16xf32>
    %c0_118 = arith.constant 0 : index
    %c0_119 = arith.constant 0 : index
    %c96 = arith.constant 96 : index
    %187 = vector.load %arg15[%c0_118, %c0_119, %c96] : memref<1x8x256xf32, #tpu.memory_space<vmem>>, vector<1x8x16xf32>
    %188 = vector.shape_cast %187 : vector<1x8x16xf32> to vector<8x16xf32>
    %189 = vector.shape_cast %186 : vector<8x16xf32> to vector<1x8x16xf32>
    tpu.vector_store %arg15[%c0_118, %c0_119, %c96], %189 {strides = array<i32>} : memref<1x8x256xf32, #tpu.memory_space<vmem>>, vector<1x8x16xf32>,
    %190 = vector.extract_strided_slice %161 {offsets = [0, 154], sizes = [8, 16], strides = [1, 1]} : vector<8x346xf32> to vector<8x16xf32>
    %c0_120 = arith.constant 0 : index
    %c0_121 = arith.constant 0 : index
    %c112 = arith.constant 112 : index
    %191 = vector.load %arg15[%c0_120, %c0_121, %c112] : memref<1x8x256xf32, #tpu.memory_space<vmem>>, vector<1x8x16xf32>
    %192 = vector.shape_cast %191 : vector<1x8x16xf32> to vector<8x16xf32>
    %193 = vector.shape_cast %190 : vector<8x16xf32> to vector<1x8x16xf32>
    tpu.vector_store %arg15[%c0_120, %c0_121, %c112], %193 {strides = array<i32>} : memref<1x8x256xf32, #tpu.memory_space<vmem>>, vector<1x8x16xf32>,
    %194 = vector.extract_strided_slice %161 {offsets = [0, 176], sizes = [8, 16], strides = [1, 1]} : vector<8x346xf32> to vector<8x16xf32>
    %c0_122 = arith.constant 0 : index
    %c0_123 = arith.constant 0 : index
    %c128 = arith.constant 128 : index
    %195 = vector.load %arg15[%c0_122, %c0_123, %c128] : memref<1x8x256xf32, #tpu.memory_space<vmem>>, vector<1x8x16xf32>
    %196 = vector.shape_cast %195 : vector<1x8x16xf32> to vector<8x16xf32>
    %197 = vector.shape_cast %194 : vector<8x16xf32> to vector<1x8x16xf32>
    tpu.vector_store %arg15[%c0_122, %c0_123, %c128], %197 {strides = array<i32>} : memref<1x8x256xf32, #tpu.memory_space<vmem>>, vector<1x8x16xf32>,
    %198 = vector.extract_strided_slice %161 {offsets = [0, 198], sizes = [8, 16], strides = [1, 1]} : vector<8x346xf32> to vector<8x16xf32>
    %c0_124 = arith.constant 0 : index
    %c0_125 = arith.constant 0 : index
    %c144 = arith.constant 144 : index
    %199 = vector.load %arg15[%c0_124, %c0_125, %c144] : memref<1x8x256xf32, #tpu.memory_space<vmem>>, vector<1x8x16xf32>
    %200 = vector.shape_cast %199 : vector<1x8x16xf32> to vector<8x16xf32>
    %201 = vector.shape_cast %198 : vector<8x16xf32> to vector<1x8x16xf32>
    tpu.vector_store %arg15[%c0_124, %c0_125, %c144], %201 {strides = array<i32>} : memref<1x8x256xf32, #tpu.memory_space<vmem>>, vector<1x8x16xf32>,
    %202 = vector.extract_strided_slice %161 {offsets = [0, 220], sizes = [8, 16], strides = [1, 1]} : vector<8x346xf32> to vector<8x16xf32>
    %c0_126 = arith.constant 0 : index
    %c0_127 = arith.constant 0 : index
    %c160 = arith.constant 160 : index
    %203 = vector.load %arg15[%c0_126, %c0_127, %c160] : memref<1x8x256xf32, #tpu.memory_space<vmem>>, vector<1x8x16xf32>
    %204 = vector.shape_cast %203 : vector<1x8x16xf32> to vector<8x16xf32>
    %205 = vector.shape_cast %202 : vector<8x16xf32> to vector<1x8x16xf32>
    tpu.vector_store %arg15[%c0_126, %c0_127, %c160], %205 {strides = array<i32>} : memref<1x8x256xf32, #tpu.memory_space<vmem>>, vector<1x8x16xf32>,
    %206 = vector.extract_strided_slice %161 {offsets = [0, 242], sizes = [8, 16], strides = [1, 1]} : vector<8x346xf32> to vector<8x16xf32>
    %c0_128 = arith.constant 0 : index
    %c0_129 = arith.constant 0 : index
    %c176 = arith.constant 176 : index
    %207 = vector.load %arg15[%c0_128, %c0_129, %c176] : memref<1x8x256xf32, #tpu.memory_space<vmem>>, vector<1x8x16xf32>
    %208 = vector.shape_cast %207 : vector<1x8x16xf32> to vector<8x16xf32>
    %209 = vector.shape_cast %206 : vector<8x16xf32> to vector<1x8x16xf32>
    tpu.vector_store %arg15[%c0_128, %c0_129, %c176], %209 {strides = array<i32>} : memref<1x8x256xf32, #tpu.memory_space<vmem>>, vector<1x8x16xf32>,
    %210 = vector.extract_strided_slice %161 {offsets = [0, 264], sizes = [8, 16], strides = [1, 1]} : vector<8x346xf32> to vector<8x16xf32>
    %c0_130 = arith.constant 0 : index
    %c0_131 = arith.constant 0 : index
    %c192 = arith.constant 192 : index
    %211 = vector.load %arg15[%c0_130, %c0_131, %c192] : memref<1x8x256xf32, #tpu.memory_space<vmem>>, vector<1x8x16xf32>
    %212 = vector.shape_cast %211 : vector<1x8x16xf32> to vector<8x16xf32>
    %213 = vector.shape_cast %210 : vector<8x16xf32> to vector<1x8x16xf32>
    tpu.vector_store %arg15[%c0_130, %c0_131, %c192], %213 {strides = array<i32>} : memref<1x8x256xf32, #tpu.memory_space<vmem>>, vector<1x8x16xf32>,
    %214 = vector.extract_strided_slice %161 {offsets = [0, 286], sizes = [8, 16], strides = [1, 1]} : vector<8x346xf32> to vector<8x16xf32>
    %c0_132 = arith.constant 0 : index
    %c0_133 = arith.constant 0 : index
    %c208 = arith.constant 208 : index
    %215 = vector.load %arg15[%c0_132, %c0_133, %c208] : memref<1x8x256xf32, #tpu.memory_space<vmem>>, vector<1x8x16xf32>
    %216 = vector.shape_cast %215 : vector<1x8x16xf32> to vector<8x16xf32>
    %217 = vector.shape_cast %214 : vector<8x16xf32> to vector<1x8x16xf32>
    tpu.vector_store %arg15[%c0_132, %c0_133, %c208], %217 {strides = array<i32>} : memref<1x8x256xf32, #tpu.memory_space<vmem>>, vector<1x8x16xf32>,
    %218 = vector.extract_strided_slice %161 {offsets = [0, 308], sizes = [8, 16], strides = [1, 1]} : vector<8x346xf32> to vector<8x16xf32>
    %c0_134 = arith.constant 0 : index
    %c0_135 = arith.constant 0 : index
    %c224 = arith.constant 224 : index
    %219 = vector.load %arg15[%c0_134, %c0_135, %c224] : memref<1x8x256xf32, #tpu.memory_space<vmem>>, vector<1x8x16xf32>
    %220 = vector.shape_cast %219 : vector<1x8x16xf32> to vector<8x16xf32>
    %221 = vector.shape_cast %218 : vector<8x16xf32> to vector<1x8x16xf32>
    tpu.vector_store %arg15[%c0_134, %c0_135, %c224], %221 {strides = array<i32>} : memref<1x8x256xf32, #tpu.memory_space<vmem>>, vector<1x8x16xf32>,
    %222 = vector.extract_strided_slice %161 {offsets = [0, 330], sizes = [8, 16], strides = [1, 1]} : vector<8x346xf32> to vector<8x16xf32>
    %c0_136 = arith.constant 0 : index
    %c0_137 = arith.constant 0 : index
    %c240 = arith.constant 240 : index
    %223 = vector.load %arg15[%c0_136, %c0_137, %c240] : memref<1x8x256xf32, #tpu.memory_space<vmem>>, vector<1x8x16xf32>
    %224 = vector.shape_cast %223 : vector<1x8x16xf32> to vector<8x16xf32>
    %225 = vector.shape_cast %222 : vector<8x16xf32> to vector<1x8x16xf32>
    tpu.vector_store %arg15[%c0_136, %c0_137, %c240], %225 {strides = array<i32>} : memref<1x8x256xf32, #tpu.memory_space<vmem>>, vector<1x8x16xf32>,
    return
  }
  func.func @transform_0(%arg0: i32) -> (i32, i32, i32) {
    %c0_i32 = arith.constant 0 : i32
    %c0_i32_0 = arith.constant 0 : i32
    %c0_i32_1 = arith.constant 0 : i32
    return %arg0, %c0_i32, %c0_i32_0 : i32, i32, i32
  }
  func.func @transform_1(%arg0: i32) -> (i32, i32) {
    %c0_i32 = arith.constant 0 : i32
    %c0_i32_0 = arith.constant 0 : i32
    %c0_i32_1 = arith.constant 0 : i32
    return %c0_i32, %c0_i32_0 : i32, i32
  }
  func.func @transform_2(%arg0: i32) -> (i32, i32) {
    %c0_i32 = arith.constant 0 : i32
    %c0_i32_0 = arith.constant 0 : i32
    %c0_i32_1 = arith.constant 0 : i32
    return %c0_i32, %c0_i32_0 : i32, i32
  }
  func.func @transform_3(%arg0: i32) -> (i32, i32) {
    %c0_i32 = arith.constant 0 : i32
    %c0_i32_0 = arith.constant 0 : i32
    %c0_i32_1 = arith.constant 0 : i32
    return %c0_i32, %c0_i32_0 : i32, i32
  }
  func.func @transform_4(%arg0: i32) -> (i32, i32) {
    %c0_i32 = arith.constant 0 : i32
    %c0_i32_0 = arith.constant 0 : i32
    %c0_i32_1 = arith.constant 0 : i32
    return %c0_i32, %c0_i32_0 : i32, i32
  }
  func.func @transform_5(%arg0: i32) -> (i32, i32, i32) {
    %c0_i32 = arith.constant 0 : i32
    %c0_i32_0 = arith.constant 0 : i32
    %c0_i32_1 = arith.constant 0 : i32
    %c0_i32_2 = arith.constant 0 : i32
    return %c0_i32, %c0_i32_0, %c0_i32_1 : i32, i32, i32
  }
  func.func @transform_6(%arg0: i32) -> (i32, i32) {
    %c0_i32 = arith.constant 0 : i32
    %c0_i32_0 = arith.constant 0 : i32
    %c0_i32_1 = arith.constant 0 : i32
    return %c0_i32, %c0_i32_0 : i32, i32
  }
  func.func @transform_7(%arg0: i32) -> (i32, i32) {
    %c0_i32 = arith.constant 0 : i32
    %c0_i32_0 = arith.constant 0 : i32
    %c0_i32_1 = arith.constant 0 : i32
    return %c0_i32, %c0_i32_0 : i32, i32
  }
  func.func @transform_8(%arg0: i32) -> (i32, i32, i32) {
    %c0_i32 = arith.constant 0 : i32
    %c0_i32_0 = arith.constant 0 : i32
    %c0_i32_1 = arith.constant 0 : i32
    %c0_i32_2 = arith.constant 0 : i32
    return %c0_i32, %c0_i32_0, %c0_i32_1 : i32, i32, i32
  }
  func.func @transform_9(%arg0: i32) -> (i32, i32) {
    %c0_i32 = arith.constant 0 : i32
    %c0_i32_0 = arith.constant 0 : i32
    %c0_i32_1 = arith.constant 0 : i32
    return %c0_i32, %c0_i32_0 : i32, i32
  }
  func.func @transform_10(%arg0: i32) -> (i32, i32) {
    %c0_i32 = arith.constant 0 : i32
    %c0_i32_0 = arith.constant 0 : i32
    %c0_i32_1 = arith.constant 0 : i32
    return %c0_i32, %c0_i32_0 : i32, i32
  }
  func.func @transform_11(%arg0: i32) -> (i32, i32, i32) {
    %c0_i32 = arith.constant 0 : i32
    %c0_i32_0 = arith.constant 0 : i32
    %c0_i32_1 = arith.constant 0 : i32
    %c0_i32_2 = arith.constant 0 : i32
    return %c0_i32, %c0_i32_0, %c0_i32_1 : i32, i32, i32
  }
  func.func @transform_12(%arg0: i32) -> (i32, i32) {
    %c0_i32 = arith.constant 0 : i32
    %c0_i32_0 = arith.constant 0 : i32
    %c0_i32_1 = arith.constant 0 : i32
    return %c0_i32, %c0_i32_0 : i32, i32
  }
  func.func @transform_13(%arg0: i32) -> (i32, i32) {
    %c0_i32 = arith.constant 0 : i32
    %c0_i32_0 = arith.constant 0 : i32
    %c0_i32_1 = arith.constant 0 : i32
    return %c0_i32, %c0_i32_0 : i32, i32
  }
  func.func @transform_14(%arg0: i32) -> (i32, i32, i32) {
    %c0_i32 = arith.constant 0 : i32
    %c0_i32_0 = arith.constant 0 : i32
    %c0_i32_1 = arith.constant 0 : i32
    return %arg0, %c0_i32, %c0_i32_0 : i32, i32, i32
  }
}

</mosaic_0001>

<llo_original>
// kernel: pconv_att_forward.1
$region0: #{pconv_att_forward.1}
  #allocation0 [shape = 'u32[]', space=smem, size = 0x4, offset = 0x4, fixed_abs, tag = 'smem constant byte address 0x4 - core index']
  #allocation1 [shape = 'u32[144,128]{1,0:T(1,128)}', space=vmem, size = 0x12000, scoped, tag = 'internal scratch']
  #allocation2 [shape = 'f32[4,512]{1,0:T(4,128)}', space=vmem, size = 0x2000, scoped, tag = 'scratch operand']
  #allocation3 [shape = 'f32[32,369]{1,0:T(8,128)}', space=vmem, size = 0xc000, scoped, tag = 'scratch operand']
  %s0 = inlined_call_operand.vmem [shape: f32[2,4,256], index: 0, kind: input, shape index: {}]
  %s1 = inlined_call_operand.vmem [shape: f32[24,4], index: 1, kind: input, shape index: {}]
  %s2 = inlined_call_operand.vmem [shape: f32[24,1], index: 2, kind: input, shape index: {}]
  %s3 = inlined_call_operand.vmem [shape: f32[4,4], index: 3, kind: input, shape index: {}]
  %s4 = inlined_call_operand.vmem [shape: f32[4,1], index: 4, kind: input, shape index: {}]
  %s5 = inlined_call_operand.vmem [shape: f32[3,8,4], index: 5, kind: input, shape index: {}]
  %s6 = inlined_call_operand.vmem [shape: f32[8,1], index: 6, kind: input, shape index: {}]
  %s7 = inlined_call_operand.vmem [shape: f32[8,1], index: 7, kind: input, shape index: {}]
  %s8 = inlined_call_operand.vmem [shape: f32[3,8,4], index: 8, kind: input, shape index: {}]
  %s9 = inlined_call_operand.vmem [shape: f32[8,1], index: 9, kind: input, shape index: {}]
  %s10 = inlined_call_operand.vmem [shape: f32[8,1], index: 10, kind: input, shape index: {}]
  %s11 = inlined_call_operand.vmem [shape: f32[4,8,32], index: 11, kind: input, shape index: {}]
  %s12 = inlined_call_operand.vmem [shape: f32[8,1], index: 12, kind: input, shape index: {}]
  %s13 = inlined_call_operand.vmem [shape: f32[8,1], index: 13, kind: input, shape index: {}]
  %s14 = inlined_call_operand.vmem [shape: f32[2,8,256], index: 14, kind: output, shape index: {}]
  %s15 = sld [smem:[#allocation0]]
  $region89: #{pconv_att_forward.1} parent=0
    _
  %s17 = ssub.s32 1, %s15
  %s18 = scalar_select 0, %s17, %s15
  loop: start=0, step=1, limit=4
  $region2: #{pconv_att_forward.1} parent=0 // loop_pre_header
    _
  $region3: #{pconv_att_forward.1} parent=0 // loop_header
    %s20 = sphi 0, %s24
    %p21 = scmp.ge.s32.totalorder %s20, 4
    %s30 = sphi 0, %s32
    %s33 = sphi 0, %s30
    %s34 = sphi 0, %s33
    %s50 = sphi 0, %s34
    %s54 = sphi 0, %s54
    %s56 = sphi 0, %s54
    %s57 = sphi 0, %s56
    %s71 = sphi 0, %s57
    %s75 = sphi 0, %s75
    %s77 = sphi 0, %s75
    %s78 = sphi 0, %s77
    %s92 = sphi 0, %s78
    %s96 = sphi 0, %s96
    %s98 = sphi 0, %s96
    %s99 = sphi 0, %s98
    %s113 = sphi 0, %s99
    %s117 = sphi 0, %s117
    %s119 = sphi 0, %s117
    %s120 = sphi 0, %s119
    %s134 = sphi 0, %s120
    %s138 = sphi 0, %s138
    %s140 = sphi 0, %s138
    %s141 = sphi 0, %s140
    %s155 = sphi 0, %s141
    %s159 = sphi 0, %s159
    %s161 = sphi 0, %s159
    %s162 = sphi 0, %s161
    %s176 = sphi 0, %s162
    %s180 = sphi 0, %s180
    %s182 = sphi 0, %s180
    %s183 = sphi 0, %s182
    %s197 = sphi 0, %s183
    %s201 = sphi 0, %s201
    %s203 = sphi 0, %s201
    %s204 = sphi 0, %s203
    %s218 = sphi 0, %s204
    %s222 = sphi 0, %s222
    %s224 = sphi 0, %s222
    %s225 = sphi 0, %s224
    %s239 = sphi 0, %s225
    %s243 = sphi 0, %s243
    %s245 = sphi 0, %s243
    %s246 = sphi 0, %s245
    %s260 = sphi 0, %s246
    %s264 = sphi 0, %s264
    %s266 = sphi 0, %s264
    %s267 = sphi 0, %s266
    %s281 = sphi 0, %s267
    %s285 = sphi 0, %s285
    %s287 = sphi 0, %s285
    %s288 = sphi 0, %s287
    %s302 = sphi 0, %s288
    %s306 = sphi 0, %s306
    %s308 = sphi 0, %s306
    %s309 = sphi 0, %s308
    %s323 = sphi 0, %s309
    %s329 = sphi 0, %s331
    %s332 = sphi 0, %s329
    %s333 = sphi 0, %s332
    %s349 = sphi 0, %s333
  $region4: #{pconv_att_forward.1} parent=0 // loop_header_branch
    %23 = sbr.rel (%p21) target = $region8
  $region5: #{pconv_att_forward.1} parent=0 // loop_body
    %s25 = ssub.s32 %s20, 1
    %s26 = ssub.s32 %s20, 2
    %s27 = sadd.s32 %s20, 1
    %s28 = ssub.s32 %s20, %s27
    %p29 = scmp.eq.s32.totalorder %s28, 0
    %s31 = sadd.s32 %s30, 1
    %s32 = scalar_select %p29, %s30, %s31
    %p35 = pneg %p29
    %p36 = scmp.eq.s32.totalorder %s20, 1
    %p37 = por %p35, %p36
    %p38 = scmp.ne.s32.totalorder %s30, %s33
    %p39 = scmp.eq.s32.totalorder %s20, 0
    %p40 = por %p38, %p39
    %p41 = scmp.ne.s32.totalorder %s30, %s33
    %p42 = scmp.eq.s32.totalorder %s25, 1
    %p43 = por %p41, %p42
    %p44 = scmp.ne.s32.totalorder %s33, %s34
    %p45 = scmp.eq.s32.totalorder %s25, 0
    %p46 = por %p44, %p45
    %p47 = scmp.ne.s32.totalorder %s33, %s34
    %p48 = scmp.eq.s32.totalorder %s26, 1
    %p49 = por %p47, %p48
    %p51 = scmp.ne.s32.totalorder %s34, %s50
    %p52 = scmp.eq.s32.totalorder %s26, 0
    %p53 = por %p51, %p52
    %s55 = sadd.s32 %s54, 1
    %p58 = scmp.eq.s32.totalorder %s20, 1
    %p59 = scmp.ne.s32.totalorder %s54, %s56
    %p60 = scmp.eq.s32.totalorder %s20, 0
    %p61 = por %p59, %p60
    %p62 = scmp.ne.s32.totalorder %s54, %s56
    %p63 = scmp.eq.s32.totalorder %s25, 1
    %p64 = por %p62, %p63
    %p65 = scmp.ne.s32.totalorder %s56, %s57
    %p66 = scmp.eq.s32.totalorder %s25, 0
    %p67 = por %p65, %p66
    %p68 = scmp.ne.s32.totalorder %s56, %s57
    %p69 = scmp.eq.s32.totalorder %s26, 1
    %p70 = por %p68, %p69
    %p72 = scmp.ne.s32.totalorder %s57, %s71
    %p73 = scmp.eq.s32.totalorder %s26, 0
    %p74 = por %p72, %p73
    %s76 = sadd.s32 %s75, 1
    %p79 = scmp.eq.s32.totalorder %s20, 1
    %p80 = scmp.ne.s32.totalorder %s75, %s77
    %p81 = scmp.eq.s32.totalorder %s20, 0
    %p82 = por %p80, %p81
    %p83 = scmp.ne.s32.totalorder %s75, %s77
    %p84 = scmp.eq.s32.totalorder %s25, 1
    %p85 = por %p83, %p84
    %p86 = scmp.ne.s32.totalorder %s77, %s78
    %p87 = scmp.eq.s32.totalorder %s25, 0
    %p88 = por %p86, %p87
    %p89 = scmp.ne.s32.totalorder %s77, %s78
    %p90 = scmp.eq.s32.totalorder %s26, 1
    %p91 = por %p89, %p90
    %p93 = scmp.ne.s32.totalorder %s78, %s92
    %p94 = scmp.eq.s32.totalorder %s26, 0
    %p95 = por %p93, %p94
    %s97 = sadd.s32 %s96, 1
    %p100 = scmp.eq.s32.totalorder %s20, 1
    %p101 = scmp.ne.s32.totalorder %s96, %s98
    %p102 = scmp.eq.s32.totalorder %s20, 0
    %p103 = por %p101, %p102
    %p104 = scmp.ne.s32.totalorder %s96, %s98
    %p105 = scmp.eq.s32.totalorder %s25, 1
    %p106 = por %p104, %p105
    %p107 = scmp.ne.s32.totalorder %s98, %s99
    %p108 = scmp.eq.s32.totalorder %s25, 0
    %p109 = por %p107, %p108
    %p110 = scmp.ne.s32.totalorder %s98, %s99
    %p111 = scmp.eq.s32.totalorder %s26, 1
    %p112 = por %p110, %p111
    %p114 = scmp.ne.s32.totalorder %s99, %s113
    %p115 = scmp.eq.s32.totalorder %s26, 0
    %p116 = por %p114, %p115
    %s118 = sadd.s32 %s117, 1
    %p121 = scmp.eq.s32.totalorder %s20, 1
    %p122 = scmp.ne.s32.totalorder %s117, %s119
    %p123 = scmp.eq.s32.totalorder %s20, 0
    %p124 = por %p122, %p123
    %p125 = scmp.ne.s32.totalorder %s117, %s119
    %p126 = scmp.eq.s32.totalorder %s25, 1
    %p127 = por %p125, %p126
    %p128 = scmp.ne.s32.totalorder %s119, %s120
    %p129 = scmp.eq.s32.totalorder %s25, 0
    %p130 = por %p128, %p129
    %p131 = scmp.ne.s32.totalorder %s119, %s120
    %p132 = scmp.eq.s32.totalorder %s26, 1
    %p133 = por %p131, %p132
    %p135 = scmp.ne.s32.totalorder %s120, %s134
    %p136 = scmp.eq.s32.totalorder %s26, 0
    %p137 = por %p135, %p136
    %s139 = sadd.s32 %s138, 1
    %p142 = scmp.eq.s32.totalorder %s20, 1
    %p143 = scmp.ne.s32.totalorder %s138, %s140
    %p144 = scmp.eq.s32.totalorder %s20, 0
    %p145 = por %p143, %p144
    %p146 = scmp.ne.s32.totalorder %s138, %s140
    %p147 = scmp.eq.s32.totalorder %s25, 1
    %p148 = por %p146, %p147
    %p149 = scmp.ne.s32.totalorder %s140, %s141
    %p150 = scmp.eq.s32.totalorder %s25, 0
    %p151 = por %p149, %p150
    %p152 = scmp.ne.s32.totalorder %s140, %s141
    %p153 = scmp.eq.s32.totalorder %s26, 1
    %p154 = por %p152, %p153
    %p156 = scmp.ne.s32.totalorder %s141, %s155
    %p157 = scmp.eq.s32.totalorder %s26, 0
    %p158 = por %p156, %p157
    %s160 = sadd.s32 %s159, 1
    %p163 = scmp.eq.s32.totalorder %s20, 1
    %p164 = scmp.ne.s32.totalorder %s159, %s161
    %p165 = scmp.eq.s32.totalorder %s20, 0
    %p166 = por %p164, %p165
    %p167 = scmp.ne.s32.totalorder %s159, %s161
    %p168 = scmp.eq.s32.totalorder %s25, 1
    %p169 = por %p167, %p168
    %p170 = scmp.ne.s32.totalorder %s161, %s162
    %p171 = scmp.eq.s32.totalorder %s25, 0
    %p172 = por %p170, %p171
    %p173 = scmp.ne.s32.totalorder %s161, %s162
    %p174 = scmp.eq.s32.totalorder %s26, 1
    %p175 = por %p173, %p174
    %p177 = scmp.ne.s32.totalorder %s162, %s176
    %p178 = scmp.eq.s32.totalorder %s26, 0
    %p179 = por %p177, %p178
    %s181 = sadd.s32 %s180, 1
    %p184 = scmp.eq.s32.totalorder %s20, 1
    %p185 = scmp.ne.s32.totalorder %s180, %s182
    %p186 = scmp.eq.s32.totalorder %s20, 0
    %p187 = por %p185, %p186
    %p188 = scmp.ne.s32.totalorder %s180, %s182
    %p189 = scmp.eq.s32.totalorder %s25, 1
    %p190 = por %p188, %p189
    %p191 = scmp.ne.s32.totalorder %s182, %s183
    %p192 = scmp.eq.s32.totalorder %s25, 0
    %p193 = por %p191, %p192
    %p194 = scmp.ne.s32.totalorder %s182, %s183
    %p195 = scmp.eq.s32.totalorder %s26, 1
    %p196 = por %p194, %p195
    %p198 = scmp.ne.s32.totalorder %s183, %s197
    %p199 = scmp.eq.s32.totalorder %s26, 0
    %p200 = por %p198, %p199
    %s202 = sadd.s32 %s201, 1
    %p205 = scmp.eq.s32.totalorder %s20, 1
    %p206 = scmp.ne.s32.totalorder %s201, %s203
    %p207 = scmp.eq.s32.totalorder %s20, 0
    %p208 = por %p206, %p207
    %p209 = scmp.ne.s32.totalorder %s201, %s203
    %p210 = scmp.eq.s32.totalorder %s25, 1
    %p211 = por %p209, %p210
    %p212 = scmp.ne.s32.totalorder %s203, %s204
    %p213 = scmp.eq.s32.totalorder %s25, 0
    %p214 = por %p212, %p213
    %p215 = scmp.ne.s32.totalorder %s203, %s204
    %p216 = scmp.eq.s32.totalorder %s26, 1
    %p217 = por %p215, %p216
    %p219 = scmp.ne.s32.totalorder %s204, %s218
    %p220 = scmp.eq.s32.totalorder %s26, 0
    %p221 = por %p219, %p220
    %s223 = sadd.s32 %s222, 1
    %p226 = scmp.eq.s32.totalorder %s20, 1
    %p227 = scmp.ne.s32.totalorder %s222, %s224
    %p228 = scmp.eq.s32.totalorder %s20, 0
    %p229 = por %p227, %p228
    %p230 = scmp.ne.s32.totalorder %s222, %s224
    %p231 = scmp.eq.s32.totalorder %s25, 1
    %p232 = por %p230, %p231
    %p233 = scmp.ne.s32.totalorder %s224, %s225
    %p234 = scmp.eq.s32.totalorder %s25, 0
    %p235 = por %p233, %p234
    %p236 = scmp.ne.s32.totalorder %s224, %s225
    %p237 = scmp.eq.s32.totalorder %s26, 1
    %p238 = por %p236, %p237
    %p240 = scmp.ne.s32.totalorder %s225, %s239
    %p241 = scmp.eq.s32.totalorder %s26, 0
    %p242 = por %p240, %p241
    %s244 = sadd.s32 %s243, 1
    %p247 = scmp.eq.s32.totalorder %s20, 1
    %p248 = scmp.ne.s32.totalorder %s243, %s245
    %p249 = scmp.eq.s32.totalorder %s20, 0
    %p250 = por %p248, %p249
    %p251 = scmp.ne.s32.totalorder %s243, %s245
    %p252 = scmp.eq.s32.totalorder %s25, 1
    %p253 = por %p251, %p252
    %p254 = scmp.ne.s32.totalorder %s245, %s246
    %p255 = scmp.eq.s32.totalorder %s25, 0
    %p256 = por %p254, %p255
    %p257 = scmp.ne.s32.totalorder %s245, %s246
    %p258 = scmp.eq.s32.totalorder %s26, 1
    %p259 = por %p257, %p258
    %p261 = scmp.ne.s32.totalorder %s246, %s260
    %p262 = scmp.eq.s32.totalorder %s26, 0
    %p263 = por %p261, %p262
    %s265 = sadd.s32 %s264, 1
    %p268 = scmp.eq.s32.totalorder %s20, 1
    %p269 = scmp.ne.s32.totalorder %s264, %s266
    %p270 = scmp.eq.s32.totalorder %s20, 0
    %p271 = por %p269, %p270
    %p272 = scmp.ne.s32.totalorder %s264, %s266
    %p273 = scmp.eq.s32.totalorder %s25, 1
    %p274 = por %p272, %p273
    %p275 = scmp.ne.s32.totalorder %s266, %s267
    %p276 = scmp.eq.s32.totalorder %s25, 0
    %p277 = por %p275, %p276
    %p278 = scmp.ne.s32.totalorder %s266, %s267
    %p279 = scmp.eq.s32.totalorder %s26, 1
    %p280 = por %p278, %p279
    %p282 = scmp.ne.s32.totalorder %s267, %s281
    %p283 = scmp.eq.s32.totalorder %s26, 0
    %p284 = por %p282, %p283
    %s286 = sadd.s32 %s285, 1
    %p289 = scmp.eq.s32.totalorder %s20, 1
    %p290 = scmp.ne.s32.totalorder %s285, %s287
    %p291 = scmp.eq.s32.totalorder %s20, 0
    %p292 = por %p290, %p291
    %p293 = scmp.ne.s32.totalorder %s285, %s287
    %p294 = scmp.eq.s32.totalorder %s25, 1
    %p295 = por %p293, %p294
    %p296 = scmp.ne.s32.totalorder %s287, %s288
    %p297 = scmp.eq.s32.totalorder %s25, 0
    %p298 = por %p296, %p297
    %p299 = scmp.ne.s32.totalorder %s287, %s288
    %p300 = scmp.eq.s32.totalorder %s26, 1
    %p301 = por %p299, %p300
    %p303 = scmp.ne.s32.totalorder %s288, %s302
    %p304 = scmp.eq.s32.totalorder %s26, 0
    %p305 = por %p303, %p304
    %s307 = sadd.s32 %s306, 1
    %p310 = scmp.eq.s32.totalorder %s20, 1
    %p311 = scmp.ne.s32.totalorder %s306, %s308
    %p312 = scmp.eq.s32.totalorder %s20, 0
    %p313 = por %p311, %p312
    %p314 = scmp.ne.s32.totalorder %s306, %s308
    %p315 = scmp.eq.s32.totalorder %s25, 1
    %p316 = por %p314, %p315
    %p317 = scmp.ne.s32.totalorder %s308, %s309
    %p318 = scmp.eq.s32.totalorder %s25, 0
    %p319 = por %p317, %p318
    %p320 = scmp.ne.s32.totalorder %s308, %s309
    %p321 = scmp.eq.s32.totalorder %s26, 1
    %p322 = por %p320, %p321
    %p324 = scmp.ne.s32.totalorder %s309, %s323
    %p325 = scmp.eq.s32.totalorder %s26, 0
    %p326 = por %p324, %p325
    %s327 = ssub.s32 %s20, %s27
    %p328 = scmp.eq.s32.totalorder %s327, 0
    %s330 = sadd.s32 %s329, 1
    %s331 = scalar_select %p328, %s329, %s330
    %p334 = pneg %p328
    %p335 = scmp.eq.s32.totalorder %s20, 1
    %p336 = por %p334, %p335
    %p337 = scmp.ne.s32.totalorder %s329, %s332
    %p338 = scmp.eq.s32.totalorder %s20, 0
    %p339 = por %p337, %p338
    %p340 = scmp.ne.s32.totalorder %s329, %s332
    %p341 = scmp.eq.s32.totalorder %s25, 1
    %p342 = por %p340, %p341
    %p343 = scmp.ne.s32.totalorder %s332, %s333
    %p344 = scmp.eq.s32.totalorder %s25, 0
    %p345 = por %p343, %p344
    %p346 = scmp.ne.s32.totalorder %s332, %s333
    %p347 = scmp.eq.s32.totalorder %s26, 1
    %p348 = por %p346, %p347
    %p350 = scmp.ne.s32.totalorder %s333, %s349
    %p351 = scmp.eq.s32.totalorder %s26, 0
    %p352 = por %p350, %p351
    %p353 = scmp.le.s32.totalorder 1, %s20
    %p354 = scmp.lt.s32.totalorder %s20, 3
    %p355 = pnand %p353, %p354
    %p356 = pneg %p355
    // Predicated region
    $region9: #{pconv_att_forward.1} parent=5 // pred_check
      _
    $region10: #{pconv_att_forward.1} parent=5 // pred_check_branch
      %358 = sbr.rel (%p355) target = $region12
    $region11: #{pconv_att_forward.1} parent=5 // pred_region
      %s359 = ssub.s32 %s20, 1
      // Predicated region
      $region13: #{pconv_att_forward.1} parent=11 // pred_check
        %p360 = pneg %p67
      $region14: #{pconv_att_forward.1} parent=11 // pred_check_branch
        %362 = sbr.rel (%p360) target = $region16
      $region15: #{pconv_att_forward.1} parent=11 // pred_region
        _
      $region16: #{pconv_att_forward.1} parent=11 // pred_fallthru
        _
      // Predicated region
      $region17: #{pconv_att_forward.1} parent=11 // pred_check
        %p363 = pneg %p88
      $region18: #{pconv_att_forward.1} parent=11 // pred_check_branch
        %365 = sbr.rel (%p363) target = $region20
      $region19: #{pconv_att_forward.1} parent=11 // pred_region
        _
      $region20: #{pconv_att_forward.1} parent=11 // pred_fallthru
        _
      // Predicated region
      $region21: #{pconv_att_forward.1} parent=11 // pred_check
        %p366 = pneg %p109
      $region22: #{pconv_att_forward.1} parent=11 // pred_check_branch
        %368 = sbr.rel (%p366) target = $region24
      $region23: #{pconv_att_forward.1} parent=11 // pred_region
        _
      $region24: #{pconv_att_forward.1} parent=11 // pred_fallthru
        _
      // Predicated region
      $region25: #{pconv_att_forward.1} parent=11 // pred_check
        %p369 = pneg %p130
      $region26: #{pconv_att_forward.1} parent=11 // pred_check_branch
        %371 = sbr.rel (%p369) target = $region28
      $region27: #{pconv_att_forward.1} parent=11 // pred_region
        _
      $region28: #{pconv_att_forward.1} parent=11 // pred_fallthru
        _
      // Predicated region
      $region29: #{pconv_att_forward.1} parent=11 // pred_check
        %p372 = pneg %p151
      $region30: #{pconv_att_forward.1} parent=11 // pred_check_branch
        %374 = sbr.rel (%p372) target = $region32
      $region31: #{pconv_att_forward.1} parent=11 // pred_region
        _
      $region32: #{pconv_att_forward.1} parent=11 // pred_fallthru
        _
      // Predicated region
      $region33: #{pconv_att_forward.1} parent=11 // pred_check
        %p375 = pneg %p172
      $region34: #{pconv_att_forward.1} parent=11 // pred_check_branch
        %377 = sbr.rel (%p375) target = $region36
      $region35: #{pconv_att_forward.1} parent=11 // pred_region
        _
      $region36: #{pconv_att_forward.1} parent=11 // pred_fallthru
        _
      // Predicated region
      $region37: #{pconv_att_forward.1} parent=11 // pred_check
        %p378 = pneg %p193
      $region38: #{pconv_att_forward.1} parent=11 // pred_check_branch
        %380 = sbr.rel (%p378) target = $region40
      $region39: #{pconv_att_forward.1} parent=11 // pred_region
        _
      $region40: #{pconv_att_forward.1} parent=11 // pred_fallthru
        _
      // Predicated region
      $region41: #{pconv_att_forward.1} parent=11 // pred_check
        %p381 = pneg %p214
      $region42: #{pconv_att_forward.1} parent=11 // pred_check_branch
        %383 = sbr.rel (%p381) target = $region44
      $region43: #{pconv_att_forward.1} parent=11 // pred_region
        _
      $region44: #{pconv_att_forward.1} parent=11 // pred_fallthru
        _
      // Predicated region
      $region45: #{pconv_att_forward.1} parent=11 // pred_check
        %p384 = pneg %p235
      $region46: #{pconv_att_forward.1} parent=11 // pred_check_branch
        %386 = sbr.rel (%p384) target = $region48
      $region47: #{pconv_att_forward.1} parent=11 // pred_region
        _
      $region48: #{pconv_att_forward.1} parent=11 // pred_fallthru
        _
      // Predicated region
      $region49: #{pconv_att_forward.1} parent=11 // pred_check
        %p387 = pneg %p256
      $region50: #{pconv_att_forward.1} parent=11 // pred_check_branch
        %389 = sbr.rel (%p387) target = $region52
      $region51: #{pconv_att_forward.1} parent=11 // pred_region
        _
      $region52: #{pconv_att_forward.1} parent=11 // pred_fallthru
        _
      // Predicated region
      $region53: #{pconv_att_forward.1} parent=11 // pred_check
        %p390 = pneg %p277
      $region54: #{pconv_att_forward.1} parent=11 // pred_check_branch
        %392 = sbr.rel (%p390) target = $region56
      $region55: #{pconv_att_forward.1} parent=11 // pred_region
        _
      $region56: #{pconv_att_forward.1} parent=11 // pred_fallthru
        _
      // Predicated region
      $region57: #{pconv_att_forward.1} parent=11 // pred_check
        %p393 = pneg %p298
      $region58: #{pconv_att_forward.1} parent=11 // pred_check_branch
        %395 = sbr.rel (%p393) target = $region60
      $region59: #{pconv_att_forward.1} parent=11 // pred_region
        _
      $region60: #{pconv_att_forward.1} parent=11 // pred_fallthru
        _
      // Predicated region
      $region61: #{pconv_att_forward.1} parent=11 // pred_check
        %p396 = pneg %p319
      $region62: #{pconv_att_forward.1} parent=11 // pred_check_branch
        %398 = sbr.rel (%p396) target = $region64
      $region63: #{pconv_att_forward.1} parent=11 // pred_region
        _
      $region64: #{pconv_att_forward.1} parent=11 // pred_fallthru
        _
    $region12: #{pconv_att_forward.1} parent=5 // pred_fallthru
      _
    %p399 = scmp.lt.s32.totalorder %s20, 2
    // Predicated region
    $region65: #{pconv_att_forward.1} parent=5 // pred_check
      %p400 = pneg %p399
    $region66: #{pconv_att_forward.1} parent=5 // pred_check_branch
      %402 = sbr.rel (%p400) target = $region68
    $region67: #{pconv_att_forward.1} parent=5 // pred_region
      // Predicated region
      $region69: #{pconv_att_forward.1} parent=67 // pred_check
        %p403 = pneg %p40
      $region70: #{pconv_att_forward.1} parent=67 // pred_check_branch
        %405 = sbr.rel (%p403) target = $region72
      $region71: #{pconv_att_forward.1} parent=67 // pred_region
        %p406 = scmp.lt.s32.totalorder %s20, 1
        %s407 = scalar_select %p406, %s20, 1
        %s408 = smul.addr %s407, 2
        %s409 = smul.addr %s408, 4
        %s410 = scalar_lea.vmem %s0, %s409
      $region72: #{pconv_att_forward.1} parent=67 // pred_fallthru
        _
    $region68: #{pconv_att_forward.1} parent=5 // pred_fallthru
      _
    %p411 = scmp.le.s32.totalorder 1, %s20
    %p412 = scmp.lt.s32.totalorder %s20, 3
    %p413 = pnand %p411, %p412
    %p414 = pneg %p413
    // Predicated region
    $region73: #{pconv_att_forward.1} parent=5 // pred_check
      _
    $region74: #{pconv_att_forward.1} parent=5 // pred_check_branch
      %416 = sbr.rel (%p413) target = $region76
    $region75: #{pconv_att_forward.1} parent=5 // pred_region
      %s417 = ssub.s32 %s20, 1
      %p418 = scmp.lt.s32.totalorder %s25, 1
      %s419 = scalar_select %p418, %s25, 1
      %s420 = smul.addr %s419, 2
      %s421 = smul.addr %s420, 4
      %s422 = scalar_lea.vmem %s0, %s421
      %p423 = pneg %p46
      %p424 = pneg %p43
      %p425 = pneg %p67
      %p426 = pneg %p64
      %p427 = pneg %p88
      %p428 = pneg %p85
      %p429 = pneg %p109
      %p430 = pneg %p106
      %p431 = pneg %p130
      %p432 = pneg %p127
      %p433 = pneg %p151
      %p434 = pneg %p148
      %p435 = pneg %p172
      %p436 = pneg %p169
      %p437 = pneg %p193
      %p438 = pneg %p190
      %p439 = pneg %p214
      %p440 = pneg %p211
      %p441 = pneg %p235
      %p442 = pneg %p232
      %p443 = pneg %p256
      %p444 = pneg %p253
      %p445 = pneg %p277
      %p446 = pneg %p274
      %p447 = pneg %p298
      %p448 = pneg %p295
      %p449 = pneg %p319
      %p450 = pneg %p316
      %p451 = pneg %p345
      %p452 = pneg %p342
      %p453 = scmp.lt.s32.totalorder %s25, 1
      %s454 = scalar_select %p453, %s25, 1
      %s455 = smul.addr %s454, 2
      %s456 = smul.addr %s455, 8
      %s457 = scalar_lea.vmem %s14, %s456
      %p458 = scmp.lt.s32.totalorder %s25, 1
      %s459 = scalar_select %p458, %s25, 1
      %s460 = smul.addr %s459, 2
      %s461 = smul.addr %s460, 4
      %s462 = scalar_lea.vmem %s0, %s461
      %p463 = scmp.lt.s32.totalorder %s25, 1
      %s464 = scalar_select %p463, %s25, 1
      %s465 = smul.addr %s464, 2
      %s466 = smul.addr %s465, 8
      %s467 = scalar_lea.vmem %s14, %s466
      %v468 = vld [vmem:[%s462] sm:$0xff]
      %v469 = vld [vmem:[%s1] sm:$0xff]
      %v470 = vld [vmem:[%s1 + $0x8] sm:$0xff]
      %v471 = vld [vmem:[%s1 + $0x10] sm:$0xff]
      %v472 = vld [vmem:[%s2] sm:$0xff]
      %v473 = vld [vmem:[%s2 + $0x8] sm:$0xff]
      %v474 = vld [vmem:[%s2 + $0x10] sm:$0xff]
      %476 = vset.pattern.permute.xlu0 0
      %477 = vperm.xlu0 %476, %v472
      %v478 = vpop.permute.xlu0 %477
      %481 = vset.pattern.permute.xlu0 0
      %482 = vperm.xlu0 %481, %v473
      %v483 = vpop.permute.xlu0 %482
      %486 = vset.pattern.permute.xlu0 0
      %487 = vperm.xlu0 %486, %v474
      %v488 = vpop.permute.xlu0 %487
      %v491 = vcombine.high %v468, %v468
      %vm492 = vcmask 31744
      %v494 = vsel %vm492, %v469, 0
      %v497 = vsel %vm492, %v470, 0
      %v500 = vsel %vm492, %v471, 0
      %vm502 = vcmask 1043456
      %v503 = vsel %vm502, %v468, 0
      %v505 = vsel %vm502, %v491, 0
      %507 = vmatprep.subr.mxu0 %v505
      %508 = vmatpush1.msra.mxu0 %v503
      %509 = vmatprep.subr.mxu0 0.0
      %510 = vmatpush1.msra.mxu0 0.0
      %511 = vmatprep.subr.mxu0 0.0
      %512 = vmatpush1.msra.mxu0 0.0
      %513 = vmatprep.subr.mxu0 0.0
      %514 = vmatpush1.msra.mxu0 0.0
      %515 = vmatprep.subr.mxu0 0.0
      %516 = vmatpush1.msra.mxu0 0.0
      %517 = vmatprep.subr.mxu0 0.0
      %518 = vmatpush1.msra.mxu0 0.0
      %519 = vmatprep.subr.mxu0 0.0
      %520 = vmatpush1.msra.mxu0 0.0
      %521 = vmatprep.subr.mxu0 0.0
      %522 = vmatpush1.msra.mxu0 0.0
      %523 = vmatprep.subr.mxu0 0.0
      %524 = vmatpush1.msra.mxu0 0.0
      %525 = vmatprep.subr.mxu0 0.0
      %526 = vmatpush1.msra.mxu0 0.0
      %527 = vmatprep.subr.mxu0 0.0
      %528 = vmatpush1.msra.mxu0 0.0
      %529 = vmatprep.subr.mxu0 0.0
      %530 = vmatpush1.msra.mxu0 0.0
      %531 = vmatprep.subr.mxu0 0.0
      %532 = vmatpush1.msra.mxu0 0.0
      %533 = vmatprep.subr.mxu0 0.0
      %534 = vmatpush1.msra.mxu0 0.0
      %535 = vmatprep.subr.mxu0 0.0
      %536 = vmatpush1.msra.mxu0 0.0
      %537 = vmatprep.subr.mxu0 0.0
      %538 = vmatpush1.msra.mxu0 0.0
      %539 = vmatprep.subr.mxu0 0.0
      %540 = vmatpush1.msra.mxu0 0.0
      %541 = vmatprep.subr.mxu0 0.0
      %542 = vmatpush1.msra.mxu0 0.0
      %543 = vmatprep.subr.mxu0 0.0
      %544 = vmatpush1.msra.mxu0 0.0
      %545 = vmatprep.subr.mxu0 0.0
      %546 = vmatpush1.msra.mxu0 0.0
      %547 = vmatprep.subr.mxu0 0.0
      %548 = vmatpush1.msra.mxu0 0.0
      %549 = vmatprep.subr.mxu0 0.0
      %550 = vmatpush1.msra.mxu0 0.0
      %551 = vmatprep.subr.mxu0 0.0
      %552 = vmatpush1.msra.mxu0 0.0
      %553 = vmatprep.subr.mxu0 0.0
      %554 = vmatpush1.msra.mxu0 0.0
      %555 = vmatprep.subr.mxu0 0.0
      %556 = vmatpush1.msra.mxu0 0.0
      %557 = vmatprep.subr.mxu0 0.0
      %558 = vmatpush1.msra.mxu0 0.0
      %559 = vmatprep.subr.mxu0 0.0
      %560 = vmatpush1.msra.mxu0 0.0
      %561 = vmatprep.subr.mxu0 0.0
      %562 = vmatpush1.msra.mxu0 0.0
      %563 = vmatprep.subr.mxu0 0.0
      %564 = vmatpush1.msra.mxu0 0.0
      %565 = vmatprep.subr.mxu0 0.0
      %566 = vmatpush1.msra.mxu0 0.0
      %567 = vmatprep.subr.mxu0 0.0
      %568 = vmatpush1.msra.mxu0 0.0
      %569 = vmatprep.subr.mxu0 0.0
      %570 = vmatpush1.msra.mxu0 0.0
      %571 = vmatprep.mubr.f32.mxu0 0.0
      %572 = vmatmul.mubr.f32.gmra.mrb[0].mxu0 %v494
      %v573 = vpop.f32.mrb[0].mxu0
      %v574 = vadd.f32 %v478, %v573
      %v575 = vpop.f32.mrb[0].mxu0
      %v576 = vadd.f32 %v478, %v575
      %577 = vmatprep.mubr.f32.mxu0 0.0
      %578 = vmatmul.mubr.f32.gmra.mrb[0].mxu0 %v497
      %v579 = vpop.f32.mrb[0].mxu0
      %v580 = vadd.f32 %v483, %v579
      %v581 = vpop.f32.mrb[0].mxu0
      %v582 = vadd.f32 %v483, %v581
      %583 = vmatprep.mubr.f32.mxu0 0.0
      %584 = vmatmul.mubr.f32.gmra.mrb[0].mxu0 %v500
      %v585 = vpop.f32.mrb[0].mxu0
      %v586 = vadd.f32 %v488, %v585
      %v587 = vpop.f32.mrb[0].mxu0
      %v588 = vadd.f32 %v488, %v587
      %589 = vdwg.mxu0
      %v590 = vxor.u32 %v574, 2147483648
      %v591 = vxor.u32 %v576, 2147483648
      %v592 = vmul.f32 %v590, 1.442695
      %v593 = vpow.pop %v592
      %v594 = vmul.f32 %v591, 1.442695
      %v595 = vpow.pop %v594
      %v596 = vadd.f32 %v593, 1.0
      %v597 = vadd.f32 %v595, 1.0
      %v598 = vrcp.pop %v596
      %v599 = vmul.f32 1.0, %v598
      %v600 = vrcp.pop %v597
      %v601 = vmul.f32 1.0, %v600
      %vm602 = vcmask 1040384
      %v603 = vsel %vm602, %v580, -inf
      %v604 = vsel %vm602, %v582, -inf
      %v605 = vmax.f32 %v603, %v604
      %606 = vmax.xlane.f32.xlu0 %v605
      %v607 = vpop.xlane.xlu0 %606
      %v608 = vsub.f32 %v580, %v607
      %v609 = vsub.f32 %v582, %v607
      %v610 = vmul.f32 %v608, 1.442695
      %v611 = vpow.pop %v610
      %v612 = vmul.f32 %v609, 1.442695
      %v613 = vpow.pop %v612
      %v614 = vsel %vm602, %v611, 0.0
      %v615 = vsel %vm602, %v613, 0.0
      %v616 = vadd.f32 %v614, %v615
      %617 = vadd.xlane.f32.xlu0 %v616
      %v618 = vpop.xlane.xlu0 %617
      %v619 = vrcp.pop %v618
      %v620 = vmul.f32 %v611, %v619
      %v621 = vmul.f32 %v613, %v619
      %v622 = vlaneseq
      %v623 = vshrl.u32 %v622, 7
      %v624 = vsub.s32 0, %v623
      %v625 = vrot.slane %v620, %v624
      %v626 = vlaneseq
      %v627 = vshrl.u32 %v626, 7
      %v628 = vsub.s32 0, %v627
      %v629 = vrot.slane %v621, %v628
      %v630 = vmul.f32 %v586, %v625
      %v631 = vmul.f32 %v588, %v629
      %v632 = vsel %vm502, %v630, 0.0
      %v633 = vsel %vm502, %v631, 0.0
      %v634 = vadd.f32 %v632, %v633
      %635 = vadd.xlane.f32.xlu0 %v634
      %v636 = vpop.xlane.xlu0 %635
      %v637 = vld [vmem:[%s3] sm:$0xf]
      %v638 = vld [vmem:[%s4] sm:$0xf]
      %v640 = vsel %vm492, %v637, 0
      %v643 = vsel %vm502, %v636, 0
      %645 = vmatprep.subr.mxu0 0.0
      %646 = vmatpush1.msra.mxu0 %v643
      %647 = vmatprep.subr.mxu0 0.0
      %648 = vmatpush1.msra.mxu0 0.0
      %649 = vmatprep.subr.mxu0 0.0
      %650 = vmatpush1.msra.mxu0 0.0
      %651 = vmatprep.subr.mxu0 0.0
      %652 = vmatpush1.msra.mxu0 0.0
      %653 = vmatprep.subr.mxu0 0.0
      %654 = vmatpush1.msra.mxu0 0.0
      %655 = vmatprep.subr.mxu0 0.0
      %656 = vmatpush1.msra.mxu0 0.0
      %657 = vmatprep.subr.mxu0 0.0
      %658 = vmatpush1.msra.mxu0 0.0
      %659 = vmatprep.subr.mxu0 0.0
      %660 = vmatpush1.msra.mxu0 0.0
      %661 = vmatprep.subr.mxu0 0.0
      %662 = vmatpush1.msra.mxu0 0.0
      %663 = vmatprep.subr.mxu0 0.0
      %664 = vmatpush1.msra.mxu0 0.0
      %665 = vmatprep.subr.mxu0 0.0
      %666 = vmatpush1.msra.mxu0 0.0
      %667 = vmatprep.subr.mxu0 0.0
      %668 = vmatpush1.msra.mxu0 0.0
      %669 = vmatprep.subr.mxu0 0.0
      %670 = vmatpush1.msra.mxu0 0.0
      %671 = vmatprep.subr.mxu0 0.0
      %672 = vmatpush1.msra.mxu0 0.0
      %673 = vmatprep.subr.mxu0 0.0
      %674 = vmatpush1.msra.mxu0 0.0
      %675 = vmatprep.subr.mxu0 0.0
      %676 = vmatpush1.msra.mxu0 0.0
      %677 = vmatprep.subr.mxu0 0.0
      %678 = vmatpush1.msra.mxu0 0.0
      %679 = vmatprep.subr.mxu0 0.0
      %680 = vmatpush1.msra.mxu0 0.0
      %681 = vmatprep.subr.mxu0 0.0
      %682 = vmatpush1.msra.mxu0 0.0
      %683 = vmatprep.subr.mxu0 0.0
      %684 = vmatpush1.msra.mxu0 0.0
      %685 = vmatprep.subr.mxu0 0.0
      %686 = vmatpush1.msra.mxu0 0.0
      %687 = vmatprep.subr.mxu0 0.0
      %688 = vmatpush1.msra.mxu0 0.0
      %689 = vmatprep.subr.mxu0 0.0
      %690 = vmatpush1.msra.mxu0 0.0
      %691 = vmatprep.subr.mxu0 0.0
      %692 = vmatpush1.msra.mxu0 0.0
      %693 = vmatprep.subr.mxu0 0.0
      %694 = vmatpush1.msra.mxu0 0.0
      %695 = vmatprep.subr.mxu0 0.0
      %696 = vmatpush1.msra.mxu0 0.0
      %697 = vmatprep.subr.mxu0 0.0
      %698 = vmatpush1.msra.mxu0 0.0
      %699 = vmatprep.subr.mxu0 0.0
      %700 = vmatpush1.msra.mxu0 0.0
      %701 = vmatprep.subr.mxu0 0.0
      %702 = vmatpush1.msra.mxu0 0.0
      %703 = vmatprep.subr.mxu0 0.0
      %704 = vmatpush1.msra.mxu0 0.0
      %705 = vmatprep.subr.mxu0 0.0
      %706 = vmatpush1.msra.mxu0 0.0
      %707 = vmatprep.subr.mxu0 0.0
      %708 = vmatpush1.msra.mxu0 0.0
      %709 = vmatprep.mubr.f32.mxu0 0.0
      %710 = vmatmul.mubr.f32.gmra.mrb[0].mxu0 %v640
      %v711 = vpop.f32.mrb[0].mxu0
      %v712 = vadd.f32 %v638, %v711
      %v713 = vpop.f32.mrb[0].mxu0
      %714 = vdwg.mxu0
      %716 = vset.pattern.permute.xlu0 0
      %717 = vperm.xlu0 %716, %v712
      %v718 = vpop.permute.xlu0 %717
      %v720 = vlaneseq
      %v721 = vshrl.u32 %v720, 7
      %v722 = vsub.s32 0, %v721
      %v723 = vrot.slane %v599, %v722
      %v724 = vlaneseq
      %v725 = vshrl.u32 %v724, 7
      %v726 = vsub.s32 0, %v725
      %v727 = vrot.slane %v601, %v726
      %v728 = vmul.f32 %v718, %v723
      %v729 = vmul.f32 %v718, %v727
      %v732 = vcombine.low %v728, %v729
      %v734 = vadd.f32 %v468, %v732
      %735 = vst [vmem:[#allocation2] sm:$0xff] 0.0
      %736 = vst [vmem:[#allocation2 + $0x8] sm:$0xff] 0.0
      %738 = vrot.lane.b32.xlu0 %v734, 69
      %v739 = vpop.permute.xlu0 %738
      %vm741 = vcmask 691752
      %742 = vst.msk [vmem:[#allocation2] sm:$0xf] %vm741, %v739
      %743 = vrot.lane.b32.xlu0 %v734, 75
      %v744 = vpop.permute.xlu0 %743
      %vm746 = vcmask 872152
      %747 = vst.msk [vmem:[#allocation2] sm:$0xf] %vm746, %v744
      %748 = vrot.lane.b32.xlu0 %v734, 81
      %v749 = vpop.permute.xlu0 %748
      %v750 = vrot.slane %v749, 4
      %vm751 = vcmask 662528
      %v752 = vsel %vm751, %v750, %v749
      %vm754 = vcmask 1044360
      %vm755 = vcmask 7172
      %vm756 = vmor %vm755, %vm754
      %757 = vst.msk [vmem:[#allocation2] sm:$0xff] %vm756, %v752
      %758 = vrot.lane.b32.xlu0 %v734, 87
      %v759 = vpop.permute.xlu0 %758
      %vm761 = vcmask 183352
      %762 = vst.msk [vmem:[#allocation2 + $0x4] sm:$0xf] %vm761, %v759
      %763 = vrot.lane.b32.xlu0 %v734, 93
      %v764 = vpop.permute.xlu0 %763
      %vm766 = vcmask 363752
      %767 = vst.msk [vmem:[#allocation2 + $0x4] sm:$0xf] %vm766, %v764
      %768 = vrot.lane.b32.xlu0 %v734, 99
      %v769 = vpop.permute.xlu0 %768
      %vm771 = vcmask 544152
      %772 = vst.msk [vmem:[#allocation2 + $0x4] sm:$0xf] %vm771, %v769
      %773 = vrot.lane.b32.xlu0 %v734, 105
      %v774 = vpop.permute.xlu0 %773
      %vm776 = vcmask 724552
      %777 = vst.msk [vmem:[#allocation2 + $0x4] sm:$0xf] %vm776, %v774
      %778 = vrot.lane.b32.xlu0 %v734, 111
      %v779 = vpop.permute.xlu0 %778
      %vm781 = vcmask 904952
      %782 = vst.msk [vmem:[#allocation2 + $0x4] sm:$0xf] %vm781, %v779
      %783 = vrot.lane.b32.xlu0 %v734, 117
      %v784 = vpop.permute.xlu0 %783
      %v785 = vrot.slane %v784, 4
      %vm786 = vcmask 957440
      %v787 = vsel %vm786, %v784, %v785
      %vm789 = vcmask 1044392
      %vm790 = vcmask 39940
      %vm791 = vmor %vm790, %vm789
      %792 = vst.msk [vmem:[#allocation2 + $0x4] sm:$0xff] %vm791, %v787
      %793 = vrot.lane.b32.xlu0 %v734, 123
      %v794 = vpop.permute.xlu0 %793
      %v795 = vrot.slane %v794, 4
      %vm797 = vcmask 216152
      %798 = vst.msk [vmem:[#allocation2 + $0x8] sm:$0xf] %vm797, %v795
      %799 = vrot.lane.b32.xlu0 %v734, 1
      %v800 = vpop.permute.xlu0 %799
      %v801 = vrot.slane %v800, 4
      %vm802 = vcmask 7168
      %v803 = vsel %vm802, %v800, %v801
      %vm805 = vcmask 396552
      %806 = vst.msk [vmem:[#allocation2 + $0x8] sm:$0xf] %vm805, %v803
      %807 = vrot.lane.b32.xlu0 %v734, 7
      %v808 = vpop.permute.xlu0 %807
      %v809 = vrot.slane %v808, 4
      %vm810 = vcmask 56320
      %v811 = vsel %vm810, %v808, %v809
      %vm813 = vcmask 576952
      %814 = vst.msk [vmem:[#allocation2 + $0x8] sm:$0xf] %vm813, %v811
      %815 = vrot.lane.b32.xlu0 %v734, 13
      %v816 = vpop.permute.xlu0 %815
      %v817 = vrot.slane %v816, 4
      %vm818 = vcmask 105472
      %v819 = vsel %vm818, %v816, %v817
      %vm821 = vcmask 757352
      %822 = vst.msk [vmem:[#allocation2 + $0x8] sm:$0xf] %vm821, %v819
      %823 = vrot.lane.b32.xlu0 %v734, 19
      %v824 = vpop.permute.xlu0 %823
      %v825 = vrot.slane %v824, 4
      %vm826 = vcmask 154624
      %v827 = vsel %vm826, %v824, %v825
      %vm829 = vcmask 937752
      %830 = vst.msk [vmem:[#allocation2 + $0x8] sm:$0xf] %vm829, %v827
      %831 = vrot.lane.b32.xlu0 %v734, 25
      %v832 = vpop.permute.xlu0 %831
      %v833 = vrot.slane %v832, 4
      %vm834 = vcmask 203776
      %v835 = vsel %vm834, %v832, %v833
      %vm837 = vcmask 1044424
      %vm838 = vcmask 72708
      %vm839 = vmor %vm838, %vm837
      %840 = vst.msk [vmem:[#allocation2 + $0x8] sm:$0xff] %vm839, %v835
      %841 = vrot.lane.b32.xlu0 %v734, 31
      %v842 = vpop.permute.xlu0 %841
      %v843 = vrot.slane %v842, 4
      %vm845 = vcmask 248952
      %846 = vst.msk [vmem:[#allocation2 + $0xc] sm:$0xf] %vm845, %v843
      %v847 = vld [vmem:[#allocation2] sm:$0xff]
      %v848 = vld [vmem:[#allocation2 + $0x8] sm:$0xff]
      %v849 = vld [vmem:[%s5] sm:$0xff]
      %s850 = scalar_lea.vmem %s5, 8
      %v851 = vld [vmem:[%s850] sm:$0xff]
      %v854 = vcombine.high %v847, %v847
      %v855 = vcombine.high %v848, %v848
      %856 = vrot.lane.b32.xlu0 %v847, 83
      %v857 = vpop.permute.xlu0 %856
      %858 = vrot.lane.b32.xlu0 %v854, 83
      %v859 = vpop.permute.xlu0 %858
      %860 = vrot.lane.b32.xlu0 %v848, 83
      %v861 = vpop.permute.xlu0 %860
      %862 = vrot.lane.b32.xlu0 %v855, 83
      %v863 = vpop.permute.xlu0 %862
      %vm864 = vcmask 678912
      %v865 = vsel %vm864, %v857, %v859
      %v866 = vsel %vm864, %v859, %v861
      %v867 = vsel %vm864, %v861, %v863
      %v869 = vsel %vm492, %v851, 0
      %v871 = vsel %vm502, %v865, 0
      %v873 = vsel %vm502, %v866, 0
      %v875 = vsel %vm502, %v867, 0
      %v877 = vsel %vm502, %v863, 0
      %879 = vmatprep.subr.mxu0 %v873
      %880 = vmatpush1.msra.mxu0 %v871
      %881 = vmatprep.subr.mxu0 0.0
      %882 = vmatpush1.msra.mxu0 0.0
      %883 = vmatprep.subr.mxu0 0.0
      %884 = vmatpush1.msra.mxu0 0.0
      %885 = vmatprep.subr.mxu0 0.0
      %886 = vmatpush1.msra.mxu0 0.0
      %887 = vmatprep.subr.mxu0 0.0
      %888 = vmatpush1.msra.mxu0 0.0
      %889 = vmatprep.subr.mxu0 0.0
      %890 = vmatpush1.msra.mxu0 0.0
      %891 = vmatprep.subr.mxu0 0.0
      %892 = vmatpush1.msra.mxu0 0.0
      %893 = vmatprep.subr.mxu0 0.0
      %894 = vmatpush1.msra.mxu0 0.0
      %895 = vmatprep.subr.mxu0 0.0
      %896 = vmatpush1.msra.mxu0 0.0
      %897 = vmatprep.subr.mxu0 0.0
      %898 = vmatpush1.msra.mxu0 0.0
      %899 = vmatprep.subr.mxu0 0.0
      %900 = vmatpush1.msra.mxu0 0.0
      %901 = vmatprep.subr.mxu0 0.0
      %902 = vmatpush1.msra.mxu0 0.0
      %903 = vmatprep.subr.mxu0 0.0
      %904 = vmatpush1.msra.mxu0 0.0
      %905 = vmatprep.subr.mxu0 0.0
      %906 = vmatpush1.msra.mxu0 0.0
      %907 = vmatprep.subr.mxu0 0.0
      %908 = vmatpush1.msra.mxu0 0.0
      %909 = vmatprep.subr.mxu0 0.0
      %910 = vmatpush1.msra.mxu0 0.0
      %911 = vmatprep.subr.mxu0 0.0
      %912 = vmatpush1.msra.mxu0 0.0
      %913 = vmatprep.subr.mxu0 0.0
      %914 = vmatpush1.msra.mxu0 0.0
      %915 = vmatprep.subr.mxu0 0.0
      %916 = vmatpush1.msra.mxu0 0.0
      %917 = vmatprep.subr.mxu0 0.0
      %918 = vmatpush1.msra.mxu0 0.0
      %919 = vmatprep.subr.mxu0 0.0
      %920 = vmatpush1.msra.mxu0 0.0
      %921 = vmatprep.subr.mxu0 0.0
      %922 = vmatpush1.msra.mxu0 0.0
      %923 = vmatprep.subr.mxu0 0.0
      %924 = vmatpush1.msra.mxu0 0.0
      %925 = vmatprep.subr.mxu0 0.0
      %926 = vmatpush1.msra.mxu0 0.0
      %927 = vmatprep.subr.mxu0 0.0
      %928 = vmatpush1.msra.mxu0 0.0
      %929 = vmatprep.subr.mxu0 0.0
      %930 = vmatpush1.msra.mxu0 0.0
      %931 = vmatprep.subr.mxu0 0.0
      %932 = vmatpush1.msra.mxu0 0.0
      %933 = vmatprep.subr.mxu0 0.0
      %934 = vmatpush1.msra.mxu0 0.0
      %935 = vmatprep.subr.mxu0 0.0
      %936 = vmatpush1.msra.mxu0 0.0
      %937 = vmatprep.subr.mxu0 0.0
      %938 = vmatpush1.msra.mxu0 0.0
      %939 = vmatprep.subr.mxu0 0.0
      %940 = vmatpush1.msra.mxu0 0.0
      %941 = vmatprep.subr.mxu0 0.0
      %942 = vmatpush1.msra.mxu0 0.0
      %943 = vmatprep.mubr.f32.mxu0 0.0
      %944 = vmatmul.mubr.f32.gmra.mrb[0].mxu0 %v869
      %v945 = vpop.f32.mrb[0].mxu0
      %v946 = vadd.f32 0.0, %v945
      %v947 = vpop.f32.mrb[0].mxu0
      %v948 = vadd.f32 0.0, %v947
      %949 = vdwg.mxu0
      %950 = vmatprep.subr.mxu0 %v877
      %951 = vmatpush1.msra.mxu0 %v875
      %952 = vmatprep.subr.mxu0 0.0
      %953 = vmatpush1.msra.mxu0 0.0
      %954 = vmatprep.subr.mxu0 0.0
      %955 = vmatpush1.msra.mxu0 0.0
      %956 = vmatprep.subr.mxu0 0.0
      %957 = vmatpush1.msra.mxu0 0.0
      %958 = vmatprep.subr.mxu0 0.0
      %959 = vmatpush1.msra.mxu0 0.0
      %960 = vmatprep.subr.mxu0 0.0
      %961 = vmatpush1.msra.mxu0 0.0
      %962 = vmatprep.subr.mxu0 0.0
      %963 = vmatpush1.msra.mxu0 0.0
      %964 = vmatprep.subr.mxu0 0.0
      %965 = vmatpush1.msra.mxu0 0.0
      %966 = vmatprep.subr.mxu0 0.0
      %967 = vmatpush1.msra.mxu0 0.0
      %968 = vmatprep.subr.mxu0 0.0
      %969 = vmatpush1.msra.mxu0 0.0
      %970 = vmatprep.subr.mxu0 0.0
      %971 = vmatpush1.msra.mxu0 0.0
      %972 = vmatprep.subr.mxu0 0.0
      %973 = vmatpush1.msra.mxu0 0.0
      %974 = vmatprep.subr.mxu0 0.0
      %975 = vmatpush1.msra.mxu0 0.0
      %976 = vmatprep.subr.mxu0 0.0
      %977 = vmatpush1.msra.mxu0 0.0
      %978 = vmatprep.subr.mxu0 0.0
      %979 = vmatpush1.msra.mxu0 0.0
      %980 = vmatprep.subr.mxu0 0.0
      %981 = vmatpush1.msra.mxu0 0.0
      %982 = vmatprep.subr.mxu0 0.0
      %983 = vmatpush1.msra.mxu0 0.0
      %984 = vmatprep.subr.mxu0 0.0
      %985 = vmatpush1.msra.mxu0 0.0
      %986 = vmatprep.subr.mxu0 0.0
      %987 = vmatpush1.msra.mxu0 0.0
      %988 = vmatprep.subr.mxu0 0.0
      %989 = vmatpush1.msra.mxu0 0.0
      %990 = vmatprep.subr.mxu0 0.0
      %991 = vmatpush1.msra.mxu0 0.0
      %992 = vmatprep.subr.mxu0 0.0
      %993 = vmatpush1.msra.mxu0 0.0
      %994 = vmatprep.subr.mxu0 0.0
      %995 = vmatpush1.msra.mxu0 0.0
      %996 = vmatprep.subr.mxu0 0.0
      %997 = vmatpush1.msra.mxu0 0.0
      %998 = vmatprep.subr.mxu0 0.0
      %999 = vmatpush1.msra.mxu0 0.0
      %1000 = vmatprep.subr.mxu0 0.0
      %1001 = vmatpush1.msra.mxu0 0.0
      %1002 = vmatprep.subr.mxu0 0.0
      %1003 = vmatpush1.msra.mxu0 0.0
      %1004 = vmatprep.subr.mxu0 0.0
      %1005 = vmatpush1.msra.mxu0 0.0
      %1006 = vmatprep.subr.mxu0 0.0
      %1007 = vmatpush1.msra.mxu0 0.0
      %1008 = vmatprep.subr.mxu0 0.0
      %1009 = vmatpush1.msra.mxu0 0.0
      %1010 = vmatprep.subr.mxu0 0.0
      %1011 = vmatpush1.msra.mxu0 0.0
      %1012 = vmatprep.subr.mxu0 0.0
      %1013 = vmatpush1.msra.mxu0 0.0
      %1014 = vmatprep.mubr.f32.mxu0 0.0
      %1015 = vmatmul.mubr.f32.gmra.mrb[0].mxu0 %v869
      %v1016 = vpop.f32.mrb[0].mxu0
      %v1017 = vadd.f32 0.0, %v1016
      %v1018 = vpop.f32.mrb[0].mxu0
      %v1019 = vadd.f32 0.0, %v1018
      %1020 = vdwg.mxu0
      %1021 = vrot.lane.b32.xlu0 %v847, 84
      %v1022 = vpop.permute.xlu0 %1021
      %1023 = vrot.lane.b32.xlu0 %v854, 84
      %v1024 = vpop.permute.xlu0 %1023
      %1025 = vrot.lane.b32.xlu0 %v848, 84
      %v1026 = vpop.permute.xlu0 %1025
      %1027 = vrot.lane.b32.xlu0 %v855, 84
      %v1028 = vpop.permute.xlu0 %1027
      %vm1029 = vcmask 687104
      %v1030 = vsel %vm1029, %v1022, %v1024
      %v1031 = vsel %vm1029, %v1024, %v1026
      %v1032 = vsel %vm1029, %v1026, %v1028
      %v1034 = vsel %vm492, %v849, 0
      %v1036 = vsel %vm502, %v1030, 0
      %v1038 = vsel %vm502, %v1031, 0
      %v1040 = vsel %vm502, %v1032, 0
      %v1042 = vsel %vm502, %v1028, 0
      %1044 = vmatprep.subr.mxu0 %v1038
      %1045 = vmatpush1.msra.mxu0 %v1036
      %1046 = vmatprep.subr.mxu0 0.0
      %1047 = vmatpush1.msra.mxu0 0.0
      %1048 = vmatprep.subr.mxu0 0.0
      %1049 = vmatpush1.msra.mxu0 0.0
      %1050 = vmatprep.subr.mxu0 0.0
      %1051 = vmatpush1.msra.mxu0 0.0
      %1052 = vmatprep.subr.mxu0 0.0
      %1053 = vmatpush1.msra.mxu0 0.0
      %1054 = vmatprep.subr.mxu0 0.0
      %1055 = vmatpush1.msra.mxu0 0.0
      %1056 = vmatprep.subr.mxu0 0.0
      %1057 = vmatpush1.msra.mxu0 0.0
      %1058 = vmatprep.subr.mxu0 0.0
      %1059 = vmatpush1.msra.mxu0 0.0
      %1060 = vmatprep.subr.mxu0 0.0
      %1061 = vmatpush1.msra.mxu0 0.0
      %1062 = vmatprep.subr.mxu0 0.0
      %1063 = vmatpush1.msra.mxu0 0.0
      %1064 = vmatprep.subr.mxu0 0.0
      %1065 = vmatpush1.msra.mxu0 0.0
      %1066 = vmatprep.subr.mxu0 0.0
      %1067 = vmatpush1.msra.mxu0 0.0
      %1068 = vmatprep.subr.mxu0 0.0
      %1069 = vmatpush1.msra.mxu0 0.0
      %1070 = vmatprep.subr.mxu0 0.0
      %1071 = vmatpush1.msra.mxu0 0.0
      %1072 = vmatprep.subr.mxu0 0.0
      %1073 = vmatpush1.msra.mxu0 0.0
      %1074 = vmatprep.subr.mxu0 0.0
      %1075 = vmatpush1.msra.mxu0 0.0
      %1076 = vmatprep.subr.mxu0 0.0
      %1077 = vmatpush1.msra.mxu0 0.0
      %1078 = vmatprep.subr.mxu0 0.0
      %1079 = vmatpush1.msra.mxu0 0.0
      %1080 = vmatprep.subr.mxu0 0.0
      %1081 = vmatpush1.msra.mxu0 0.0
      %1082 = vmatprep.subr.mxu0 0.0
      %1083 = vmatpush1.msra.mxu0 0.0
      %1084 = vmatprep.subr.mxu0 0.0
      %1085 = vmatpush1.msra.mxu0 0.0
      %1086 = vmatprep.subr.mxu0 0.0
      %1087 = vmatpush1.msra.mxu0 0.0
      %1088 = vmatprep.subr.mxu0 0.0
      %1089 = vmatpush1.msra.mxu0 0.0
      %1090 = vmatprep.subr.mxu0 0.0
      %1091 = vmatpush1.msra.mxu0 0.0
      %1092 = vmatprep.subr.mxu0 0.0
      %1093 = vmatpush1.msra.mxu0 0.0
      %1094 = vmatprep.subr.mxu0 0.0
      %1095 = vmatpush1.msra.mxu0 0.0
      %1096 = vmatprep.subr.mxu0 0.0
      %1097 = vmatpush1.msra.mxu0 0.0
      %1098 = vmatprep.subr.mxu0 0.0
      %1099 = vmatpush1.msra.mxu0 0.0
      %1100 = vmatprep.subr.mxu0 0.0
      %1101 = vmatpush1.msra.mxu0 0.0
      %1102 = vmatprep.subr.mxu0 0.0
      %1103 = vmatpush1.msra.mxu0 0.0
      %1104 = vmatprep.subr.mxu0 0.0
      %1105 = vmatpush1.msra.mxu0 0.0
      %1106 = vmatprep.subr.mxu0 0.0
      %1107 = vmatpush1.msra.mxu0 0.0
      %1108 = vmatprep.mubr.f32.mxu0 0.0
      %1109 = vmatmul.mubr.f32.gmra.mrb[0].mxu0 %v1034
      %v1110 = vpop.f32.mrb[0].mxu0
      %v1111 = vadd.f32 %v946, %v1110
      %v1112 = vpop.f32.mrb[0].mxu0
      %v1113 = vadd.f32 %v948, %v1112
      %1114 = vdwg.mxu0
      %1115 = vmatprep.subr.mxu0 %v1042
      %1116 = vmatpush1.msra.mxu0 %v1040
      %1117 = vmatprep.subr.mxu0 0.0
      %1118 = vmatpush1.msra.mxu0 0.0
      %1119 = vmatprep.subr.mxu0 0.0
      %1120 = vmatpush1.msra.mxu0 0.0
      %1121 = vmatprep.subr.mxu0 0.0
      %1122 = vmatpush1.msra.mxu0 0.0
      %1123 = vmatprep.subr.mxu0 0.0
      %1124 = vmatpush1.msra.mxu0 0.0
      %1125 = vmatprep.subr.mxu0 0.0
      %1126 = vmatpush1.msra.mxu0 0.0
      %1127 = vmatprep.subr.mxu0 0.0
      %1128 = vmatpush1.msra.mxu0 0.0
      %1129 = vmatprep.subr.mxu0 0.0
      %1130 = vmatpush1.msra.mxu0 0.0
      %1131 = vmatprep.subr.mxu0 0.0
      %1132 = vmatpush1.msra.mxu0 0.0
      %1133 = vmatprep.subr.mxu0 0.0
      %1134 = vmatpush1.msra.mxu0 0.0
      %1135 = vmatprep.subr.mxu0 0.0
      %1136 = vmatpush1.msra.mxu0 0.0
      %1137 = vmatprep.subr.mxu0 0.0
      %1138 = vmatpush1.msra.mxu0 0.0
      %1139 = vmatprep.subr.mxu0 0.0
      %1140 = vmatpush1.msra.mxu0 0.0
      %1141 = vmatprep.subr.mxu0 0.0
      %1142 = vmatpush1.msra.mxu0 0.0
      %1143 = vmatprep.subr.mxu0 0.0
      %1144 = vmatpush1.msra.mxu0 0.0
      %1145 = vmatprep.subr.mxu0 0.0
      %1146 = vmatpush1.msra.mxu0 0.0
      %1147 = vmatprep.subr.mxu0 0.0
      %1148 = vmatpush1.msra.mxu0 0.0
      %1149 = vmatprep.subr.mxu0 0.0
      %1150 = vmatpush1.msra.mxu0 0.0
      %1151 = vmatprep.subr.mxu0 0.0
      %1152 = vmatpush1.msra.mxu0 0.0
      %1153 = vmatprep.subr.mxu0 0.0
      %1154 = vmatpush1.msra.mxu0 0.0
      %1155 = vmatprep.subr.mxu0 0.0
      %1156 = vmatpush1.msra.mxu0 0.0
      %1157 = vmatprep.subr.mxu0 0.0
      %1158 = vmatpush1.msra.mxu0 0.0
      %1159 = vmatprep.subr.mxu0 0.0
      %1160 = vmatpush1.msra.mxu0 0.0
      %1161 = vmatprep.subr.mxu0 0.0
      %1162 = vmatpush1.msra.mxu0 0.0
      %1163 = vmatprep.subr.mxu0 0.0
      %1164 = vmatpush1.msra.mxu0 0.0
      %1165 = vmatprep.subr.mxu0 0.0
      %1166 = vmatpush1.msra.mxu0 0.0
      %1167 = vmatprep.subr.mxu0 0.0
      %1168 = vmatpush1.msra.mxu0 0.0
      %1169 = vmatprep.subr.mxu0 0.0
      %1170 = vmatpush1.msra.mxu0 0.0
      %1171 = vmatprep.subr.mxu0 0.0
      %1172 = vmatpush1.msra.mxu0 0.0
      %1173 = vmatprep.subr.mxu0 0.0
      %1174 = vmatpush1.msra.mxu0 0.0
      %1175 = vmatprep.subr.mxu0 0.0
      %1176 = vmatpush1.msra.mxu0 0.0
      %1177 = vmatprep.subr.mxu0 0.0
      %1178 = vmatpush1.msra.mxu0 0.0
      %1179 = vmatprep.mubr.f32.mxu0 0.0
      %1180 = vmatmul.mubr.f32.gmra.mrb[0].mxu0 %v1034
      %v1181 = vpop.f32.mrb[0].mxu0
      %v1182 = vadd.f32 %v1017, %v1181
      %v1183 = vpop.f32.mrb[0].mxu0
      %v1184 = vadd.f32 %v1019, %v1183
      %1185 = vdwg.mxu0
      %v1186 = vld [vmem:[#allocation2] sm:$0xff]
      %v1187 = vld [vmem:[#allocation2 + $0x8] sm:$0xff]
      %s1188 = scalar_lea.vmem %s5, 16
      %v1189 = vld [vmem:[%s1188] sm:$0xff]
      %v1192 = vcombine.high %v1186, %v1186
      %v1193 = vcombine.high %v1187, %v1187
      %1194 = vrot.lane.b32.xlu0 %v1186, 82
      %v1195 = vpop.permute.xlu0 %1194
      %1196 = vrot.lane.b32.xlu0 %v1192, 82
      %v1197 = vpop.permute.xlu0 %1196
      %1198 = vrot.lane.b32.xlu0 %v1187, 82
      %v1199 = vpop.permute.xlu0 %1198
      %1200 = vrot.lane.b32.xlu0 %v1193, 82
      %v1201 = vpop.permute.xlu0 %1200
      %vm1202 = vcmask 670720
      %v1203 = vsel %vm1202, %v1195, %v1197
      %v1204 = vsel %vm1202, %v1197, %v1199
      %v1205 = vsel %vm1202, %v1199, %v1201
      %v1207 = vsel %vm492, %v1189, 0
      %v1209 = vsel %vm502, %v1203, 0
      %v1211 = vsel %vm502, %v1204, 0
      %v1213 = vsel %vm502, %v1205, 0
      %v1215 = vsel %vm502, %v1201, 0
      %1217 = vmatprep.subr.mxu0 %v1211
      %1218 = vmatpush1.msra.mxu0 %v1209
      %1219 = vmatprep.subr.mxu0 0.0
      %1220 = vmatpush1.msra.mxu0 0.0
      %1221 = vmatprep.subr.mxu0 0.0
      %1222 = vmatpush1.msra.mxu0 0.0
      %1223 = vmatprep.subr.mxu0 0.0
      %1224 = vmatpush1.msra.mxu0 0.0
      %1225 = vmatprep.subr.mxu0 0.0
      %1226 = vmatpush1.msra.mxu0 0.0
      %1227 = vmatprep.subr.mxu0 0.0
      %1228 = vmatpush1.msra.mxu0 0.0
      %1229 = vmatprep.subr.mxu0 0.0
      %1230 = vmatpush1.msra.mxu0 0.0
      %1231 = vmatprep.subr.mxu0 0.0
      %1232 = vmatpush1.msra.mxu0 0.0
      %1233 = vmatprep.subr.mxu0 0.0
      %1234 = vmatpush1.msra.mxu0 0.0
      %1235 = vmatprep.subr.mxu0 0.0
      %1236 = vmatpush1.msra.mxu0 0.0
      %1237 = vmatprep.subr.mxu0 0.0
      %1238 = vmatpush1.msra.mxu0 0.0
      %1239 = vmatprep.subr.mxu0 0.0
      %1240 = vmatpush1.msra.mxu0 0.0
      %1241 = vmatprep.subr.mxu0 0.0
      %1242 = vmatpush1.msra.mxu0 0.0
      %1243 = vmatprep.subr.mxu0 0.0
      %1244 = vmatpush1.msra.mxu0 0.0
      %1245 = vmatprep.subr.mxu0 0.0
      %1246 = vmatpush1.msra.mxu0 0.0
      %1247 = vmatprep.subr.mxu0 0.0
      %1248 = vmatpush1.msra.mxu0 0.0
      %1249 = vmatprep.subr.mxu0 0.0
      %1250 = vmatpush1.msra.mxu0 0.0
      %1251 = vmatprep.subr.mxu0 0.0
      %1252 = vmatpush1.msra.mxu0 0.0
      %1253 = vmatprep.subr.mxu0 0.0
      %1254 = vmatpush1.msra.mxu0 0.0
      %1255 = vmatprep.subr.mxu0 0.0
      %1256 = vmatpush1.msra.mxu0 0.0
      %1257 = vmatprep.subr.mxu0 0.0
      %1258 = vmatpush1.msra.mxu0 0.0
      %1259 = vmatprep.subr.mxu0 0.0
      %1260 = vmatpush1.msra.mxu0 0.0
      %1261 = vmatprep.subr.mxu0 0.0
      %1262 = vmatpush1.msra.mxu0 0.0
      %1263 = vmatprep.subr.mxu0 0.0
      %1264 = vmatpush1.msra.mxu0 0.0
      %1265 = vmatprep.subr.mxu0 0.0
      %1266 = vmatpush1.msra.mxu0 0.0
      %1267 = vmatprep.subr.mxu0 0.0
      %1268 = vmatpush1.msra.mxu0 0.0
      %1269 = vmatprep.subr.mxu0 0.0
      %1270 = vmatpush1.msra.mxu0 0.0
      %1271 = vmatprep.subr.mxu0 0.0
      %1272 = vmatpush1.msra.mxu0 0.0
      %1273 = vmatprep.subr.mxu0 0.0
      %1274 = vmatpush1.msra.mxu0 0.0
      %1275 = vmatprep.subr.mxu0 0.0
      %1276 = vmatpush1.msra.mxu0 0.0
      %1277 = vmatprep.subr.mxu0 0.0
      %1278 = vmatpush1.msra.mxu0 0.0
      %1279 = vmatprep.subr.mxu0 0.0
      %1280 = vmatpush1.msra.mxu0 0.0
      %1281 = vmatprep.mubr.f32.mxu0 0.0
      %1282 = vmatmul.mubr.f32.gmra.mrb[0].mxu0 %v1207
      %v1283 = vpop.f32.mrb[0].mxu0
      %v1284 = vadd.f32 0.0, %v1283
      %v1285 = vpop.f32.mrb[0].mxu0
      %v1286 = vadd.f32 0.0, %v1285
      %1287 = vdwg.mxu0
      %1288 = vmatprep.subr.mxu0 %v1215
      %1289 = vmatpush1.msra.mxu0 %v1213
      %1290 = vmatprep.subr.mxu0 0.0
      %1291 = vmatpush1.msra.mxu0 0.0
      %1292 = vmatprep.subr.mxu0 0.0
      %1293 = vmatpush1.msra.mxu0 0.0
      %1294 = vmatprep.subr.mxu0 0.0
      %1295 = vmatpush1.msra.mxu0 0.0
      %1296 = vmatprep.subr.mxu0 0.0
      %1297 = vmatpush1.msra.mxu0 0.0
      %1298 = vmatprep.subr.mxu0 0.0
      %1299 = vmatpush1.msra.mxu0 0.0
      %1300 = vmatprep.subr.mxu0 0.0
      %1301 = vmatpush1.msra.mxu0 0.0
      %1302 = vmatprep.subr.mxu0 0.0
      %1303 = vmatpush1.msra.mxu0 0.0
      %1304 = vmatprep.subr.mxu0 0.0
      %1305 = vmatpush1.msra.mxu0 0.0
      %1306 = vmatprep.subr.mxu0 0.0
      %1307 = vmatpush1.msra.mxu0 0.0
      %1308 = vmatprep.subr.mxu0 0.0
      %1309 = vmatpush1.msra.mxu0 0.0
      %1310 = vmatprep.subr.mxu0 0.0
      %1311 = vmatpush1.msra.mxu0 0.0
      %1312 = vmatprep.subr.mxu0 0.0
      %1313 = vmatpush1.msra.mxu0 0.0
      %1314 = vmatprep.subr.mxu0 0.0
      %1315 = vmatpush1.msra.mxu0 0.0
      %1316 = vmatprep.subr.mxu0 0.0
      %1317 = vmatpush1.msra.mxu0 0.0
      %1318 = vmatprep.subr.mxu0 0.0
      %1319 = vmatpush1.msra.mxu0 0.0
      %1320 = vmatprep.subr.mxu0 0.0
      %1321 = vmatpush1.msra.mxu0 0.0
      %1322 = vmatprep.subr.mxu0 0.0
      %1323 = vmatpush1.msra.mxu0 0.0
      %1324 = vmatprep.subr.mxu0 0.0
      %1325 = vmatpush1.msra.mxu0 0.0
      %1326 = vmatprep.subr.mxu0 0.0
      %1327 = vmatpush1.msra.mxu0 0.0
      %1328 = vmatprep.subr.mxu0 0.0
      %1329 = vmatpush1.msra.mxu0 0.0
      %1330 = vmatprep.subr.mxu0 0.0
      %1331 = vmatpush1.msra.mxu0 0.0
      %1332 = vmatprep.subr.mxu0 0.0
      %1333 = vmatpush1.msra.mxu0 0.0
      %1334 = vmatprep.subr.mxu0 0.0
      %1335 = vmatpush1.msra.mxu0 0.0
      %1336 = vmatprep.subr.mxu0 0.0
      %1337 = vmatpush1.msra.mxu0 0.0
      %1338 = vmatprep.subr.mxu0 0.0
      %1339 = vmatpush1.msra.mxu0 0.0
      %1340 = vmatprep.subr.mxu0 0.0
      %1341 = vmatpush1.msra.mxu0 0.0
      %1342 = vmatprep.subr.mxu0 0.0
      %1343 = vmatpush1.msra.mxu0 0.0
      %1344 = vmatprep.subr.mxu0 0.0
      %1345 = vmatpush1.msra.mxu0 0.0
      %1346 = vmatprep.subr.mxu0 0.0
      %1347 = vmatpush1.msra.mxu0 0.0
      %1348 = vmatprep.subr.mxu0 0.0
      %1349 = vmatpush1.msra.mxu0 0.0
      %1350 = vmatprep.subr.mxu0 0.0
      %1351 = vmatpush1.msra.mxu0 0.0
      %1352 = vmatprep.mubr.f32.mxu0 0.0
      %1353 = vmatmul.mubr.f32.gmra.mrb[0].mxu0 %v1207
      %v1354 = vpop.f32.mrb[0].mxu0
      %v1355 = vadd.f32 0.0, %v1354
      %v1356 = vpop.f32.mrb[0].mxu0
      %v1357 = vadd.f32 0.0, %v1356
      %1358 = vdwg.mxu0
      %v1359 = vadd.f32 %v1111, %v1284
      %v1360 = vadd.f32 %v1113, %v1286
      %v1361 = vadd.f32 %v1182, %v1355
      %v1362 = vadd.f32 %v1184, %v1357
      %v1363 = vld [vmem:[%s6] sm:$0xff]
      %1365 = vset.pattern.permute.xlu0 0
      %1366 = vperm.xlu0 %1365, %v1363
      %v1367 = vpop.permute.xlu0 %1366
      %v1369 = vmul.f32 %v1359, %v1367
      %v1370 = vmul.f32 %v1360, %v1367
      %v1371 = vmul.f32 %v1361, %v1367
      %v1372 = vmul.f32 %v1362, %v1367
      %v1373 = vld [vmem:[%s7] sm:$0xff]
      %1375 = vset.pattern.permute.xlu0 0
      %1376 = vperm.xlu0 %1375, %v1373
      %v1377 = vpop.permute.xlu0 %1376
      %v1379 = vadd.f32 %v1369, %v1377
      %v1380 = vadd.f32 %v1370, %v1377
      %v1381 = vadd.f32 %v1371, %v1377
      %v1382 = vadd.f32 %v1372, %v1377
      %v1383 = vxor.u32 %v1379, 2147483648
      %v1384 = vxor.u32 %v1380, 2147483648
      %v1385 = vxor.u32 %v1381, 2147483648
      %v1386 = vxor.u32 %v1382, 2147483648
      %v1387 = vmul.f32 %v1383, 1.442695
      %v1388 = vpow.pop %v1387
      %v1389 = vmul.f32 %v1384, 1.442695
      %v1390 = vpow.pop %v1389
      %v1391 = vmul.f32 %v1385, 1.442695
      %v1392 = vpow.pop %v1391
      %v1393 = vmul.f32 %v1386, 1.442695
      %v1394 = vpow.pop %v1393
      %v1395 = vadd.f32 %v1388, 1.0
      %v1396 = vadd.f32 %v1390, 1.0
      %v1397 = vadd.f32 %v1392, 1.0
      %v1398 = vadd.f32 %v1394, 1.0
      %v1399 = vrcp.pop %v1395
      %v1400 = vmul.f32 1.0, %v1399
      %v1401 = vrcp.pop %v1396
      %v1402 = vmul.f32 1.0, %v1401
      %v1403 = vrcp.pop %v1397
      %v1404 = vmul.f32 1.0, %v1403
      %v1405 = vrcp.pop %v1398
      %v1406 = vmul.f32 1.0, %v1405
      %v1407 = vmul.f32 %v1379, %v1400
      %v1408 = vmul.f32 %v1380, %v1402
      %v1409 = vmul.f32 %v1381, %v1404
      %v1410 = vmul.f32 %v1382, %v1406
      %1411 = vst [vmem:[#allocation3] sm:$0xff] %v1407
      %1412 = vst [vmem:[#allocation3 + $0x8] sm:$0xff] %v1408
      %vm1413 = vcmask 924672
      %1414 = vst.msk [vmem:[#allocation3 + $0x10] sm:$0xff] %vm1413, %v1409
      %1419 = vrot.lane.b32.xlu0 %v1407, 103
      %v1420 = vpop.permute.xlu0 %1419
      %1421 = vrot.lane.b32.xlu0 %v1408, 103
      %v1422 = vpop.permute.xlu0 %1421
      %1423 = vrot.lane.b32.xlu0 %v1409, 103
      %v1424 = vpop.permute.xlu0 %1423
      %1425 = vrot.lane.b32.xlu0 %v1410, 103
      %v1426 = vpop.permute.xlu0 %1425
      %vm1427 = vcmask 842752
      %v1428 = vsel %vm1427, %v1420, %v1422
      %v1429 = vsel %vm1427, %v1422, %v1424
      %v1430 = vsel %vm1427, %v1424, %v1426
      %1434 = vst [vmem:[#allocation3 + $0x18] sm:$0xff] %v1428
      %1435 = vst [vmem:[#allocation3 + $0x20] sm:$0xff] %v1429
      %1436 = vst.msk [vmem:[#allocation3 + $0x28] sm:$0xff] %vm1413, %v1430
      %v1437 = vld [vmem:[#allocation2] sm:$0xff]
      %v1438 = vld [vmem:[#allocation2 + $0x8] sm:$0xff]
      %v1439 = vld [vmem:[%s8] sm:$0xff]
      %s1440 = scalar_lea.vmem %s8, 8
      %v1441 = vld [vmem:[%s1440] sm:$0xff]
      %v1444 = vcombine.high %v1437, %v1437
      %v1445 = vcombine.high %v1438, %v1438
      %1446 = vrot.lane.b32.xlu0 %v1437, 103
      %v1447 = vpop.permute.xlu0 %1446
      %1448 = vrot.lane.b32.xlu0 %v1444, 103
      %v1449 = vpop.permute.xlu0 %1448
      %1450 = vrot.lane.b32.xlu0 %v1438, 103
      %v1451 = vpop.permute.xlu0 %1450
      %1452 = vrot.lane.b32.xlu0 %v1445, 103
      %v1453 = vpop.permute.xlu0 %1452
      %v1454 = vsel %vm1427, %v1447, %v1449
      %v1455 = vsel %vm1427, %v1449, %v1451
      %v1456 = vsel %vm1427, %v1451, %v1453
      %v1458 = vsel %vm492, %v1441, 0
      %v1460 = vsel %vm502, %v1454, 0
      %v1462 = vsel %vm502, %v1455, 0
      %v1464 = vsel %vm502, %v1456, 0
      %v1466 = vsel %vm502, %v1453, 0
      %1468 = vmatprep.subr.mxu0 %v1462
      %1469 = vmatpush1.msra.mxu0 %v1460
      %1470 = vmatprep.subr.mxu0 0.0
      %1471 = vmatpush1.msra.mxu0 0.0
      %1472 = vmatprep.subr.mxu0 0.0
      %1473 = vmatpush1.msra.mxu0 0.0
      %1474 = vmatprep.subr.mxu0 0.0
      %1475 = vmatpush1.msra.mxu0 0.0
      %1476 = vmatprep.subr.mxu0 0.0
      %1477 = vmatpush1.msra.mxu0 0.0
      %1478 = vmatprep.subr.mxu0 0.0
      %1479 = vmatpush1.msra.mxu0 0.0
      %1480 = vmatprep.subr.mxu0 0.0
      %1481 = vmatpush1.msra.mxu0 0.0
      %1482 = vmatprep.subr.mxu0 0.0
      %1483 = vmatpush1.msra.mxu0 0.0
      %1484 = vmatprep.subr.mxu0 0.0
      %1485 = vmatpush1.msra.mxu0 0.0
      %1486 = vmatprep.subr.mxu0 0.0
      %1487 = vmatpush1.msra.mxu0 0.0
      %1488 = vmatprep.subr.mxu0 0.0
      %1489 = vmatpush1.msra.mxu0 0.0
      %1490 = vmatprep.subr.mxu0 0.0
      %1491 = vmatpush1.msra.mxu0 0.0
      %1492 = vmatprep.subr.mxu0 0.0
      %1493 = vmatpush1.msra.mxu0 0.0
      %1494 = vmatprep.subr.mxu0 0.0
      %1495 = vmatpush1.msra.mxu0 0.0
      %1496 = vmatprep.subr.mxu0 0.0
      %1497 = vmatpush1.msra.mxu0 0.0
      %1498 = vmatprep.subr.mxu0 0.0
      %1499 = vmatpush1.msra.mxu0 0.0
      %1500 = vmatprep.subr.mxu0 0.0
      %1501 = vmatpush1.msra.mxu0 0.0
      %1502 = vmatprep.subr.mxu0 0.0
      %1503 = vmatpush1.msra.mxu0 0.0
      %1504 = vmatprep.subr.mxu0 0.0
      %1505 = vmatpush1.msra.mxu0 0.0
      %1506 = vmatprep.subr.mxu0 0.0
      %1507 = vmatpush1.msra.mxu0 0.0
      %1508 = vmatprep.subr.mxu0 0.0
      %1509 = vmatpush1.msra.mxu0 0.0
      %1510 = vmatprep.subr.mxu0 0.0
      %1511 = vmatpush1.msra.mxu0 0.0
      %1512 = vmatprep.subr.mxu0 0.0
      %1513 = vmatpush1.msra.mxu0 0.0
      %1514 = vmatprep.subr.mxu0 0.0
      %1515 = vmatpush1.msra.mxu0 0.0
      %1516 = vmatprep.subr.mxu0 0.0
      %1517 = vmatpush1.msra.mxu0 0.0
      %1518 = vmatprep.subr.mxu0 0.0
      %1519 = vmatpush1.msra.mxu0 0.0
      %1520 = vmatprep.subr.mxu0 0.0
      %1521 = vmatpush1.msra.mxu0 0.0
      %1522 = vmatprep.subr.mxu0 0.0
      %1523 = vmatpush1.msra.mxu0 0.0
      %1524 = vmatprep.subr.mxu0 0.0
      %1525 = vmatpush1.msra.mxu0 0.0
      %1526 = vmatprep.subr.mxu0 0.0
      %1527 = vmatpush1.msra.mxu0 0.0
      %1528 = vmatprep.subr.mxu0 0.0
      %1529 = vmatpush1.msra.mxu0 0.0
      %1530 = vmatprep.subr.mxu0 0.0
      %1531 = vmatpush1.msra.mxu0 0.0
      %1532 = vmatprep.mubr.f32.mxu0 0.0
      %1533 = vmatmul.mubr.f32.gmra.mrb[0].mxu0 %v1458
      %v1534 = vpop.f32.mrb[0].mxu0
      %v1535 = vadd.f32 0.0, %v1534
      %v1536 = vpop.f32.mrb[0].mxu0
      %v1537 = vadd.f32 0.0, %v1536
      %1538 = vdwg.mxu0
      %1539 = vmatprep.subr.mxu0 %v1466
      %1540 = vmatpush1.msra.mxu0 %v1464
      %1541 = vmatprep.subr.mxu0 0.0
      %1542 = vmatpush1.msra.mxu0 0.0
      %1543 = vmatprep.subr.mxu0 0.0
      %1544 = vmatpush1.msra.mxu0 0.0
      %1545 = vmatprep.subr.mxu0 0.0
      %1546 = vmatpush1.msra.mxu0 0.0
      %1547 = vmatprep.subr.mxu0 0.0
      %1548 = vmatpush1.msra.mxu0 0.0
      %1549 = vmatprep.subr.mxu0 0.0
      %1550 = vmatpush1.msra.mxu0 0.0
      %1551 = vmatprep.subr.mxu0 0.0
      %1552 = vmatpush1.msra.mxu0 0.0
      %1553 = vmatprep.subr.mxu0 0.0
      %1554 = vmatpush1.msra.mxu0 0.0
      %1555 = vmatprep.subr.mxu0 0.0
      %1556 = vmatpush1.msra.mxu0 0.0
      %1557 = vmatprep.subr.mxu0 0.0
      %1558 = vmatpush1.msra.mxu0 0.0
      %1559 = vmatprep.subr.mxu0 0.0
      %1560 = vmatpush1.msra.mxu0 0.0
      %1561 = vmatprep.subr.mxu0 0.0
      %1562 = vmatpush1.msra.mxu0 0.0
      %1563 = vmatprep.subr.mxu0 0.0
      %1564 = vmatpush1.msra.mxu0 0.0
      %1565 = vmatprep.subr.mxu0 0.0
      %1566 = vmatpush1.msra.mxu0 0.0
      %1567 = vmatprep.subr.mxu0 0.0
      %1568 = vmatpush1.msra.mxu0 0.0
      %1569 = vmatprep.subr.mxu0 0.0
      %1570 = vmatpush1.msra.mxu0 0.0
      %1571 = vmatprep.subr.mxu0 0.0
      %1572 = vmatpush1.msra.mxu0 0.0
      %1573 = vmatprep.subr.mxu0 0.0
      %1574 = vmatpush1.msra.mxu0 0.0
      %1575 = vmatprep.subr.mxu0 0.0
      %1576 = vmatpush1.msra.mxu0 0.0
      %1577 = vmatprep.subr.mxu0 0.0
      %1578 = vmatpush1.msra.mxu0 0.0
      %1579 = vmatprep.subr.mxu0 0.0
      %1580 = vmatpush1.msra.mxu0 0.0
      %1581 = vmatprep.subr.mxu0 0.0
      %1582 = vmatpush1.msra.mxu0 0.0
      %1583 = vmatprep.subr.mxu0 0.0
      %1584 = vmatpush1.msra.mxu0 0.0
      %1585 = vmatprep.subr.mxu0 0.0
      %1586 = vmatpush1.msra.mxu0 0.0
      %1587 = vmatprep.subr.mxu0 0.0
      %1588 = vmatpush1.msra.mxu0 0.0
      %1589 = vmatprep.subr.mxu0 0.0
      %1590 = vmatpush1.msra.mxu0 0.0
      %1591 = vmatprep.subr.mxu0 0.0
      %1592 = vmatpush1.msra.mxu0 0.0
      %1593 = vmatprep.subr.mxu0 0.0
      %1594 = vmatpush1.msra.mxu0 0.0
      %1595 = vmatprep.subr.mxu0 0.0
      %1596 = vmatpush1.msra.mxu0 0.0
      %1597 = vmatprep.subr.mxu0 0.0
      %1598 = vmatpush1.msra.mxu0 0.0
      %1599 = vmatprep.subr.mxu0 0.0
      %1600 = vmatpush1.msra.mxu0 0.0
      %1601 = vmatprep.subr.mxu0 0.0
      %1602 = vmatpush1.msra.mxu0 0.0
      %1603 = vmatprep.mubr.f32.mxu0 0.0
      %1604 = vmatmul.mubr.f32.gmra.mrb[0].mxu0 %v1458
      %v1605 = vpop.f32.mrb[0].mxu0
      %v1606 = vadd.f32 0.0, %v1605
      %v1607 = vpop.f32.mrb[0].mxu0
      %v1608 = vadd.f32 0.0, %v1607
      %1609 = vdwg.mxu0
      %1610 = vrot.lane.b32.xlu0 %v1437, 125
      %v1611 = vpop.permute.xlu0 %1610
      %1612 = vrot.lane.b32.xlu0 %v1444, 125
      %v1613 = vpop.permute.xlu0 %1612
      %1614 = vrot.lane.b32.xlu0 %v1438, 125
      %v1615 = vpop.permute.xlu0 %1614
      %1616 = vrot.lane.b32.xlu0 %v1445, 125
      %v1617 = vpop.permute.xlu0 %1616
      %vm1618 = vcmask 1022976
      %v1619 = vsel %vm1618, %v1611, %v1613
      %v1620 = vsel %vm1618, %v1613, %v1615
      %v1621 = vsel %vm1618, %v1615, %v1617
      %v1623 = vsel %vm492, %v1439, 0
      %v1625 = vsel %vm502, %v1619, 0
      %v1627 = vsel %vm502, %v1620, 0
      %v1629 = vsel %vm502, %v1621, 0
      %v1631 = vsel %vm502, %v1617, 0
      %1633 = vmatprep.subr.mxu0 %v1627
      %1634 = vmatpush1.msra.mxu0 %v1625
      %1635 = vmatprep.subr.mxu0 0.0
      %1636 = vmatpush1.msra.mxu0 0.0
      %1637 = vmatprep.subr.mxu0 0.0
      %1638 = vmatpush1.msra.mxu0 0.0
      %1639 = vmatprep.subr.mxu0 0.0
      %1640 = vmatpush1.msra.mxu0 0.0
      %1641 = vmatprep.subr.mxu0 0.0
      %1642 = vmatpush1.msra.mxu0 0.0
      %1643 = vmatprep.subr.mxu0 0.0
      %1644 = vmatpush1.msra.mxu0 0.0
      %1645 = vmatprep.subr.mxu0 0.0
      %1646 = vmatpush1.msra.mxu0 0.0
      %1647 = vmatprep.subr.mxu0 0.0
      %1648 = vmatpush1.msra.mxu0 0.0
      %1649 = vmatprep.subr.mxu0 0.0
      %1650 = vmatpush1.msra.mxu0 0.0
      %1651 = vmatprep.subr.mxu0 0.0
      %1652 = vmatpush1.msra.mxu0 0.0
      %1653 = vmatprep.subr.mxu0 0.0
      %1654 = vmatpush1.msra.mxu0 0.0
      %1655 = vmatprep.subr.mxu0 0.0
      %1656 = vmatpush1.msra.mxu0 0.0
      %1657 = vmatprep.subr.mxu0 0.0
      %1658 = vmatpush1.msra.mxu0 0.0
      %1659 = vmatprep.subr.mxu0 0.0
      %1660 = vmatpush1.msra.mxu0 0.0
      %1661 = vmatprep.subr.mxu0 0.0
      %1662 = vmatpush1.msra.mxu0 0.0
      %1663 = vmatprep.subr.mxu0 0.0
      %1664 = vmatpush1.msra.mxu0 0.0
      %1665 = vmatprep.subr.mxu0 0.0
      %1666 = vmatpush1.msra.mxu0 0.0
      %1667 = vmatprep.subr.mxu0 0.0
      %1668 = vmatpush1.msra.mxu0 0.0
      %1669 = vmatprep.subr.mxu0 0.0
      %1670 = vmatpush1.msra.mxu0 0.0
      %1671 = vmatprep.subr.mxu0 0.0
      %1672 = vmatpush1.msra.mxu0 0.0
      %1673 = vmatprep.subr.mxu0 0.0
      %1674 = vmatpush1.msra.mxu0 0.0
      %1675 = vmatprep.subr.mxu0 0.0
      %1676 = vmatpush1.msra.mxu0 0.0
      %1677 = vmatprep.subr.mxu0 0.0
      %1678 = vmatpush1.msra.mxu0 0.0
      %1679 = vmatprep.subr.mxu0 0.0
      %1680 = vmatpush1.msra.mxu0 0.0
      %1681 = vmatprep.subr.mxu0 0.0
      %1682 = vmatpush1.msra.mxu0 0.0
      %1683 = vmatprep.subr.mxu0 0.0
      %1684 = vmatpush1.msra.mxu0 0.0
      %1685 = vmatprep.subr.mxu0 0.0
      %1686 = vmatpush1.msra.mxu0 0.0
      %1687 = vmatprep.subr.mxu0 0.0
      %1688 = vmatpush1.msra.mxu0 0.0
      %1689 = vmatprep.subr.mxu0 0.0
      %1690 = vmatpush1.msra.mxu0 0.0
      %1691 = vmatprep.subr.mxu0 0.0
      %1692 = vmatpush1.msra.mxu0 0.0
      %1693 = vmatprep.subr.mxu0 0.0
      %1694 = vmatpush1.msra.mxu0 0.0
      %1695 = vmatprep.subr.mxu0 0.0
      %1696 = vmatpush1.msra.mxu0 0.0
      %1697 = vmatprep.mubr.f32.mxu0 0.0
      %1698 = vmatmul.mubr.f32.gmra.mrb[0].mxu0 %v1623
      %v1699 = vpop.f32.mrb[0].mxu0
      %v1700 = vadd.f32 %v1535, %v1699
      %v1701 = vpop.f32.mrb[0].mxu0
      %v1702 = vadd.f32 %v1537, %v1701
      %1703 = vdwg.mxu0
      %1704 = vmatprep.subr.mxu0 %v1631
      %1705 = vmatpush1.msra.mxu0 %v1629
      %1706 = vmatprep.subr.mxu0 0.0
      %1707 = vmatpush1.msra.mxu0 0.0
      %1708 = vmatprep.subr.mxu0 0.0
      %1709 = vmatpush1.msra.mxu0 0.0
      %1710 = vmatprep.subr.mxu0 0.0
      %1711 = vmatpush1.msra.mxu0 0.0
      %1712 = vmatprep.subr.mxu0 0.0
      %1713 = vmatpush1.msra.mxu0 0.0
      %1714 = vmatprep.subr.mxu0 0.0
      %1715 = vmatpush1.msra.mxu0 0.0
      %1716 = vmatprep.subr.mxu0 0.0
      %1717 = vmatpush1.msra.mxu0 0.0
      %1718 = vmatprep.subr.mxu0 0.0
      %1719 = vmatpush1.msra.mxu0 0.0
      %1720 = vmatprep.subr.mxu0 0.0
      %1721 = vmatpush1.msra.mxu0 0.0
      %1722 = vmatprep.subr.mxu0 0.0
      %1723 = vmatpush1.msra.mxu0 0.0
      %1724 = vmatprep.subr.mxu0 0.0
      %1725 = vmatpush1.msra.mxu0 0.0
      %1726 = vmatprep.subr.mxu0 0.0
      %1727 = vmatpush1.msra.mxu0 0.0
      %1728 = vmatprep.subr.mxu0 0.0
      %1729 = vmatpush1.msra.mxu0 0.0
      %1730 = vmatprep.subr.mxu0 0.0
      %1731 = vmatpush1.msra.mxu0 0.0
      %1732 = vmatprep.subr.mxu0 0.0
      %1733 = vmatpush1.msra.mxu0 0.0
      %1734 = vmatprep.subr.mxu0 0.0
      %1735 = vmatpush1.msra.mxu0 0.0
      %1736 = vmatprep.subr.mxu0 0.0
      %1737 = vmatpush1.msra.mxu0 0.0
      %1738 = vmatprep.subr.mxu0 0.0
      %1739 = vmatpush1.msra.mxu0 0.0
      %1740 = vmatprep.subr.mxu0 0.0
      %1741 = vmatpush1.msra.mxu0 0.0
      %1742 = vmatprep.subr.mxu0 0.0
      %1743 = vmatpush1.msra.mxu0 0.0
      %1744 = vmatprep.subr.mxu0 0.0
      %1745 = vmatpush1.msra.mxu0 0.0
      %1746 = vmatprep.subr.mxu0 0.0
      %1747 = vmatpush1.msra.mxu0 0.0
      %1748 = vmatprep.subr.mxu0 0.0
      %1749 = vmatpush1.msra.mxu0 0.0
      %1750 = vmatprep.subr.mxu0 0.0
      %1751 = vmatpush1.msra.mxu0 0.0
      %1752 = vmatprep.subr.mxu0 0.0
      %1753 = vmatpush1.msra.mxu0 0.0
      %1754 = vmatprep.subr.mxu0 0.0
      %1755 = vmatpush1.msra.mxu0 0.0
      %1756 = vmatprep.subr.mxu0 0.0
      %1757 = vmatpush1.msra.mxu0 0.0
      %1758 = vmatprep.subr.mxu0 0.0
      %1759 = vmatpush1.msra.mxu0 0.0
      %1760 = vmatprep.subr.mxu0 0.0
      %1761 = vmatpush1.msra.mxu0 0.0
      %1762 = vmatprep.subr.mxu0 0.0
      %1763 = vmatpush1.msra.mxu0 0.0
      %1764 = vmatprep.subr.mxu0 0.0
      %1765 = vmatpush1.msra.mxu0 0.0
      %1766 = vmatprep.subr.mxu0 0.0
      %1767 = vmatpush1.msra.mxu0 0.0
      %1768 = vmatprep.mubr.f32.mxu0 0.0
      %1769 = vmatmul.mubr.f32.gmra.mrb[0].mxu0 %v1623
      %v1770 = vpop.f32.mrb[0].mxu0
      %v1771 = vadd.f32 %v1606, %v1770
      %v1772 = vpop.f32.mrb[0].mxu0
      %v1773 = vadd.f32 %v1608, %v1772
      %1774 = vdwg.mxu0
      %v1775 = vld [vmem:[#allocation2] sm:$0xff]
      %v1776 = vld [vmem:[#allocation2 + $0x8] sm:$0xff]
      %s1777 = scalar_lea.vmem %s8, 16
      %v1778 = vld [vmem:[%s1777] sm:$0xff]
      %v1781 = vcombine.high %v1775, %v1775
      %v1782 = vcombine.high %v1776, %v1776
      %1783 = vrot.lane.b32.xlu0 %v1775, 81
      %v1784 = vpop.permute.xlu0 %1783
      %1785 = vrot.lane.b32.xlu0 %v1781, 81
      %v1786 = vpop.permute.xlu0 %1785
      %1787 = vrot.lane.b32.xlu0 %v1776, 81
      %v1788 = vpop.permute.xlu0 %1787
      %1789 = vrot.lane.b32.xlu0 %v1782, 81
      %v1790 = vpop.permute.xlu0 %1789
      %v1791 = vsel %vm751, %v1784, %v1786
      %v1792 = vsel %vm751, %v1786, %v1788
      %v1793 = vsel %vm751, %v1788, %v1790
      %v1795 = vsel %vm492, %v1778, 0
      %v1797 = vsel %vm502, %v1791, 0
      %v1799 = vsel %vm502, %v1792, 0
      %v1801 = vsel %vm502, %v1793, 0
      %v1803 = vsel %vm502, %v1790, 0
      %1805 = vmatprep.subr.mxu0 %v1799
      %1806 = vmatpush1.msra.mxu0 %v1797
      %1807 = vmatprep.subr.mxu0 0.0
      %1808 = vmatpush1.msra.mxu0 0.0
      %1809 = vmatprep.subr.mxu0 0.0
      %1810 = vmatpush1.msra.mxu0 0.0
      %1811 = vmatprep.subr.mxu0 0.0
      %1812 = vmatpush1.msra.mxu0 0.0
      %1813 = vmatprep.subr.mxu0 0.0
      %1814 = vmatpush1.msra.mxu0 0.0
      %1815 = vmatprep.subr.mxu0 0.0
      %1816 = vmatpush1.msra.mxu0 0.0
      %1817 = vmatprep.subr.mxu0 0.0
      %1818 = vmatpush1.msra.mxu0 0.0
      %1819 = vmatprep.subr.mxu0 0.0
      %1820 = vmatpush1.msra.mxu0 0.0
      %1821 = vmatprep.subr.mxu0 0.0
      %1822 = vmatpush1.msra.mxu0 0.0
      %1823 = vmatprep.subr.mxu0 0.0
      %1824 = vmatpush1.msra.mxu0 0.0
      %1825 = vmatprep.subr.mxu0 0.0
      %1826 = vmatpush1.msra.mxu0 0.0
      %1827 = vmatprep.subr.mxu0 0.0
      %1828 = vmatpush1.msra.mxu0 0.0
      %1829 = vmatprep.subr.mxu0 0.0
      %1830 = vmatpush1.msra.mxu0 0.0
      %1831 = vmatprep.subr.mxu0 0.0
      %1832 = vmatpush1.msra.mxu0 0.0
      %1833 = vmatprep.subr.mxu0 0.0
      %1834 = vmatpush1.msra.mxu0 0.0
      %1835 = vmatprep.subr.mxu0 0.0
      %1836 = vmatpush1.msra.mxu0 0.0
      %1837 = vmatprep.subr.mxu0 0.0
      %1838 = vmatpush1.msra.mxu0 0.0
      %1839 = vmatprep.subr.mxu0 0.0
      %1840 = vmatpush1.msra.mxu0 0.0
      %1841 = vmatprep.subr.mxu0 0.0
      %1842 = vmatpush1.msra.mxu0 0.0
      %1843 = vmatprep.subr.mxu0 0.0
      %1844 = vmatpush1.msra.mxu0 0.0
      %1845 = vmatprep.subr.mxu0 0.0
      %1846 = vmatpush1.msra.mxu0 0.0
      %1847 = vmatprep.subr.mxu0 0.0
      %1848 = vmatpush1.msra.mxu0 0.0
      %1849 = vmatprep.subr.mxu0 0.0
      %1850 = vmatpush1.msra.mxu0 0.0
      %1851 = vmatprep.subr.mxu0 0.0
      %1852 = vmatpush1.msra.mxu0 0.0
      %1853 = vmatprep.subr.mxu0 0.0
      %1854 = vmatpush1.msra.mxu0 0.0
      %1855 = vmatprep.subr.mxu0 0.0
      %1856 = vmatpush1.msra.mxu0 0.0
      %1857 = vmatprep.subr.mxu0 0.0
      %1858 = vmatpush1.msra.mxu0 0.0
      %1859 = vmatprep.subr.mxu0 0.0
      %1860 = vmatpush1.msra.mxu0 0.0
      %1861 = vmatprep.subr.mxu0 0.0
      %1862 = vmatpush1.msra.mxu0 0.0
      %1863 = vmatprep.subr.mxu0 0.0
      %1864 = vmatpush1.msra.mxu0 0.0
      %1865 = vmatprep.subr.mxu0 0.0
      %1866 = vmatpush1.msra.mxu0 0.0
      %1867 = vmatprep.subr.mxu0 0.0
      %1868 = vmatpush1.msra.mxu0 0.0
      %1869 = vmatprep.mubr.f32.mxu0 0.0
      %1870 = vmatmul.mubr.f32.gmra.mrb[0].mxu0 %v1795
      %v1871 = vpop.f32.mrb[0].mxu0
      %v1872 = vadd.f32 0.0, %v1871
      %v1873 = vpop.f32.mrb[0].mxu0
      %v1874 = vadd.f32 0.0, %v1873
      %1875 = vdwg.mxu0
      %1876 = vmatprep.subr.mxu0 %v1803
      %1877 = vmatpush1.msra.mxu0 %v1801
      %1878 = vmatprep.subr.mxu0 0.0
      %1879 = vmatpush1.msra.mxu0 0.0
      %1880 = vmatprep.subr.mxu0 0.0
      %1881 = vmatpush1.msra.mxu0 0.0
      %1882 = vmatprep.subr.mxu0 0.0
      %1883 = vmatpush1.msra.mxu0 0.0
      %1884 = vmatprep.subr.mxu0 0.0
      %1885 = vmatpush1.msra.mxu0 0.0
      %1886 = vmatprep.subr.mxu0 0.0
      %1887 = vmatpush1.msra.mxu0 0.0
      %1888 = vmatprep.subr.mxu0 0.0
      %1889 = vmatpush1.msra.mxu0 0.0
      %1890 = vmatprep.subr.mxu0 0.0
      %1891 = vmatpush1.msra.mxu0 0.0
      %1892 = vmatprep.subr.mxu0 0.0
      %1893 = vmatpush1.msra.mxu0 0.0
      %1894 = vmatprep.subr.mxu0 0.0
      %1895 = vmatpush1.msra.mxu0 0.0
      %1896 = vmatprep.subr.mxu0 0.0
      %1897 = vmatpush1.msra.mxu0 0.0
      %1898 = vmatprep.subr.mxu0 0.0
      %1899 = vmatpush1.msra.mxu0 0.0
      %1900 = vmatprep.subr.mxu0 0.0
      %1901 = vmatpush1.msra.mxu0 0.0
      %1902 = vmatprep.subr.mxu0 0.0
      %1903 = vmatpush1.msra.mxu0 0.0
      %1904 = vmatprep.subr.mxu0 0.0
      %1905 = vmatpush1.msra.mxu0 0.0
      %1906 = vmatprep.subr.mxu0 0.0
      %1907 = vmatpush1.msra.mxu0 0.0
      %1908 = vmatprep.subr.mxu0 0.0
      %1909 = vmatpush1.msra.mxu0 0.0
      %1910 = vmatprep.subr.mxu0 0.0
      %1911 = vmatpush1.msra.mxu0 0.0
      %1912 = vmatprep.subr.mxu0 0.0
      %1913 = vmatpush1.msra.mxu0 0.0
      %1914 = vmatprep.subr.mxu0 0.0
      %1915 = vmatpush1.msra.mxu0 0.0
      %1916 = vmatprep.subr.mxu0 0.0
      %1917 = vmatpush1.msra.mxu0 0.0
      %1918 = vmatprep.subr.mxu0 0.0
      %1919 = vmatpush1.msra.mxu0 0.0
      %1920 = vmatprep.subr.mxu0 0.0
      %1921 = vmatpush1.msra.mxu0 0.0
      %1922 = vmatprep.subr.mxu0 0.0
      %1923 = vmatpush1.msra.mxu0 0.0
      %1924 = vmatprep.subr.mxu0 0.0
      %1925 = vmatpush1.msra.mxu0 0.0
      %1926 = vmatprep.subr.mxu0 0.0
      %1927 = vmatpush1.msra.mxu0 0.0
      %1928 = vmatprep.subr.mxu0 0.0
      %1929 = vmatpush1.msra.mxu0 0.0
      %1930 = vmatprep.subr.mxu0 0.0
      %1931 = vmatpush1.msra.mxu0 0.0
      %1932 = vmatprep.subr.mxu0 0.0
      %1933 = vmatpush1.msra.mxu0 0.0
      %1934 = vmatprep.subr.mxu0 0.0
      %1935 = vmatpush1.msra.mxu0 0.0
      %1936 = vmatprep.subr.mxu0 0.0
      %1937 = vmatpush1.msra.mxu0 0.0
      %1938 = vmatprep.subr.mxu0 0.0
      %1939 = vmatpush1.msra.mxu0 0.0
      %1940 = vmatprep.mubr.f32.mxu0 0.0
      %1941 = vmatmul.mubr.f32.gmra.mrb[0].mxu0 %v1795
      %v1942 = vpop.f32.mrb[0].mxu0
      %v1943 = vadd.f32 0.0, %v1942
      %v1944 = vpop.f32.mrb[0].mxu0
      %v1945 = vadd.f32 0.0, %v1944
      %1946 = vdwg.mxu0
      %v1947 = vadd.f32 %v1700, %v1872
      %v1948 = vadd.f32 %v1702, %v1874
      %v1949 = vadd.f32 %v1771, %v1943
      %v1950 = vadd.f32 %v1773, %v1945
      %v1951 = vld [vmem:[%s9] sm:$0xff]
      %1953 = vset.pattern.permute.xlu0 0
      %1954 = vperm.xlu0 %1953, %v1951
      %v1955 = vpop.permute.xlu0 %1954
      %v1957 = vmul.f32 %v1947, %v1955
      %v1958 = vmul.f32 %v1948, %v1955
      %v1959 = vmul.f32 %v1949, %v1955
      %v1960 = vmul.f32 %v1950, %v1955
      %v1961 = vld [vmem:[%s10] sm:$0xff]
      %1963 = vset.pattern.permute.xlu0 0
      %1964 = vperm.xlu0 %1963, %v1961
      %v1965 = vpop.permute.xlu0 %1964
      %v1967 = vadd.f32 %v1957, %v1965
      %v1968 = vadd.f32 %v1958, %v1965
      %v1969 = vadd.f32 %v1959, %v1965
      %v1970 = vadd.f32 %v1960, %v1965
      %v1971 = vxor.u32 %v1967, 2147483648
      %v1972 = vxor.u32 %v1968, 2147483648
      %v1973 = vxor.u32 %v1969, 2147483648
      %v1974 = vxor.u32 %v1970, 2147483648
      %v1975 = vmul.f32 %v1971, 1.442695
      %v1976 = vpow.pop %v1975
      %v1977 = vmul.f32 %v1972, 1.442695
      %v1978 = vpow.pop %v1977
      %v1979 = vmul.f32 %v1973, 1.442695
      %v1980 = vpow.pop %v1979
      %v1981 = vmul.f32 %v1974, 1.442695
      %v1982 = vpow.pop %v1981
      %v1983 = vadd.f32 %v1976, 1.0
      %v1984 = vadd.f32 %v1978, 1.0
      %v1985 = vadd.f32 %v1980, 1.0
      %v1986 = vadd.f32 %v1982, 1.0
      %v1987 = vrcp.pop %v1983
      %v1988 = vmul.f32 1.0, %v1987
      %v1989 = vrcp.pop %v1984
      %v1990 = vmul.f32 1.0, %v1989
      %v1991 = vrcp.pop %v1985
      %v1992 = vmul.f32 1.0, %v1991
      %v1993 = vrcp.pop %v1986
      %v1994 = vmul.f32 1.0, %v1993
      %v1995 = vmul.f32 %v1967, %v1988
      %v1996 = vmul.f32 %v1968, %v1990
      %v1997 = vmul.f32 %v1969, %v1992
      %v1998 = vmul.f32 %v1970, %v1994
      %1999 = vst [vmem:[#allocation3 + $0x30] sm:$0xff] %v1995
      %2000 = vst [vmem:[#allocation3 + $0x38] sm:$0xff] %v1996
      %2001 = vst.msk [vmem:[#allocation3 + $0x40] sm:$0xff] %vm1413, %v1997
      %2006 = vrot.lane.b32.xlu0 %v1995, 63
      %v2007 = vpop.permute.xlu0 %2006
      %2008 = vrot.lane.b32.xlu0 %v1996, 63
      %v2009 = vpop.permute.xlu0 %2008
      %2010 = vrot.lane.b32.xlu0 %v1997, 63
      %v2011 = vpop.permute.xlu0 %2010
      %2012 = vrot.lane.b32.xlu0 %v1998, 63
      %v2013 = vpop.permute.xlu0 %2012
      %vm2014 = vcmask 515072
      %v2015 = vsel %vm2014, %v2007, %v2009
      %v2016 = vsel %vm2014, %v2009, %v2011
      %v2017 = vsel %vm2014, %v2011, %v2013
      %2021 = vst [vmem:[#allocation3 + $0x48] sm:$0xff] %v2015
      %2022 = vst [vmem:[#allocation3 + $0x50] sm:$0xff] %v2016
      %2023 = vst.msk [vmem:[#allocation3 + $0x58] sm:$0xff] %vm1413, %v2017
      %v2024 = vld [vmem:[%s11] sm:$0xff]
      %v2025 = vld [vmem:[#allocation3] sm:$0xff]
      %v2026 = vld [vmem:[#allocation3 + $0x8] sm:$0xff]
      %v2027 = vld [vmem:[#allocation3 + $0x10] sm:$0xff]
      %v2028 = vld [vmem:[#allocation3 + $0x18] sm:$0xff]
      %v2029 = vld [vmem:[#allocation3 + $0x20] sm:$0xff]
      %v2030 = vld [vmem:[#allocation3 + $0x28] sm:$0xff]
      %v2031 = vld [vmem:[#allocation3 + $0x30] sm:$0xff]
      %v2032 = vld [vmem:[#allocation3 + $0x38] sm:$0xff]
      %v2033 = vld [vmem:[#allocation3 + $0x40] sm:$0xff]
      %v2034 = vld [vmem:[#allocation3 + $0x48] sm:$0xff]
      %v2035 = vld [vmem:[#allocation3 + $0x50] sm:$0xff]
      %v2036 = vld [vmem:[#allocation3 + $0x58] sm:$0xff]
      %s2037 = scalar_lea.vmem %s11, 8
      %v2038 = vld [vmem:[%s2037] sm:$0xff]
      %2051 = vrot.lane.b32.xlu0 %v2025, 127
      %v2052 = vpop.permute.xlu0 %2051
      %2053 = vrot.lane.b32.xlu0 %v2026, 127
      %v2054 = vpop.permute.xlu0 %2053
      %2055 = vrot.lane.b32.xlu0 %v2027, 127
      %v2056 = vpop.permute.xlu0 %2055
      %2057 = vrot.lane.b32.xlu0 %v2028, 127
      %v2058 = vpop.permute.xlu0 %2057
      %2059 = vrot.lane.b32.xlu0 %v2029, 127
      %v2060 = vpop.permute.xlu0 %2059
      %2061 = vrot.lane.b32.xlu0 %v2030, 127
      %v2062 = vpop.permute.xlu0 %2061
      %2063 = vrot.lane.b32.xlu0 %v2031, 127
      %v2064 = vpop.permute.xlu0 %2063
      %2065 = vrot.lane.b32.xlu0 %v2032, 127
      %v2066 = vpop.permute.xlu0 %2065
      %2067 = vrot.lane.b32.xlu0 %v2033, 127
      %v2068 = vpop.permute.xlu0 %2067
      %2069 = vrot.lane.b32.xlu0 %v2034, 127
      %v2070 = vpop.permute.xlu0 %2069
      %2071 = vrot.lane.b32.xlu0 %v2035, 127
      %v2072 = vpop.permute.xlu0 %2071
      %2073 = vrot.lane.b32.xlu0 %v2036, 127
      %v2074 = vpop.permute.xlu0 %2073
      %vm2075 = vcmask 1039360
      %v2076 = vsel %vm2075, %v2052, %v2054
      %v2077 = vsel %vm2075, %v2054, %v2056
      %v2078 = vsel %vm2075, %v2058, %v2060
      %v2079 = vsel %vm2075, %v2060, %v2062
      %v2080 = vsel %vm2075, %v2064, %v2066
      %v2081 = vsel %vm2075, %v2066, %v2068
      %v2082 = vsel %vm2075, %v2070, %v2072
      %v2083 = vsel %vm2075, %v2072, %v2074
      %vm2096 = vcmask 261120
      %v2098 = vsel %vm2096, %v2038, 0
      %2100 = vmatprep.subr.mxu0 %v2077
      %2101 = vmatpush1.msra.mxu0 %v2076
      %2102 = vmatprep.subr.mxu0 %v2079
      %2103 = vmatpush1.msra.mxu0 %v2078
      %2104 = vmatprep.subr.mxu0 %v2081
      %2105 = vmatpush1.msra.mxu0 %v2080
      %2106 = vmatprep.subr.mxu0 %v2083
      %2107 = vmatpush1.msra.mxu0 %v2082
      %2108 = vmatprep.subr.mxu0 0.0
      %2109 = vmatpush1.msra.mxu0 0.0
      %2110 = vmatprep.subr.mxu0 0.0
      %2111 = vmatpush1.msra.mxu0 0.0
      %2112 = vmatprep.subr.mxu0 0.0
      %2113 = vmatpush1.msra.mxu0 0.0
      %2114 = vmatprep.subr.mxu0 0.0
      %2115 = vmatpush1.msra.mxu0 0.0
      %2116 = vmatprep.subr.mxu0 0.0
      %2117 = vmatpush1.msra.mxu0 0.0
      %2118 = vmatprep.subr.mxu0 0.0
      %2119 = vmatpush1.msra.mxu0 0.0
      %2120 = vmatprep.subr.mxu0 0.0
      %2121 = vmatpush1.msra.mxu0 0.0
      %2122 = vmatprep.subr.mxu0 0.0
      %2123 = vmatpush1.msra.mxu0 0.0
      %2124 = vmatprep.subr.mxu0 0.0
      %2125 = vmatpush1.msra.mxu0 0.0
      %2126 = vmatprep.subr.mxu0 0.0
      %2127 = vmatpush1.msra.mxu0 0.0
      %2128 = vmatprep.subr.mxu0 0.0
      %2129 = vmatpush1.msra.mxu0 0.0
      %2130 = vmatprep.subr.mxu0 0.0
      %2131 = vmatpush1.msra.mxu0 0.0
      %2132 = vmatprep.subr.mxu0 0.0
      %2133 = vmatpush1.msra.mxu0 0.0
      %2134 = vmatprep.subr.mxu0 0.0
      %2135 = vmatpush1.msra.mxu0 0.0
      %2136 = vmatprep.subr.mxu0 0.0
      %2137 = vmatpush1.msra.mxu0 0.0
      %2138 = vmatprep.subr.mxu0 0.0
      %2139 = vmatpush1.msra.mxu0 0.0
      %2140 = vmatprep.subr.mxu0 0.0
      %2141 = vmatpush1.msra.mxu0 0.0
      %2142 = vmatprep.subr.mxu0 0.0
      %2143 = vmatpush1.msra.mxu0 0.0
      %2144 = vmatprep.subr.mxu0 0.0
      %2145 = vmatpush1.msra.mxu0 0.0
      %2146 = vmatprep.subr.mxu0 0.0
      %2147 = vmatpush1.msra.mxu0 0.0
      %2148 = vmatprep.subr.mxu0 0.0
      %2149 = vmatpush1.msra.mxu0 0.0
      %2150 = vmatprep.subr.mxu0 0.0
      %2151 = vmatpush1.msra.mxu0 0.0
      %2152 = vmatprep.subr.mxu0 0.0
      %2153 = vmatpush1.msra.mxu0 0.0
      %2154 = vmatprep.subr.mxu0 0.0
      %2155 = vmatpush1.msra.mxu0 0.0
      %2156 = vmatprep.subr.mxu0 0.0
      %2157 = vmatpush1.msra.mxu0 0.0
      %2158 = vmatprep.subr.mxu0 0.0
      %2159 = vmatpush1.msra.mxu0 0.0
      %2160 = vmatprep.subr.mxu0 0.0
      %2161 = vmatpush1.msra.mxu0 0.0
      %2162 = vmatprep.subr.mxu0 0.0
      %2163 = vmatpush1.msra.mxu0 0.0
      %2164 = vmatprep.mubr.f32.mxu0 0.0
      %2165 = vmatmul.mubr.f32.gmra.mrb[0].mxu0 %v2098
      %v2166 = vpop.f32.mrb[0].mxu0
      %v2167 = vadd.f32 0.0, %v2166
      %v2168 = vpop.f32.mrb[0].mxu0
      %v2169 = vadd.f32 0.0, %v2168
      %2170 = vdwg.mxu0
      %2171 = vmatprep.subr.mxu0 0.0
      %2172 = vmatpush1.msra.mxu0 %v2056
      %2173 = vmatprep.subr.mxu0 0.0
      %2174 = vmatpush1.msra.mxu0 %v2062
      %2175 = vmatprep.subr.mxu0 0.0
      %2176 = vmatpush1.msra.mxu0 %v2068
      %2177 = vmatprep.subr.mxu0 0.0
      %2178 = vmatpush1.msra.mxu0 %v2074
      %2179 = vmatprep.subr.mxu0 0.0
      %2180 = vmatpush1.msra.mxu0 0.0
      %2181 = vmatprep.subr.mxu0 0.0
      %2182 = vmatpush1.msra.mxu0 0.0
      %2183 = vmatprep.subr.mxu0 0.0
      %2184 = vmatpush1.msra.mxu0 0.0
      %2185 = vmatprep.subr.mxu0 0.0
      %2186 = vmatpush1.msra.mxu0 0.0
      %2187 = vmatprep.subr.mxu0 0.0
      %2188 = vmatpush1.msra.mxu0 0.0
      %2189 = vmatprep.subr.mxu0 0.0
      %2190 = vmatpush1.msra.mxu0 0.0
      %2191 = vmatprep.subr.mxu0 0.0
      %2192 = vmatpush1.msra.mxu0 0.0
      %2193 = vmatprep.subr.mxu0 0.0
      %2194 = vmatpush1.msra.mxu0 0.0
      %2195 = vmatprep.subr.mxu0 0.0
      %2196 = vmatpush1.msra.mxu0 0.0
      %2197 = vmatprep.subr.mxu0 0.0
      %2198 = vmatpush1.msra.mxu0 0.0
      %2199 = vmatprep.subr.mxu0 0.0
      %2200 = vmatpush1.msra.mxu0 0.0
      %2201 = vmatprep.subr.mxu0 0.0
      %2202 = vmatpush1.msra.mxu0 0.0
      %2203 = vmatprep.subr.mxu0 0.0
      %2204 = vmatpush1.msra.mxu0 0.0
      %2205 = vmatprep.subr.mxu0 0.0
      %2206 = vmatpush1.msra.mxu0 0.0
      %2207 = vmatprep.subr.mxu0 0.0
      %2208 = vmatpush1.msra.mxu0 0.0
      %2209 = vmatprep.subr.mxu0 0.0
      %2210 = vmatpush1.msra.mxu0 0.0
      %2211 = vmatprep.subr.mxu0 0.0
      %2212 = vmatpush1.msra.mxu0 0.0
      %2213 = vmatprep.subr.mxu0 0.0
      %2214 = vmatpush1.msra.mxu0 0.0
      %2215 = vmatprep.subr.mxu0 0.0
      %2216 = vmatpush1.msra.mxu0 0.0
      %2217 = vmatprep.subr.mxu0 0.0
      %2218 = vmatpush1.msra.mxu0 0.0
      %2219 = vmatprep.subr.mxu0 0.0
      %2220 = vmatpush1.msra.mxu0 0.0
      %2221 = vmatprep.subr.mxu0 0.0
      %2222 = vmatpush1.msra.mxu0 0.0
      %2223 = vmatprep.subr.mxu0 0.0
      %2224 = vmatpush1.msra.mxu0 0.0
      %2225 = vmatprep.subr.mxu0 0.0
      %2226 = vmatpush1.msra.mxu0 0.0
      %2227 = vmatprep.subr.mxu0 0.0
      %2228 = vmatpush1.msra.mxu0 0.0
      %2229 = vmatprep.subr.mxu0 0.0
      %2230 = vmatpush1.msra.mxu0 0.0
      %2231 = vmatprep.subr.mxu0 0.0
      %2232 = vmatpush1.msra.mxu0 0.0
      %2233 = vmatprep.subr.mxu0 0.0
      %2234 = vmatpush1.msra.mxu0 0.0
      %2235 = vmatprep.mubr.f32.mxu0 0.0
      %2236 = vmatmul.mubr.f32.gmra.mrb[0].mxu0 %v2098
      %v2237 = vpop.f32.mrb[0].mxu0
      %v2238 = vadd.f32 0.0, %v2237
      %v2239 = vpop.f32.mrb[0].mxu0
      %2240 = vdwg.mxu0
      %v2242 = vsel %vm2096, %v2024, 0
      %2244 = vmatprep.subr.mxu0 %v2026
      %2245 = vmatpush1.msra.mxu0 %v2025
      %2246 = vmatprep.subr.mxu0 %v2029
      %2247 = vmatpush1.msra.mxu0 %v2028
      %2248 = vmatprep.subr.mxu0 %v2032
      %2249 = vmatpush1.msra.mxu0 %v2031
      %2250 = vmatprep.subr.mxu0 %v2035
      %2251 = vmatpush1.msra.mxu0 %v2034
      %2252 = vmatprep.subr.mxu0 0.0
      %2253 = vmatpush1.msra.mxu0 0.0
      %2254 = vmatprep.subr.mxu0 0.0
      %2255 = vmatpush1.msra.mxu0 0.0
      %2256 = vmatprep.subr.mxu0 0.0
      %2257 = vmatpush1.msra.mxu0 0.0
      %2258 = vmatprep.subr.mxu0 0.0
      %2259 = vmatpush1.msra.mxu0 0.0
      %2260 = vmatprep.subr.mxu0 0.0
      %2261 = vmatpush1.msra.mxu0 0.0
      %2262 = vmatprep.subr.mxu0 0.0
      %2263 = vmatpush1.msra.mxu0 0.0
      %2264 = vmatprep.subr.mxu0 0.0
      %2265 = vmatpush1.msra.mxu0 0.0
      %2266 = vmatprep.subr.mxu0 0.0
      %2267 = vmatpush1.msra.mxu0 0.0
      %2268 = vmatprep.subr.mxu0 0.0
      %2269 = vmatpush1.msra.mxu0 0.0
      %2270 = vmatprep.subr.mxu0 0.0
      %2271 = vmatpush1.msra.mxu0 0.0
      %2272 = vmatprep.subr.mxu0 0.0
      %2273 = vmatpush1.msra.mxu0 0.0
      %2274 = vmatprep.subr.mxu0 0.0
      %2275 = vmatpush1.msra.mxu0 0.0
      %2276 = vmatprep.subr.mxu0 0.0
      %2277 = vmatpush1.msra.mxu0 0.0
      %2278 = vmatprep.subr.mxu0 0.0
      %2279 = vmatpush1.msra.mxu0 0.0
      %2280 = vmatprep.subr.mxu0 0.0
      %2281 = vmatpush1.msra.mxu0 0.0
      %2282 = vmatprep.subr.mxu0 0.0
      %2283 = vmatpush1.msra.mxu0 0.0
      %2284 = vmatprep.subr.mxu0 0.0
      %2285 = vmatpush1.msra.mxu0 0.0
      %2286 = vmatprep.subr.mxu0 0.0
      %2287 = vmatpush1.msra.mxu0 0.0
      %2288 = vmatprep.subr.mxu0 0.0
      %2289 = vmatpush1.msra.mxu0 0.0
      %2290 = vmatprep.subr.mxu0 0.0
      %2291 = vmatpush1.msra.mxu0 0.0
      %2292 = vmatprep.subr.mxu0 0.0
      %2293 = vmatpush1.msra.mxu0 0.0
      %2294 = vmatprep.subr.mxu0 0.0
      %2295 = vmatpush1.msra.mxu0 0.0
      %2296 = vmatprep.subr.mxu0 0.0
      %2297 = vmatpush1.msra.mxu0 0.0
      %2298 = vmatprep.subr.mxu0 0.0
      %2299 = vmatpush1.msra.mxu0 0.0
      %2300 = vmatprep.subr.mxu0 0.0
      %2301 = vmatpush1.msra.mxu0 0.0
      %2302 = vmatprep.subr.mxu0 0.0
      %2303 = vmatpush1.msra.mxu0 0.0
      %2304 = vmatprep.subr.mxu0 0.0
      %2305 = vmatpush1.msra.mxu0 0.0
      %2306 = vmatprep.subr.mxu0 0.0
      %2307 = vmatpush1.msra.mxu0 0.0
      %2308 = vmatprep.mubr.f32.mxu0 0.0
      %2309 = vmatmul.mubr.f32.gmra.mrb[0].mxu0 %v2242
      %v2310 = vpop.f32.mrb[0].mxu0
      %v2311 = vadd.f32 %v2167, %v2310
      %v2312 = vpop.f32.mrb[0].mxu0
      %v2313 = vadd.f32 %v2169, %v2312
      %2314 = vdwg.mxu0
      %2315 = vmatprep.subr.mxu0 0.0
      %2316 = vmatpush1.msra.mxu0 %v2027
      %2317 = vmatprep.subr.mxu0 0.0
      %2318 = vmatpush1.msra.mxu0 %v2030
      %2319 = vmatprep.subr.mxu0 0.0
      %2320 = vmatpush1.msra.mxu0 %v2033
      %2321 = vmatprep.subr.mxu0 0.0
      %2322 = vmatpush1.msra.mxu0 %v2036
      %2323 = vmatprep.subr.mxu0 0.0
      %2324 = vmatpush1.msra.mxu0 0.0
      %2325 = vmatprep.subr.mxu0 0.0
      %2326 = vmatpush1.msra.mxu0 0.0
      %2327 = vmatprep.subr.mxu0 0.0
      %2328 = vmatpush1.msra.mxu0 0.0
      %2329 = vmatprep.subr.mxu0 0.0
      %2330 = vmatpush1.msra.mxu0 0.0
      %2331 = vmatprep.subr.mxu0 0.0
      %2332 = vmatpush1.msra.mxu0 0.0
      %2333 = vmatprep.subr.mxu0 0.0
      %2334 = vmatpush1.msra.mxu0 0.0
      %2335 = vmatprep.subr.mxu0 0.0
      %2336 = vmatpush1.msra.mxu0 0.0
      %2337 = vmatprep.subr.mxu0 0.0
      %2338 = vmatpush1.msra.mxu0 0.0
      %2339 = vmatprep.subr.mxu0 0.0
      %2340 = vmatpush1.msra.mxu0 0.0
      %2341 = vmatprep.subr.mxu0 0.0
      %2342 = vmatpush1.msra.mxu0 0.0
      %2343 = vmatprep.subr.mxu0 0.0
      %2344 = vmatpush1.msra.mxu0 0.0
      %2345 = vmatprep.subr.mxu0 0.0
      %2346 = vmatpush1.msra.mxu0 0.0
      %2347 = vmatprep.subr.mxu0 0.0
      %2348 = vmatpush1.msra.mxu0 0.0
      %2349 = vmatprep.subr.mxu0 0.0
      %2350 = vmatpush1.msra.mxu0 0.0
      %2351 = vmatprep.subr.mxu0 0.0
      %2352 = vmatpush1.msra.mxu0 0.0
      %2353 = vmatprep.subr.mxu0 0.0
      %2354 = vmatpush1.msra.mxu0 0.0
      %2355 = vmatprep.subr.mxu0 0.0
      %2356 = vmatpush1.msra.mxu0 0.0
      %2357 = vmatprep.subr.mxu0 0.0
      %2358 = vmatpush1.msra.mxu0 0.0
      %2359 = vmatprep.subr.mxu0 0.0
      %2360 = vmatpush1.msra.mxu0 0.0
      %2361 = vmatprep.subr.mxu0 0.0
      %2362 = vmatpush1.msra.mxu0 0.0
      %2363 = vmatprep.subr.mxu0 0.0
      %2364 = vmatpush1.msra.mxu0 0.0
      %2365 = vmatprep.subr.mxu0 0.0
      %2366 = vmatpush1.msra.mxu0 0.0
      %2367 = vmatprep.subr.mxu0 0.0
      %2368 = vmatpush1.msra.mxu0 0.0
      %2369 = vmatprep.subr.mxu0 0.0
      %2370 = vmatpush1.msra.mxu0 0.0
      %2371 = vmatprep.subr.mxu0 0.0
      %2372 = vmatpush1.msra.mxu0 0.0
      %2373 = vmatprep.subr.mxu0 0.0
      %2374 = vmatpush1.msra.mxu0 0.0
      %2375 = vmatprep.subr.mxu0 0.0
      %2376 = vmatpush1.msra.mxu0 0.0
      %2377 = vmatprep.subr.mxu0 0.0
      %2378 = vmatpush1.msra.mxu0 0.0
      %2379 = vmatprep.mubr.f32.mxu0 0.0
      %2380 = vmatmul.mubr.f32.gmra.mrb[0].mxu0 %v2242
      %v2381 = vpop.f32.mrb[0].mxu0
      %v2382 = vadd.f32 %v2238, %v2381
      %v2383 = vpop.f32.mrb[0].mxu0
      %2384 = vdwg.mxu0
      %s2385 = scalar_lea.vmem %s11, 16
      %v2386 = vld [vmem:[%s2385] sm:$0xff]
      %2387 = vrot.lane.b32.xlu0 %v2025, 106
      %v2388 = vpop.permute.xlu0 %2387
      %2389 = vrot.lane.b32.xlu0 %v2026, 106
      %v2390 = vpop.permute.xlu0 %2389
      %2391 = vrot.lane.b32.xlu0 %v2027, 106
      %v2392 = vpop.permute.xlu0 %2391
      %2393 = vrot.lane.b32.xlu0 %v2028, 106
      %v2394 = vpop.permute.xlu0 %2393
      %2395 = vrot.lane.b32.xlu0 %v2029, 106
      %v2396 = vpop.permute.xlu0 %2395
      %2397 = vrot.lane.b32.xlu0 %v2030, 106
      %v2398 = vpop.permute.xlu0 %2397
      %2399 = vrot.lane.b32.xlu0 %v2031, 106
      %v2400 = vpop.permute.xlu0 %2399
      %2401 = vrot.lane.b32.xlu0 %v2032, 106
      %v2402 = vpop.permute.xlu0 %2401
      %2403 = vrot.lane.b32.xlu0 %v2033, 106
      %v2404 = vpop.permute.xlu0 %2403
      %2405 = vrot.lane.b32.xlu0 %v2034, 106
      %v2406 = vpop.permute.xlu0 %2405
      %2407 = vrot.lane.b32.xlu0 %v2035, 106
      %v2408 = vpop.permute.xlu0 %2407
      %2409 = vrot.lane.b32.xlu0 %v2036, 106
      %v2410 = vpop.permute.xlu0 %2409
      %vm2411 = vcmask 867328
      %v2412 = vsel %vm2411, %v2388, %v2390
      %v2413 = vsel %vm2411, %v2390, %v2392
      %v2414 = vsel %vm2411, %v2394, %v2396
      %v2415 = vsel %vm2411, %v2396, %v2398
      %v2416 = vsel %vm2411, %v2400, %v2402
      %v2417 = vsel %vm2411, %v2402, %v2404
      %v2418 = vsel %vm2411, %v2406, %v2408
      %v2419 = vsel %vm2411, %v2408, %v2410
      %v2433 = vsel %vm2096, %v2386, 0
      %2435 = vmatprep.subr.mxu0 %v2413
      %2436 = vmatpush1.msra.mxu0 %v2412
      %2437 = vmatprep.subr.mxu0 %v2415
      %2438 = vmatpush1.msra.mxu0 %v2414
      %2439 = vmatprep.subr.mxu0 %v2417
      %2440 = vmatpush1.msra.mxu0 %v2416
      %2441 = vmatprep.subr.mxu0 %v2419
      %2442 = vmatpush1.msra.mxu0 %v2418
      %2443 = vmatprep.subr.mxu0 0.0
      %2444 = vmatpush1.msra.mxu0 0.0
      %2445 = vmatprep.subr.mxu0 0.0
      %2446 = vmatpush1.msra.mxu0 0.0
      %2447 = vmatprep.subr.mxu0 0.0
      %2448 = vmatpush1.msra.mxu0 0.0
      %2449 = vmatprep.subr.mxu0 0.0
      %2450 = vmatpush1.msra.mxu0 0.0
      %2451 = vmatprep.subr.mxu0 0.0
      %2452 = vmatpush1.msra.mxu0 0.0
      %2453 = vmatprep.subr.mxu0 0.0
      %2454 = vmatpush1.msra.mxu0 0.0
      %2455 = vmatprep.subr.mxu0 0.0
      %2456 = vmatpush1.msra.mxu0 0.0
      %2457 = vmatprep.subr.mxu0 0.0
      %2458 = vmatpush1.msra.mxu0 0.0
      %2459 = vmatprep.subr.mxu0 0.0
      %2460 = vmatpush1.msra.mxu0 0.0
      %2461 = vmatprep.subr.mxu0 0.0
      %2462 = vmatpush1.msra.mxu0 0.0
      %2463 = vmatprep.subr.mxu0 0.0
      %2464 = vmatpush1.msra.mxu0 0.0
      %2465 = vmatprep.subr.mxu0 0.0
      %2466 = vmatpush1.msra.mxu0 0.0
      %2467 = vmatprep.subr.mxu0 0.0
      %2468 = vmatpush1.msra.mxu0 0.0
      %2469 = vmatprep.subr.mxu0 0.0
      %2470 = vmatpush1.msra.mxu0 0.0
      %2471 = vmatprep.subr.mxu0 0.0
      %2472 = vmatpush1.msra.mxu0 0.0
      %2473 = vmatprep.subr.mxu0 0.0
      %2474 = vmatpush1.msra.mxu0 0.0
      %2475 = vmatprep.subr.mxu0 0.0
      %2476 = vmatpush1.msra.mxu0 0.0
      %2477 = vmatprep.subr.mxu0 0.0
      %2478 = vmatpush1.msra.mxu0 0.0
      %2479 = vmatprep.subr.mxu0 0.0
      %2480 = vmatpush1.msra.mxu0 0.0
      %2481 = vmatprep.subr.mxu0 0.0
      %2482 = vmatpush1.msra.mxu0 0.0
      %2483 = vmatprep.subr.mxu0 0.0
      %2484 = vmatpush1.msra.mxu0 0.0
      %2485 = vmatprep.subr.mxu0 0.0
      %2486 = vmatpush1.msra.mxu0 0.0
      %2487 = vmatprep.subr.mxu0 0.0
      %2488 = vmatpush1.msra.mxu0 0.0
      %2489 = vmatprep.subr.mxu0 0.0
      %2490 = vmatpush1.msra.mxu0 0.0
      %2491 = vmatprep.subr.mxu0 0.0
      %2492 = vmatpush1.msra.mxu0 0.0
      %2493 = vmatprep.subr.mxu0 0.0
      %2494 = vmatpush1.msra.mxu0 0.0
      %2495 = vmatprep.subr.mxu0 0.0
      %2496 = vmatpush1.msra.mxu0 0.0
      %2497 = vmatprep.subr.mxu0 0.0
      %2498 = vmatpush1.msra.mxu0 0.0
      %2499 = vmatprep.mubr.f32.mxu0 0.0
      %2500 = vmatmul.mubr.f32.gmra.mrb[0].mxu0 %v2433
      %v2501 = vpop.f32.mrb[0].mxu0
      %v2502 = vadd.f32 0.0, %v2501
      %v2503 = vpop.f32.mrb[0].mxu0
      %v2504 = vadd.f32 0.0, %v2503
      %2505 = vdwg.mxu0
      %2506 = vmatprep.subr.mxu0 0.0
      %2507 = vmatpush1.msra.mxu0 %v2392
      %2508 = vmatprep.subr.mxu0 0.0
      %2509 = vmatpush1.msra.mxu0 %v2398
      %2510 = vmatprep.subr.mxu0 0.0
      %2511 = vmatpush1.msra.mxu0 %v2404
      %2512 = vmatprep.subr.mxu0 0.0
      %2513 = vmatpush1.msra.mxu0 %v2410
      %2514 = vmatprep.subr.mxu0 0.0
      %2515 = vmatpush1.msra.mxu0 0.0
      %2516 = vmatprep.subr.mxu0 0.0
      %2517 = vmatpush1.msra.mxu0 0.0
      %2518 = vmatprep.subr.mxu0 0.0
      %2519 = vmatpush1.msra.mxu0 0.0
      %2520 = vmatprep.subr.mxu0 0.0
      %2521 = vmatpush1.msra.mxu0 0.0
      %2522 = vmatprep.subr.mxu0 0.0
      %2523 = vmatpush1.msra.mxu0 0.0
      %2524 = vmatprep.subr.mxu0 0.0
      %2525 = vmatpush1.msra.mxu0 0.0
      %2526 = vmatprep.subr.mxu0 0.0
      %2527 = vmatpush1.msra.mxu0 0.0
      %2528 = vmatprep.subr.mxu0 0.0
      %2529 = vmatpush1.msra.mxu0 0.0
      %2530 = vmatprep.subr.mxu0 0.0
      %2531 = vmatpush1.msra.mxu0 0.0
      %2532 = vmatprep.subr.mxu0 0.0
      %2533 = vmatpush1.msra.mxu0 0.0
      %2534 = vmatprep.subr.mxu0 0.0
      %2535 = vmatpush1.msra.mxu0 0.0
      %2536 = vmatprep.subr.mxu0 0.0
      %2537 = vmatpush1.msra.mxu0 0.0
      %2538 = vmatprep.subr.mxu0 0.0
      %2539 = vmatpush1.msra.mxu0 0.0
      %2540 = vmatprep.subr.mxu0 0.0
      %2541 = vmatpush1.msra.mxu0 0.0
      %2542 = vmatprep.subr.mxu0 0.0
      %2543 = vmatpush1.msra.mxu0 0.0
      %2544 = vmatprep.subr.mxu0 0.0
      %2545 = vmatpush1.msra.mxu0 0.0
      %2546 = vmatprep.subr.mxu0 0.0
      %2547 = vmatpush1.msra.mxu0 0.0
      %2548 = vmatprep.subr.mxu0 0.0
      %2549 = vmatpush1.msra.mxu0 0.0
      %2550 = vmatprep.subr.mxu0 0.0
      %2551 = vmatpush1.msra.mxu0 0.0
      %2552 = vmatprep.subr.mxu0 0.0
      %2553 = vmatpush1.msra.mxu0 0.0
      %2554 = vmatprep.subr.mxu0 0.0
      %2555 = vmatpush1.msra.mxu0 0.0
      %2556 = vmatprep.subr.mxu0 0.0
      %2557 = vmatpush1.msra.mxu0 0.0
      %2558 = vmatprep.subr.mxu0 0.0
      %2559 = vmatpush1.msra.mxu0 0.0
      %2560 = vmatprep.subr.mxu0 0.0
      %2561 = vmatpush1.msra.mxu0 0.0
      %2562 = vmatprep.subr.mxu0 0.0
      %2563 = vmatpush1.msra.mxu0 0.0
      %2564 = vmatprep.subr.mxu0 0.0
      %2565 = vmatpush1.msra.mxu0 0.0
      %2566 = vmatprep.subr.mxu0 0.0
      %2567 = vmatpush1.msra.mxu0 0.0
      %2568 = vmatprep.subr.mxu0 0.0
      %2569 = vmatpush1.msra.mxu0 0.0
      %2570 = vmatprep.mubr.f32.mxu0 0.0
      %2571 = vmatmul.mubr.f32.gmra.mrb[0].mxu0 %v2433
      %v2572 = vpop.f32.mrb[0].mxu0
      %v2573 = vadd.f32 0.0, %v2572
      %v2574 = vpop.f32.mrb[0].mxu0
      %2575 = vdwg.mxu0
      %v2576 = vadd.f32 %v2311, %v2502
      %v2577 = vadd.f32 %v2313, %v2504
      %v2578 = vadd.f32 %v2382, %v2573
      %s2579 = scalar_lea.vmem %s11, 24
      %v2580 = vld [vmem:[%s2579] sm:$0xff]
      %2581 = vrot.lane.b32.xlu0 %v2025, 105
      %v2582 = vpop.permute.xlu0 %2581
      %2583 = vrot.lane.b32.xlu0 %v2026, 105
      %v2584 = vpop.permute.xlu0 %2583
      %2585 = vrot.lane.b32.xlu0 %v2027, 105
      %v2586 = vpop.permute.xlu0 %2585
      %2587 = vrot.lane.b32.xlu0 %v2028, 105
      %v2588 = vpop.permute.xlu0 %2587
      %2589 = vrot.lane.b32.xlu0 %v2029, 105
      %v2590 = vpop.permute.xlu0 %2589
      %2591 = vrot.lane.b32.xlu0 %v2030, 105
      %v2592 = vpop.permute.xlu0 %2591
      %2593 = vrot.lane.b32.xlu0 %v2031, 105
      %v2594 = vpop.permute.xlu0 %2593
      %2595 = vrot.lane.b32.xlu0 %v2032, 105
      %v2596 = vpop.permute.xlu0 %2595
      %2597 = vrot.lane.b32.xlu0 %v2033, 105
      %v2598 = vpop.permute.xlu0 %2597
      %2599 = vrot.lane.b32.xlu0 %v2034, 105
      %v2600 = vpop.permute.xlu0 %2599
      %2601 = vrot.lane.b32.xlu0 %v2035, 105
      %v2602 = vpop.permute.xlu0 %2601
      %2603 = vrot.lane.b32.xlu0 %v2036, 105
      %v2604 = vpop.permute.xlu0 %2603
      %vm2605 = vcmask 859136
      %v2606 = vsel %vm2605, %v2582, %v2584
      %v2607 = vsel %vm2605, %v2584, %v2586
      %v2608 = vsel %vm2605, %v2588, %v2590
      %v2609 = vsel %vm2605, %v2590, %v2592
      %v2610 = vsel %vm2605, %v2594, %v2596
      %v2611 = vsel %vm2605, %v2596, %v2598
      %v2612 = vsel %vm2605, %v2600, %v2602
      %v2613 = vsel %vm2605, %v2602, %v2604
      %v2627 = vsel %vm2096, %v2580, 0
      %2629 = vmatprep.subr.mxu0 %v2607
      %2630 = vmatpush1.msra.mxu0 %v2606
      %2631 = vmatprep.subr.mxu0 %v2609
      %2632 = vmatpush1.msra.mxu0 %v2608
      %2633 = vmatprep.subr.mxu0 %v2611
      %2634 = vmatpush1.msra.mxu0 %v2610
      %2635 = vmatprep.subr.mxu0 %v2613
      %2636 = vmatpush1.msra.mxu0 %v2612
      %2637 = vmatprep.subr.mxu0 0.0
      %2638 = vmatpush1.msra.mxu0 0.0
      %2639 = vmatprep.subr.mxu0 0.0
      %2640 = vmatpush1.msra.mxu0 0.0
      %2641 = vmatprep.subr.mxu0 0.0
      %2642 = vmatpush1.msra.mxu0 0.0
      %2643 = vmatprep.subr.mxu0 0.0
      %2644 = vmatpush1.msra.mxu0 0.0
      %2645 = vmatprep.subr.mxu0 0.0
      %2646 = vmatpush1.msra.mxu0 0.0
      %2647 = vmatprep.subr.mxu0 0.0
      %2648 = vmatpush1.msra.mxu0 0.0
      %2649 = vmatprep.subr.mxu0 0.0
      %2650 = vmatpush1.msra.mxu0 0.0
      %2651 = vmatprep.subr.mxu0 0.0
      %2652 = vmatpush1.msra.mxu0 0.0
      %2653 = vmatprep.subr.mxu0 0.0
      %2654 = vmatpush1.msra.mxu0 0.0
      %2655 = vmatprep.subr.mxu0 0.0
      %2656 = vmatpush1.msra.mxu0 0.0
      %2657 = vmatprep.subr.mxu0 0.0
      %2658 = vmatpush1.msra.mxu0 0.0
      %2659 = vmatprep.subr.mxu0 0.0
      %2660 = vmatpush1.msra.mxu0 0.0
      %2661 = vmatprep.subr.mxu0 0.0
      %2662 = vmatpush1.msra.mxu0 0.0
      %2663 = vmatprep.subr.mxu0 0.0
      %2664 = vmatpush1.msra.mxu0 0.0
      %2665 = vmatprep.subr.mxu0 0.0
      %2666 = vmatpush1.msra.mxu0 0.0
      %2667 = vmatprep.subr.mxu0 0.0
      %2668 = vmatpush1.msra.mxu0 0.0
      %2669 = vmatprep.subr.mxu0 0.0
      %2670 = vmatpush1.msra.mxu0 0.0
      %2671 = vmatprep.subr.mxu0 0.0
      %2672 = vmatpush1.msra.mxu0 0.0
      %2673 = vmatprep.subr.mxu0 0.0
      %2674 = vmatpush1.msra.mxu0 0.0
      %2675 = vmatprep.subr.mxu0 0.0
      %2676 = vmatpush1.msra.mxu0 0.0
      %2677 = vmatprep.subr.mxu0 0.0
      %2678 = vmatpush1.msra.mxu0 0.0
      %2679 = vmatprep.subr.mxu0 0.0
      %2680 = vmatpush1.msra.mxu0 0.0
      %2681 = vmatprep.subr.mxu0 0.0
      %2682 = vmatpush1.msra.mxu0 0.0
      %2683 = vmatprep.subr.mxu0 0.0
      %2684 = vmatpush1.msra.mxu0 0.0
      %2685 = vmatprep.subr.mxu0 0.0
      %2686 = vmatpush1.msra.mxu0 0.0
      %2687 = vmatprep.subr.mxu0 0.0
      %2688 = vmatpush1.msra.mxu0 0.0
      %2689 = vmatprep.subr.mxu0 0.0
      %2690 = vmatpush1.msra.mxu0 0.0
      %2691 = vmatprep.subr.mxu0 0.0
      %2692 = vmatpush1.msra.mxu0 0.0
      %2693 = vmatprep.mubr.f32.mxu0 0.0
      %2694 = vmatmul.mubr.f32.gmra.mrb[0].mxu0 %v2627
      %v2695 = vpop.f32.mrb[0].mxu0
      %v2696 = vadd.f32 0.0, %v2695
      %v2697 = vpop.f32.mrb[0].mxu0
      %v2698 = vadd.f32 0.0, %v2697
      %2699 = vdwg.mxu0
      %2700 = vmatprep.subr.mxu0 0.0
      %2701 = vmatpush1.msra.mxu0 %v2586
      %2702 = vmatprep.subr.mxu0 0.0
      %2703 = vmatpush1.msra.mxu0 %v2592
      %2704 = vmatprep.subr.mxu0 0.0
      %2705 = vmatpush1.msra.mxu0 %v2598
      %2706 = vmatprep.subr.mxu0 0.0
      %2707 = vmatpush1.msra.mxu0 %v2604
      %2708 = vmatprep.subr.mxu0 0.0
      %2709 = vmatpush1.msra.mxu0 0.0
      %2710 = vmatprep.subr.mxu0 0.0
      %2711 = vmatpush1.msra.mxu0 0.0
      %2712 = vmatprep.subr.mxu0 0.0
      %2713 = vmatpush1.msra.mxu0 0.0
      %2714 = vmatprep.subr.mxu0 0.0
      %2715 = vmatpush1.msra.mxu0 0.0
      %2716 = vmatprep.subr.mxu0 0.0
      %2717 = vmatpush1.msra.mxu0 0.0
      %2718 = vmatprep.subr.mxu0 0.0
      %2719 = vmatpush1.msra.mxu0 0.0
      %2720 = vmatprep.subr.mxu0 0.0
      %2721 = vmatpush1.msra.mxu0 0.0
      %2722 = vmatprep.subr.mxu0 0.0
      %2723 = vmatpush1.msra.mxu0 0.0
      %2724 = vmatprep.subr.mxu0 0.0
      %2725 = vmatpush1.msra.mxu0 0.0
      %2726 = vmatprep.subr.mxu0 0.0
      %2727 = vmatpush1.msra.mxu0 0.0
      %2728 = vmatprep.subr.mxu0 0.0
      %2729 = vmatpush1.msra.mxu0 0.0
      %2730 = vmatprep.subr.mxu0 0.0
      %2731 = vmatpush1.msra.mxu0 0.0
      %2732 = vmatprep.subr.mxu0 0.0
      %2733 = vmatpush1.msra.mxu0 0.0
      %2734 = vmatprep.subr.mxu0 0.0
      %2735 = vmatpush1.msra.mxu0 0.0
      %2736 = vmatprep.subr.mxu0 0.0
      %2737 = vmatpush1.msra.mxu0 0.0
      %2738 = vmatprep.subr.mxu0 0.0
      %2739 = vmatpush1.msra.mxu0 0.0
      %2740 = vmatprep.subr.mxu0 0.0
      %2741 = vmatpush1.msra.mxu0 0.0
      %2742 = vmatprep.subr.mxu0 0.0
      %2743 = vmatpush1.msra.mxu0 0.0
      %2744 = vmatprep.subr.mxu0 0.0
      %2745 = vmatpush1.msra.mxu0 0.0
      %2746 = vmatprep.subr.mxu0 0.0
      %2747 = vmatpush1.msra.mxu0 0.0
      %2748 = vmatprep.subr.mxu0 0.0
      %2749 = vmatpush1.msra.mxu0 0.0
      %2750 = vmatprep.subr.mxu0 0.0
      %2751 = vmatpush1.msra.mxu0 0.0
      %2752 = vmatprep.subr.mxu0 0.0
      %2753 = vmatpush1.msra.mxu0 0.0
      %2754 = vmatprep.subr.mxu0 0.0
      %2755 = vmatpush1.msra.mxu0 0.0
      %2756 = vmatprep.subr.mxu0 0.0
      %2757 = vmatpush1.msra.mxu0 0.0
      %2758 = vmatprep.subr.mxu0 0.0
      %2759 = vmatpush1.msra.mxu0 0.0
      %2760 = vmatprep.subr.mxu0 0.0
      %2761 = vmatpush1.msra.mxu0 0.0
      %2762 = vmatprep.subr.mxu0 0.0
      %2763 = vmatpush1.msra.mxu0 0.0
      %2764 = vmatprep.mubr.f32.mxu0 0.0
      %2765 = vmatmul.mubr.f32.gmra.mrb[0].mxu0 %v2627
      %v2766 = vpop.f32.mrb[0].mxu0
      %v2767 = vadd.f32 0.0, %v2766
      %v2768 = vpop.f32.mrb[0].mxu0
      %2769 = vdwg.mxu0
      %v2770 = vadd.f32 %v2576, %v2696
      %v2771 = vadd.f32 %v2577, %v2698
      %v2772 = vadd.f32 %v2578, %v2767
      %v2773 = vld [vmem:[%s12] sm:$0xff]
      %2775 = vset.pattern.permute.xlu0 0
      %2776 = vperm.xlu0 %2775, %v2773
      %v2777 = vpop.permute.xlu0 %2776
      %v2779 = vmul.f32 %v2770, %v2777
      %v2780 = vmul.f32 %v2771, %v2777
      %v2781 = vmul.f32 %v2772, %v2777
      %v2782 = vld [vmem:[%s13] sm:$0xff]
      %2784 = vset.pattern.permute.xlu0 0
      %2785 = vperm.xlu0 %2784, %v2782
      %v2786 = vpop.permute.xlu0 %2785
      %v2788 = vadd.f32 %v2779, %v2786
      %v2789 = vadd.f32 %v2780, %v2786
      %v2790 = vadd.f32 %v2781, %v2786
      %v2791 = vxor.u32 %v2788, 2147483648
      %v2792 = vxor.u32 %v2789, 2147483648
      %v2793 = vxor.u32 %v2790, 2147483648
      %v2794 = vmul.f32 %v2791, 1.442695
      %v2795 = vpow.pop %v2794
      %v2796 = vmul.f32 %v2792, 1.442695
      %v2797 = vpow.pop %v2796
      %v2798 = vmul.f32 %v2793, 1.442695
      %v2799 = vpow.pop %v2798
      %v2800 = vadd.f32 %v2795, 1.0
      %v2801 = vadd.f32 %v2797, 1.0
      %v2802 = vadd.f32 %v2799, 1.0
      %v2803 = vrcp.pop %v2800
      %v2804 = vmul.f32 1.0, %v2803
      %v2805 = vrcp.pop %v2801
      %v2806 = vmul.f32 1.0, %v2805
      %v2807 = vrcp.pop %v2802
      %v2808 = vmul.f32 1.0, %v2807
      %v2809 = vmul.f32 %v2788, %v2804
      %v2810 = vmul.f32 %v2789, %v2806
      %v2811 = vmul.f32 %v2790, %v2808
      %vm2812 = vcmask 130048
      %2813 = vst.msk [vmem:[%s467] sm:$0xff] %vm2812, %v2809
      %2815 = vrot.lane.b32.xlu0 %v2809, 122
      %v2816 = vpop.permute.xlu0 %2815
      %vm2818 = vcmask 261248
      %2819 = vst.msk [vmem:[%s467] sm:$0xff] %vm2818, %v2816
      %2820 = vrot.lane.b32.xlu0 %v2809, 116
      %v2821 = vpop.permute.xlu0 %2820
      %vm2823 = vcmask 392448
      %2824 = vst.msk [vmem:[%s467] sm:$0xff] %vm2823, %v2821
      %2825 = vrot.lane.b32.xlu0 %v2809, 110
      %v2826 = vpop.permute.xlu0 %2825
      %vm2828 = vcmask 523648
      %2829 = vst.msk [vmem:[%s467] sm:$0xff] %vm2828, %v2826
      %2830 = vrot.lane.b32.xlu0 %v2809, 104
      %v2831 = vpop.permute.xlu0 %2830
      %vm2833 = vcmask 654848
      %2834 = vst.msk [vmem:[%s467] sm:$0xff] %vm2833, %v2831
      %2835 = vrot.lane.b32.xlu0 %v2809, 98
      %v2836 = vpop.permute.xlu0 %2835
      %vm2838 = vcmask 786048
      %2839 = vst.msk [vmem:[%s467] sm:$0xff] %vm2838, %v2836
      %2841 = vrot.lane.b32.xlu0 %v2810, 92
      %v2842 = vpop.permute.xlu0 %2841
      %vm2844 = vcmask 917248
      %2845 = vst.msk [vmem:[%s467] sm:$0xff] %vm2844, %v2842
      %2846 = vrot.lane.b32.xlu0 %v2810, 86
      %v2847 = vpop.permute.xlu0 %2846
      %vm2849 = vcmask 1048448
      %2850 = vst.msk [vmem:[%s467] sm:$0xff] %vm2849, %v2847
      %2851 = vrot.lane.b32.xlu0 %v2810, 80
      %v2852 = vpop.permute.xlu0 %2851
      %2854 = vst.msk [vmem:[%s467 + $0x8] sm:$0xff] %vm2812, %v2852
      %2855 = vrot.lane.b32.xlu0 %v2810, 74
      %v2856 = vpop.permute.xlu0 %2855
      %2858 = vst.msk [vmem:[%s467 + $0x8] sm:$0xff] %vm2818, %v2856
      %2859 = vrot.lane.b32.xlu0 %v2810, 68
      %v2860 = vpop.permute.xlu0 %2859
      %2862 = vst.msk [vmem:[%s467 + $0x8] sm:$0xff] %vm2823, %v2860
      %2864 = vrot.lane.b32.xlu0 %v2810, 62
      %v2865 = vpop.permute.xlu0 %2864
      %2866 = vrot.lane.b32.xlu0 %v2811, 62
      %v2867 = vpop.permute.xlu0 %2866
      %vm2868 = vcmask 506880
      %v2869 = vsel %vm2868, %v2865, %v2867
      %2871 = vst.msk [vmem:[%s467 + $0x8] sm:$0xff] %vm2828, %v2869
      %2872 = vrot.lane.b32.xlu0 %v2811, 56
      %v2873 = vpop.permute.xlu0 %2872
      %2875 = vst.msk [vmem:[%s467 + $0x8] sm:$0xff] %vm2833, %v2873
      %2876 = vrot.lane.b32.xlu0 %v2811, 50
      %v2877 = vpop.permute.xlu0 %2876
      %2879 = vst.msk [vmem:[%s467 + $0x8] sm:$0xff] %vm2838, %v2877
      %2880 = vrot.lane.b32.xlu0 %v2811, 44
      %v2881 = vpop.permute.xlu0 %2880
      %2883 = vst.msk [vmem:[%s467 + $0x8] sm:$0xff] %vm2844, %v2881
      %2884 = vrot.lane.b32.xlu0 %v2811, 38
      %v2885 = vpop.permute.xlu0 %2884
      %2887 = vst.msk [vmem:[%s467 + $0x8] sm:$0xff] %vm2849, %v2885
      %p2888 = scmp.lt.s32.totalorder %s25, 1
      %s2889 = scalar_select %p2888, %s25, 1
      %s2890 = smul.addr %s2889, 2
      %s2891 = smul.addr %s2890, 8
      %s2892 = scalar_lea.vmem %s14, %s2891
      // Predicated region
      $region77: #{pconv_att_forward.1} parent=75 // pred_check
        %p2893 = pneg %p342
      $region78: #{pconv_att_forward.1} parent=75 // pred_check_branch
        %2895 = sbr.rel (%p2893) target = $region80
      $region79: #{pconv_att_forward.1} parent=75 // pred_region
        _
      $region80: #{pconv_att_forward.1} parent=75 // pred_fallthru
        _
    $region76: #{pconv_att_forward.1} parent=5 // pred_fallthru
      _
    %p2896 = scmp.le.s32.totalorder 2, %s20
    // Predicated region
    $region81: #{pconv_att_forward.1} parent=5 // pred_check
      %p2897 = pneg %p2896
    $region82: #{pconv_att_forward.1} parent=5 // pred_check_branch
      %2899 = sbr.rel (%p2897) target = $region84
    $region83: #{pconv_att_forward.1} parent=5 // pred_region
      %s2900 = ssub.s32 %s20, 2
      // Predicated region
      $region85: #{pconv_att_forward.1} parent=83 // pred_check
        %p2901 = pneg %p348
      $region86: #{pconv_att_forward.1} parent=83 // pred_check_branch
        %2903 = sbr.rel (%p2901) target = $region88
      $region87: #{pconv_att_forward.1} parent=83 // pred_region
        %p2904 = scmp.lt.s32.totalorder %s26, 1
        %s2905 = scalar_select %p2904, %s26, 1
        %s2906 = smul.addr %s2905, 2
        %s2907 = smul.addr %s2906, 8
        %s2908 = scalar_lea.vmem %s14, %s2907
      $region88: #{pconv_att_forward.1} parent=83 // pred_fallthru
        _
    $region84: #{pconv_att_forward.1} parent=5 // pred_fallthru
      _
  $region6: #{pconv_att_forward.1} parent=0 // loop_footer
    %s24 = sadd.s32 1, %s20
  $region7: #{pconv_att_forward.1} parent=0 // loop_footer_branch
    %19 = sbr.rel target = $region3
  $region8: #{pconv_att_forward.1} parent=0 // loop_exit
    _

</llo_original>
